<compile_context>
chip_gen: v7x
topology: tpu7x:2x2x1
jax: 0.10.0
libtpu: 0.0.40
codegen_flags: <defaults>
</compile_context>

<pallas_src>
import functools

import numpy as np

import jax
import jax.numpy as jnp
from jax import lax
from jax.experimental import pallas as pl
from jax.experimental.pallas import tpu as pltpu


def _round_up(v: int, m: int) -> int:
    return (v + m - 1) // m * m


def _padded_vmem_bytes(shape, itemsize=4):
    """VMEM footprint of an f32 buffer with (8, 128) sublane/lane padding."""
    if len(shape) == 1:
        r, c = 1, shape[0]
        lead = 1
    else:
        r, c = shape[-2], shape[-1]
        lead = 1
        for d in shape[:-2]:
            lead *= d
    return itemsize * lead * _round_up(max(r, 1), 8) * _round_up(max(c, 1), 128)


# ---------------------------------------------------------------------------
# Kernel 1: the inner meta-optimization loop (forward + backward + SGD).
# ---------------------------------------------------------------------------
def _leo_inner_kernel(
    # inputs
    x_ref, y_ref, rs_ref,
    w1_ref, b1_ref, w2_ref, w2t_ref, b2_ref, w3_ref, w3t_ref, b3_ref,
    # outputs
    pred_ref, w1o_ref, b1o_ref, w2o_ref, b2o_ref, w3o_ref, b3o_ref,
    # scratch: fast params (both weight orientations)
    w1_s, b1_s, w2_s, w2t_s, b2_s, w3_s, w3t_s, b3_s,
    # scratch: gradient accumulators (both orientations for w2/w3)
    g1, gb1, g2, g2t, gb2, g3, g3t, gb3,
    *, lr: float, mm_dtype):
    """One (meta_step, m_tile) grid cell.

    Feature-major layout: x_ref (Din_p, TM), y_ref (Dout_p, TM),
    rs_ref (1, TM) carries 2/(M*Dout) on real columns, 0 on padding.
    Weights: w* (out, in) for forward, w*t (in, out) for backward-data.
    pred_ref: (1, Dout_p, TM) lane-dense intermediate prediction tile.
    """
    j = pl.program_id(0)            # meta step
    m = pl.program_id(1)            # tile over flattened points M
    n_m = pl.num_programs(1)

    # One-time init of fast params from the hypo-module parameters.
    @pl.when((j == 0) & (m == 0))
    def _():
        w1_s[...] = w1_ref[...]
        b1_s[...] = b1_ref[...]
        w2_s[...] = w2_ref[...]
        w2t_s[...] = w2t_ref[...]
        b2_s[...] = b2_ref[...]
        w3_s[...] = w3_ref[...]
        w3t_s[...] = w3t_ref[...]
        b3_s[...] = b3_ref[...]

    # Zero grad accumulators at the start of every meta step.
    @pl.when(m == 0)
    def _():
        g1[...] = jnp.zeros_like(g1)
        gb1[...] = jnp.zeros_like(gb1)
        g2[...] = jnp.zeros_like(g2)
        g2t[...] = jnp.zeros_like(g2t)
        gb2[...] = jnp.zeros_like(gb2)
        g3[...] = jnp.zeros_like(g3)
        g3t[...] = jnp.zeros_like(g3t)
        gb3[...] = jnp.zeros_like(gb3)

    x = x_ref[...]                       # (Din_p, TM)
    y = y_ref[...]                       # (Dout_p, TM)
    rs = rs_ref[...]                     # (1, TM)  MSE-mean scale, 0 on pad cols

    w1 = w1_s[...]; b1 = b1_s[...]
    w2 = w2_s[...]; w2t = w2t_s[...]; b2 = b2_s[...]
    w3 = w3_s[...]; w3t = w3t_s[...]; b3 = b3_s[...]

    def mm(a, b):                        # standard (M,K)@(K,N)
        return jnp.dot(a.astype(mm_dtype), b.astype(mm_dtype),
                       preferred_element_type=jnp.float32)

    def mm_nt(a, b):                     # (M,K)@(N,K)^T, contract last dims
        return lax.dot_general(a.astype(mm_dtype), b.astype(mm_dtype),
                               (((1,), (1,)), ((), ())),
                               preferred_element_type=jnp.float32)

    # Forward (feature-major): Linear -> ReLU -> Linear -> ReLU -> Linear.
    pre1 = mm(w1, x) + b1                # (H_p, TM)
    h1 = jnp.maximum(pre1, 0.0)
    pre2 = mm(w2, h1) + b2               # (H_p, TM)
    h2 = jnp.maximum(pre2, 0.0)
    pred = mm(w3, h2) + b3               # (Dout_p, TM)

    # Lane-dense store of the step-j prediction tile (no transpose needed).
    pred_ref[0] = pred

    # Backward of MSE(mean) wrt fast params.  rs already folds 2/(M*Dout) and
    # masks padded M columns, so every contribution below is exact.
    dpred = rs * (pred - y)                              # (Dout_p, TM)
    g3[...] += mm_nt(dpred, h2)                          # (Dout_p, H_p)
    g3t[...] += mm_nt(h2, dpred)                         # (H_p, Dout_p)
    gb3[...] += jnp.sum(dpred, axis=1, keepdims=True)    # (Dout_p, 1)

    dh2 = mm(w3t, dpred)                                 # (H_p, TM)
    dpre2 = jnp.where(pre2 > 0.0, dh2, 0.0)
    g2[...] += mm_nt(dpre2, h1)                          # (H_p, H_p)
    g2t[...] += mm_nt(h1, dpre2)                         # (H_p, H_p)
    gb2[...] += jnp.sum(dpre2, axis=1, keepdims=True)

    dh1 = mm(w2t, dpre2)                                 # (H_p, TM)
    dpre1 = jnp.where(pre1 > 0.0, dh1, 0.0)
    g1[...] += mm_nt(dpre1, x)                           # (H_p, Din_p)
    gb1[...] += jnp.sum(dpre1, axis=1, keepdims=True)

    # 'static' lr SGD step after the last tile of each meta step, plus export
    # of the (current) fast params; the final meta step's write is the one
    # that survives in HBM and feeds the final-forward kernel.
    @pl.when(m == n_m - 1)
    def _():
        w1_s[...] = w1_s[...] - lr * g1[...]
        b1_s[...] = b1_s[...] - lr * gb1[...]
        w2_s[...] = w2_s[...] - lr * g2[...]
        w2t_s[...] = w2t_s[...] - lr * g2t[...]
        b2_s[...] = b2_s[...] - lr * gb2[...]
        w3_s[...] = w3_s[...] - lr * g3[...]
        w3t_s[...] = w3t_s[...] - lr * g3t[...]
        b3_s[...] = b3_s[...] - lr * gb3[...]

        w1o_ref[...] = w1_s[...]
        b1o_ref[...] = b1_s[...]
        w2o_ref[...] = w2_s[...]
        b2o_ref[...] = b2_s[...]
        w3o_ref[...] = w3_s[...]
        b3o_ref[...] = b3_s[...]


# ---------------------------------------------------------------------------
# Kernel 2: final forward pass with the specialized params.  The M axis is
# 'parallel' so v7x's two TensorCores can split it (megacore sharding).
# ---------------------------------------------------------------------------
def _mlp_forward_kernel(x_ref, w1_ref, b1_ref, w2_ref, b2_ref, w3_ref, b3_ref,
                        pred_ref, *, mm_dtype):
    def mm(a, b):
        return jnp.dot(a.astype(mm_dtype), b.astype(mm_dtype),
                       preferred_element_type=jnp.float32)

    x = x_ref[...]                                        # (Din_p, TM)
    h1 = jnp.maximum(mm(w1_ref[...], x) + b1_ref[...], 0.0)
    h2 = jnp.maximum(mm(w2_ref[...], h1) + b2_ref[...], 0.0)
    pred_ref[...] = mm(w3_ref[...], h2) + b3_ref[...]     # (Dout_p, TM)


# ---------------------------------------------------------------------------
# Wrapper
# ---------------------------------------------------------------------------
def leo_forward(sampled_coords, sampled_data, params, *, num_meta_steps, lr,
                tile_m=8192, matmul_dtype=jnp.float32):
    """sampled_coords: (B, N, Din); sampled_data: (B, N, Dout).

    params: (w1, b1, w2, b2, w3, b3) with weights stored (in, out) and biases
    (1, out), matching the equivalent PyTorch Linear layers.
    matmul_dtype=jnp.bfloat16 enables full-rate MXU operands (f32 accumulation
    everywhere); default f32 keeps the PyTorch reference trajectory exactly.
    """
    B, N, Din = sampled_coords.shape
    Dout = sampled_data.shape[-1]
    M = B * N
    w1, b1, w2, b2, w3, b3 = params
    H = w1.shape[1]
    S = int(num_meta_steps)

    f32 = jnp.float32
    Din_p = _round_up(Din, 8)
    Dout_p = _round_up(Dout, 8)
    H_p = _round_up(H, 8)
    TM = _round_up(min(int(tile_m), _round_up(M, 128)), 128)
    M_p = _round_up(M, TM)
    n_m = M_p // TM

    # Feature-major padded inputs: M on the 128-lane axis everywhere.
    xf = jnp.zeros((Din_p, M_p), f32).at[:Din, :M].set(
        sampled_coords.reshape(M, Din).astype(f32).T)
    yf = jnp.zeros((Dout_p, M_p), f32).at[:Dout, :M].set(
        sampled_data.reshape(M, Dout).astype(f32).T)
    # dL/dpred scale of MSE(reduction='mean'): 2/(M*Dout) on real columns,
    # exactly 0 on padded columns (replaces per-tile iota/compare masking).
    rs = jnp.zeros((1, M_p), f32).at[0, :M].set(2.0 / float(M * Dout))

    # Padded weights; (out, in) for forward, (in, out) for backward-data.
    w1p = jnp.zeros((H_p, Din_p), f32).at[:H, :Din].set(w1.astype(f32).T)
    b1p = jnp.zeros((H_p, 1), f32).at[:H, 0].set(b1.astype(f32).reshape(-1))
    w2p = jnp.zeros((H_p, H_p), f32).at[:H, :H].set(w2.astype(f32).T)
    w2tp = jnp.zeros((H_p, H_p), f32).at[:H, :H].set(w2.astype(f32))
    b2p = jnp.zeros((H_p, 1), f32).at[:H, 0].set(b2.astype(f32).reshape(-1))
    w3p = jnp.zeros((Dout_p, H_p), f32).at[:Dout, :H].set(w3.astype(f32).T)
    w3tp = jnp.zeros((H_p, Dout_p), f32).at[:H, :Dout].set(w3.astype(f32))
    b3p = jnp.zeros((Dout_p, 1), f32).at[:Dout, 0].set(b3.astype(f32).reshape(-1))

    # Padded-aware VMEM budget (review fix): sublane->8, lane->128 padding.
    tile_io = (_padded_vmem_bytes((Din_p, TM)) + _padded_vmem_bytes((Dout_p, TM))
               + _padded_vmem_bytes((1, TM)) + _padded_vmem_bytes((1, Dout_p, TM)))
    param_shapes = [(H_p, Din_p), (H_p, 1), (H_p, H_p), (H_p, H_p), (H_p, 1),
                    (Dout_p, H_p), (H_p, Dout_p), (Dout_p, 1)]
    param_bytes = sum(_padded_vmem_bytes(s) for s in param_shapes)
    act_bytes = 10 * _padded_vmem_bytes((H_p, TM))   # generous live-temporary bound
    vmem_est = 2 * (tile_io + 2 * param_bytes) + 2 * param_bytes + act_bytes
    # Clamp so the request stays safe on v7x (64 MiB physical per core).
    vmem_limit = int(min(48 << 20, max(32 << 20, int(vmem_est * 1.25))))

    param_out_shapes = (
        jax.ShapeDtypeStruct((H_p, Din_p), f32),
        jax.ShapeDtypeStruct((H_p, 1), f32),
        jax.ShapeDtypeStruct((H_p, H_p), f32),
        jax.ShapeDtypeStruct((H_p, 1), f32),
        jax.ShapeDtypeStruct((Dout_p, H_p), f32),
        jax.ShapeDtypeStruct((Dout_p, 1), f32),
    )

    if S > 0:
        kernel1 = functools.partial(_leo_inner_kernel, lr=float(lr),
                                    mm_dtype=matmul_dtype)
        scratch_shapes = (
            # fast params
            pltpu.VMEM((H_p, Din_p), f32), pltpu.VMEM((H_p, 1), f32),
            pltpu.VMEM((H_p, H_p), f32), pltpu.VMEM((H_p, H_p), f32),
            pltpu.VMEM((H_p, 1), f32),
            pltpu.VMEM((Dout_p, H_p), f32), pltpu.VMEM((H_p, Dout_p), f32),
            pltpu.VMEM((Dout_p, 1), f32),
            # gradient accumulators
            pltpu.VMEM((H_p, Din_p), f32), pltpu.VMEM((H_p, 1), f32),
            pltpu.VMEM((H_p, H_p), f32), pltpu.VMEM((H_p, H_p), f32),
            pltpu.VMEM((H_p, 1), f32),
            pltpu.VMEM((Dout_p, H_p), f32), pltpu.VMEM((H_p, Dout_p), f32),
            pltpu.VMEM((Dout_p, 1), f32),
        )
        grid_spec = pltpu.PrefetchScalarGridSpec(
            num_scalar_prefetch=0,
            grid=(S, n_m),
            in_specs=[
                pl.BlockSpec((Din_p, TM), lambda j, m: (0, m)),     # x
                pl.BlockSpec((Dout_p, TM), lambda j, m: (0, m)),    # y
                pl.BlockSpec((1, TM), lambda j, m: (0, m)),         # row scale
                pl.BlockSpec((H_p, Din_p), lambda j, m: (0, 0)),    # w1 (out,in)
                pl.BlockSpec((H_p, 1), lambda j, m: (0, 0)),        # b1
                pl.BlockSpec((H_p, H_p), lambda j, m: (0, 0)),      # w2 (out,in)
                pl.BlockSpec((H_p, H_p), lambda j, m: (0, 0)),      # w2 (in,out)
                pl.BlockSpec((H_p, 1), lambda j, m: (0, 0)),        # b2
                pl.BlockSpec((Dout_p, H_p), lambda j, m: (0, 0)),   # w3 (out,in)
                pl.BlockSpec((H_p, Dout_p), lambda j, m: (0, 0)),   # w3 (in,out)
                pl.BlockSpec((Dout_p, 1), lambda j, m: (0, 0)),     # b3
            ],
            out_specs=[
                pl.BlockSpec((1, Dout_p, TM), lambda j, m: (j, 0, m)),  # preds
                pl.BlockSpec((H_p, Din_p), lambda j, m: (0, 0)),
                pl.BlockSpec((H_p, 1), lambda j, m: (0, 0)),
                pl.BlockSpec((H_p, H_p), lambda j, m: (0, 0)),
                pl.BlockSpec((H_p, 1), lambda j, m: (0, 0)),
                pl.BlockSpec((Dout_p, H_p), lambda j, m: (0, 0)),
                pl.BlockSpec((Dout_p, 1), lambda j, m: (0, 0)),
            ],
            scratch_shapes=scratch_shapes,
        )
        outs = pl.pallas_call(
            kernel1,
            out_shape=(jax.ShapeDtypeStruct((S, Dout_p, M_p), f32),
                       *param_out_shapes),
            grid_spec=grid_spec,
            compiler_params=pltpu.CompilerParams(
                dimension_semantics=("arbitrary", "arbitrary"),
                vmem_limit_bytes=vmem_limit),
        )(xf, yf, rs, w1p, b1p, w2p, w2tp, b2p, w3p, w3tp, b3p)
        intermed_fm, w1f, b1f, w2f, b2f, w3f, b3f = outs
    else:
        intermed_fm = jnp.zeros((0, Dout_p, M_p), f32)
        w1f, b1f, w2f, b2f, w3f, b3f = w1p, b1p, w2p, b2p, w3p, b3p

    # Final forward pass with the specialized params; M axis 'parallel' so
    # v7x megacore can shard it across both TensorCores.
    kernel2 = functools.partial(_mlp_forward_kernel, mm_dtype=matmul_dtype)
    final_fm = pl.pallas_call(
        kernel2,
        out_shape=jax.ShapeDtypeStruct((Dout_p, M_p), f32),
        grid_spec=pltpu.PrefetchScalarGridSpec(
            num_scalar_prefetch=0,
            grid=(n_m,),
            in_specs=[
                pl.BlockSpec((Din_p, TM), lambda m: (0, m)),
                pl.BlockSpec((H_p, Din_p), lambda m: (0, 0)),
                pl.BlockSpec((H_p, 1), lambda m: (0, 0)),
                pl.BlockSpec((H_p, H_p), lambda m: (0, 0)),
                pl.BlockSpec((H_p, 1), lambda m: (0, 0)),
                pl.BlockSpec((Dout_p, H_p), lambda m: (0, 0)),
                pl.BlockSpec((Dout_p, 1), lambda m: (0, 0)),
            ],
            out_specs=pl.BlockSpec((Dout_p, TM), lambda m: (0, m)),
        ),
        compiler_params=pltpu.CompilerParams(
            dimension_semantics=("parallel",),
            vmem_limit_bytes=vmem_limit),
    )(xf, w1f, b1f, w2f, b2f, w3f, b3f)

    # Undo the feature-major layout once on the wrapper side.
    model_out = final_fm[:Dout, :M].T.reshape(B, N, Dout)
    intermed = jnp.transpose(intermed_fm[:, :Dout, :M], (0, 2, 1)).reshape(
        S, B, N, Dout)
    return {"model_out": model_out, "intermed_predictions": intermed}


def init_mlp_params(key, in_features, hidden_features, out_features):
    """PyTorch-Linear-style uniform init, weights stored (in, out)."""
    ks = jax.random.split(key, 6)

    def lin(kw, kb, fan_in, fan_out):
        bound = 1.0 / jnp.sqrt(float(fan_in))
        w = jax.random.uniform(kw, (fan_in, fan_out), jnp.float32, -bound, bound)
        b = jax.random.uniform(kb, (1, fan_out), jnp.float32, -bound, bound)
        return w, b

    w1, b1 = lin(ks[0], ks[1], in_features, hidden_features)
    w2, b2 = lin(ks[2], ks[3], hidden_features, hidden_features)
    w3, b3 = lin(ks[4], ks[5], hidden_features, out_features)
    return (w1, b1, w2, b2, w3, b3)


def _leo_reference(coords, data, params, num_meta_steps, lr):
    """Pure-numpy (float64) reference of the LEO forward pass."""
    x = np.array(coords, np.float64).reshape(-1, coords.shape[-1])
    y = np.array(data, np.float64).reshape(-1, data.shape[-1])
    w1, b1, w2, b2, w3, b3 = [np.array(p, np.float64) for p in params]
    M, Dout = y.shape
    preds = []
    for _ in range(num_meta_steps):
        pre1 = x @ w1 + b1; h1 = np.maximum(pre1, 0.0)
        pre2 = h1 @ w2 + b2; h2 = np.maximum(pre2, 0.0)
        pred = h2 @ w3 + b3
        preds.append(pred)
        dpred = (2.0 / (M * Dout)) * (pred - y)
        dw3 = h2.T @ dpred; db3 = dpred.sum(0, keepdims=True)
        dh2 = dpred @ w3.T; dpre2 = dh2 * (pre2 > 0.0)
        dw2 = h1.T @ dpre2; db2 = dpre2.sum(0, keepdims=True)
        dh1 = dpre2 @ w2.T; dpre1 = dh1 * (pre1 > 0.0)
        dw1 = x.T @ dpre1; db1 = dpre1.sum(0, keepdims=True)
        w1 = w1 - lr * dw1; b1 = b1 - lr * db1
        w2 = w2 - lr * dw2; b2 = b2 - lr * db2
        w3 = w3 - lr * dw3; b3 = b3 - lr * db3
    pre1 = x @ w1 + b1; h1 = np.maximum(pre1, 0.0)
    pre2 = h1 @ w2 + b2; h2 = np.maximum(pre2, 0.0)
    final = h2 @ w3 + b3
    stacked = np.stack(preds, 0) if preds else np.zeros((0, M, Dout))
    return final, stacked


if __name__ == "__main__":
    # Small, deterministic example shapes.
    B, N = 2, 16            # meta batch, sampled points per task
    IN_FEATURES = 4         # coordinate dim
    HIDDEN = 32
    OUT_FEATURES = 4        # data channels
    NUM_META_STEPS = 3
    INIT_LR = 0.01

    key = jax.random.PRNGKey(0)
    k_x, k_y, k_p = jax.random.split(key, 3)

    sampled_coords = jax.random.normal(k_x, (B, N, IN_FEATURES), jnp.float32)
    sampled_data = jax.random.normal(k_y, (B, N, OUT_FEATURES), jnp.float32)
    params = init_mlp_params(k_p, IN_FEATURES, HIDDEN, OUT_FEATURES)

    out = leo_forward(sampled_coords, sampled_data, params,
                      num_meta_steps=NUM_META_STEPS, lr=INIT_LR)
    jax.block_until_ready(out["model_out"])
    jax.block_until_ready(out["intermed_predictions"])

    assert out["model_out"].shape == (B, N, OUT_FEATURES)
    assert out["intermed_predictions"].shape == (NUM_META_STEPS, B, N, OUT_FEATURES)

    # Numerical check against a pure-numpy reference of the same semantics.
    ref_final, ref_intermed = _leo_reference(sampled_coords, sampled_data,
                                             params, NUM_META_STEPS, INIT_LR)
    np.testing.assert_allclose(
        np.asarray(out["model_out"]).reshape(B * N, OUT_FEATURES),
        ref_final, rtol=2e-3, atol=2e-3)
    np.testing.assert_allclose(
        np.asarray(out["intermed_predictions"]).reshape(
            NUM_META_STEPS, B * N, OUT_FEATURES),
        ref_intermed, rtol=2e-3, atol=2e-3)

    print("KERNEL_OK")
</pallas_src>

<mosaic_0001>
module attributes {stable_mosaic.version = 11 : i64} {
  func.func @_leo_inner_kernel(%arg0: i32, %arg1: i32, %arg2: memref<8x128xf32, #tpu.memory_space<vmem>>, %arg3: memref<8x128xf32, #tpu.memory_space<vmem>>, %arg4: memref<1x128xf32, #tpu.memory_space<vmem>>, %arg5: memref<32x8xf32, #tpu.memory_space<vmem>>, %arg6: memref<32x1xf32, #tpu.memory_space<vmem>>, %arg7: memref<32x32xf32, #tpu.memory_space<vmem>>, %arg8: memref<32x32xf32, #tpu.memory_space<vmem>>, %arg9: memref<32x1xf32, #tpu.memory_space<vmem>>, %arg10: memref<8x32xf32, #tpu.memory_space<vmem>>, %arg11: memref<32x8xf32, #tpu.memory_space<vmem>>, %arg12: memref<8x1xf32, #tpu.memory_space<vmem>>, %arg13: memref<1x8x128xf32, #tpu.memory_space<vmem>>, %arg14: memref<32x8xf32, #tpu.memory_space<vmem>>, %arg15: memref<32x1xf32, #tpu.memory_space<vmem>>, %arg16: memref<32x32xf32, #tpu.memory_space<vmem>>, %arg17: memref<32x1xf32, #tpu.memory_space<vmem>>, %arg18: memref<8x32xf32, #tpu.memory_space<vmem>>, %arg19: memref<8x1xf32, #tpu.memory_space<vmem>>, %arg20: memref<32x8xf32, #tpu.memory_space<vmem>>, %arg21: memref<32x1xf32, #tpu.memory_space<vmem>>, %arg22: memref<32x32xf32, #tpu.memory_space<vmem>>, %arg23: memref<32x32xf32, #tpu.memory_space<vmem>>, %arg24: memref<32x1xf32, #tpu.memory_space<vmem>>, %arg25: memref<8x32xf32, #tpu.memory_space<vmem>>, %arg26: memref<32x8xf32, #tpu.memory_space<vmem>>, %arg27: memref<8x1xf32, #tpu.memory_space<vmem>>, %arg28: memref<32x8xf32, #tpu.memory_space<vmem>>, %arg29: memref<32x1xf32, #tpu.memory_space<vmem>>, %arg30: memref<32x32xf32, #tpu.memory_space<vmem>>, %arg31: memref<32x32xf32, #tpu.memory_space<vmem>>, %arg32: memref<32x1xf32, #tpu.memory_space<vmem>>, %arg33: memref<8x32xf32, #tpu.memory_space<vmem>>, %arg34: memref<32x8xf32, #tpu.memory_space<vmem>>, %arg35: memref<8x1xf32, #tpu.memory_space<vmem>>) attributes {dimension_semantics = [#tpu.dimension_semantics<arbitrary>, #tpu.dimension_semantics<arbitrary>], iteration_bounds = array<i64: 3, 1>, scalar_prefetch = 0 : i64, scratch_operands = 16 : i64, tpu.core_type = #tpu.core_type<tc>, window_params = [{transform_indices = @transform_0, window_bounds = array<i64: 8, 128>}, {transform_indices = @transform_1, window_bounds = array<i64: 8, 128>}, {transform_indices = @transform_2, window_bounds = array<i64: 1, 128>}, {pipeline_mode = #tpu.pipeline_mode<synchronous>, transform_indices = @transform_3, window_bounds = array<i64: 32, 8>}, {pipeline_mode = #tpu.pipeline_mode<synchronous>, transform_indices = @transform_4, window_bounds = array<i64: 32, 1>}, {pipeline_mode = #tpu.pipeline_mode<synchronous>, transform_indices = @transform_5, window_bounds = array<i64: 32, 32>}, {pipeline_mode = #tpu.pipeline_mode<synchronous>, transform_indices = @transform_6, window_bounds = array<i64: 32, 32>}, {pipeline_mode = #tpu.pipeline_mode<synchronous>, transform_indices = @transform_7, window_bounds = array<i64: 32, 1>}, {pipeline_mode = #tpu.pipeline_mode<synchronous>, transform_indices = @transform_8, window_bounds = array<i64: 8, 32>}, {pipeline_mode = #tpu.pipeline_mode<synchronous>, transform_indices = @transform_9, window_bounds = array<i64: 32, 8>}, {pipeline_mode = #tpu.pipeline_mode<synchronous>, transform_indices = @transform_10, window_bounds = array<i64: 8, 1>}, {transform_indices = @transform_11, window_bounds = array<i64: 1, 8, 128>}, {pipeline_mode = #tpu.pipeline_mode<synchronous>, transform_indices = @transform_12, window_bounds = array<i64: 32, 8>}, {pipeline_mode = #tpu.pipeline_mode<synchronous>, transform_indices = @transform_13, window_bounds = array<i64: 32, 1>}, {pipeline_mode = #tpu.pipeline_mode<synchronous>, transform_indices = @transform_14, window_bounds = array<i64: 32, 32>}, {pipeline_mode = #tpu.pipeline_mode<synchronous>, transform_indices = @transform_15, window_bounds = array<i64: 32, 1>}, {pipeline_mode = #tpu.pipeline_mode<synchronous>, transform_indices = @transform_16, window_bounds = array<i64: 8, 32>}, {pipeline_mode = #tpu.pipeline_mode<synchronous>, transform_indices = @transform_17, window_bounds = array<i64: 8, 1>}]} {
    %c0_i32 = arith.constant 0 : i32
    %0 = arith.cmpi eq, %arg0, %c0_i32 : i32
    %c0_i32_0 = arith.constant 0 : i32
    %1 = arith.cmpi eq, %arg1, %c0_i32_0 : i32
    %2 = arith.andi %0, %1 : i1
    %3 = arith.extui %2 : i1 to i32
    %c0_i32_1 = arith.constant 0 : i32
    %4 = arith.cmpi ne, %3, %c0_i32_1 : i32
    scf.if %4 {
      %c0_80 = arith.constant 0 : index
      %c0_81 = arith.constant 0 : index
      %86 = vector.load %arg5[%c0_80, %c0_81] : memref<32x8xf32, #tpu.memory_space<vmem>>, vector<32x8xf32>
      %c0_82 = arith.constant 0 : index
      %c0_83 = arith.constant 0 : index
      %87 = vector.load %arg20[%c0_82, %c0_83] : memref<32x8xf32, #tpu.memory_space<vmem>>, vector<32x8xf32>
      tpu.vector_store %arg20[%c0_82, %c0_83], %86 {strides = array<i32>} : memref<32x8xf32, #tpu.memory_space<vmem>>, vector<32x8xf32>,
      %c0_84 = arith.constant 0 : index
      %c0_85 = arith.constant 0 : index
      %88 = vector.load %arg6[%c0_84, %c0_85] : memref<32x1xf32, #tpu.memory_space<vmem>>, vector<32x1xf32>
      %c0_86 = arith.constant 0 : index
      %c0_87 = arith.constant 0 : index
      %89 = vector.load %arg21[%c0_86, %c0_87] : memref<32x1xf32, #tpu.memory_space<vmem>>, vector<32x1xf32>
      tpu.vector_store %arg21[%c0_86, %c0_87], %88 {strides = array<i32>} : memref<32x1xf32, #tpu.memory_space<vmem>>, vector<32x1xf32>,
      %c0_88 = arith.constant 0 : index
      %c0_89 = arith.constant 0 : index
      %90 = vector.load %arg7[%c0_88, %c0_89] : memref<32x32xf32, #tpu.memory_space<vmem>>, vector<32x32xf32>
      %c0_90 = arith.constant 0 : index
      %c0_91 = arith.constant 0 : index
      %91 = vector.load %arg22[%c0_90, %c0_91] : memref<32x32xf32, #tpu.memory_space<vmem>>, vector<32x32xf32>
      tpu.vector_store %arg22[%c0_90, %c0_91], %90 {strides = array<i32>} : memref<32x32xf32, #tpu.memory_space<vmem>>, vector<32x32xf32>,
      %c0_92 = arith.constant 0 : index
      %c0_93 = arith.constant 0 : index
      %92 = vector.load %arg8[%c0_92, %c0_93] : memref<32x32xf32, #tpu.memory_space<vmem>>, vector<32x32xf32>
      %c0_94 = arith.constant 0 : index
      %c0_95 = arith.constant 0 : index
      %93 = vector.load %arg23[%c0_94, %c0_95] : memref<32x32xf32, #tpu.memory_space<vmem>>, vector<32x32xf32>
      tpu.vector_store %arg23[%c0_94, %c0_95], %92 {strides = array<i32>} : memref<32x32xf32, #tpu.memory_space<vmem>>, vector<32x32xf32>,
      %c0_96 = arith.constant 0 : index
      %c0_97 = arith.constant 0 : index
      %94 = vector.load %arg9[%c0_96, %c0_97] : memref<32x1xf32, #tpu.memory_space<vmem>>, vector<32x1xf32>
      %c0_98 = arith.constant 0 : index
      %c0_99 = arith.constant 0 : index
      %95 = vector.load %arg24[%c0_98, %c0_99] : memref<32x1xf32, #tpu.memory_space<vmem>>, vector<32x1xf32>
      tpu.vector_store %arg24[%c0_98, %c0_99], %94 {strides = array<i32>} : memref<32x1xf32, #tpu.memory_space<vmem>>, vector<32x1xf32>,
      %c0_100 = arith.constant 0 : index
      %c0_101 = arith.constant 0 : index
      %96 = vector.load %arg10[%c0_100, %c0_101] : memref<8x32xf32, #tpu.memory_space<vmem>>, vector<8x32xf32>
      %c0_102 = arith.constant 0 : index
      %c0_103 = arith.constant 0 : index
      %97 = vector.load %arg25[%c0_102, %c0_103] : memref<8x32xf32, #tpu.memory_space<vmem>>, vector<8x32xf32>
      tpu.vector_store %arg25[%c0_102, %c0_103], %96 {strides = array<i32>} : memref<8x32xf32, #tpu.memory_space<vmem>>, vector<8x32xf32>,
      %c0_104 = arith.constant 0 : index
      %c0_105 = arith.constant 0 : index
      %98 = vector.load %arg11[%c0_104, %c0_105] : memref<32x8xf32, #tpu.memory_space<vmem>>, vector<32x8xf32>
      %c0_106 = arith.constant 0 : index
      %c0_107 = arith.constant 0 : index
      %99 = vector.load %arg26[%c0_106, %c0_107] : memref<32x8xf32, #tpu.memory_space<vmem>>, vector<32x8xf32>
      tpu.vector_store %arg26[%c0_106, %c0_107], %98 {strides = array<i32>} : memref<32x8xf32, #tpu.memory_space<vmem>>, vector<32x8xf32>,
      %c0_108 = arith.constant 0 : index
      %c0_109 = arith.constant 0 : index
      %100 = vector.load %arg12[%c0_108, %c0_109] : memref<8x1xf32, #tpu.memory_space<vmem>>, vector<8x1xf32>
      %c0_110 = arith.constant 0 : index
      %c0_111 = arith.constant 0 : index
      %101 = vector.load %arg27[%c0_110, %c0_111] : memref<8x1xf32, #tpu.memory_space<vmem>>, vector<8x1xf32>
      tpu.vector_store %arg27[%c0_110, %c0_111], %100 {strides = array<i32>} : memref<8x1xf32, #tpu.memory_space<vmem>>, vector<8x1xf32>,
    } else {
    }
    %c0_i32_2 = arith.constant 0 : i32
    %5 = arith.cmpi eq, %arg1, %c0_i32_2 : i32
    %6 = arith.extui %5 : i1 to i32
    %c0_i32_3 = arith.constant 0 : i32
    %7 = arith.cmpi ne, %6, %c0_i32_3 : i32
    scf.if %7 {
      %cst_80 = arith.constant 0.000000e+00 : f32
      %86 = vector.broadcast %cst_80 : f32 to vector<32x8xf32>
      %c0_81 = arith.constant 0 : index
      %c0_82 = arith.constant 0 : index
      %87 = vector.load %arg28[%c0_81, %c0_82] : memref<32x8xf32, #tpu.memory_space<vmem>>, vector<32x8xf32>
      tpu.vector_store %arg28[%c0_81, %c0_82], %86 {strides = array<i32>} : memref<32x8xf32, #tpu.memory_space<vmem>>, vector<32x8xf32>,
      %cst_83 = arith.constant 0.000000e+00 : f32
      %88 = vector.broadcast %cst_83 : f32 to vector<32x1xf32>
      %c0_84 = arith.constant 0 : index
      %c0_85 = arith.constant 0 : index
      %89 = vector.load %arg29[%c0_84, %c0_85] : memref<32x1xf32, #tpu.memory_space<vmem>>, vector<32x1xf32>
      tpu.vector_store %arg29[%c0_84, %c0_85], %88 {strides = array<i32>} : memref<32x1xf32, #tpu.memory_space<vmem>>, vector<32x1xf32>,
      %cst_86 = arith.constant 0.000000e+00 : f32
      %90 = vector.broadcast %cst_86 : f32 to vector<32x32xf32>
      %c0_87 = arith.constant 0 : index
      %c0_88 = arith.constant 0 : index
      %91 = vector.load %arg30[%c0_87, %c0_88] : memref<32x32xf32, #tpu.memory_space<vmem>>, vector<32x32xf32>
      tpu.vector_store %arg30[%c0_87, %c0_88], %90 {strides = array<i32>} : memref<32x32xf32, #tpu.memory_space<vmem>>, vector<32x32xf32>,
      %cst_89 = arith.constant 0.000000e+00 : f32
      %92 = vector.broadcast %cst_89 : f32 to vector<32x32xf32>
      %c0_90 = arith.constant 0 : index
      %c0_91 = arith.constant 0 : index
      %93 = vector.load %arg31[%c0_90, %c0_91] : memref<32x32xf32, #tpu.memory_space<vmem>>, vector<32x32xf32>
      tpu.vector_store %arg31[%c0_90, %c0_91], %92 {strides = array<i32>} : memref<32x32xf32, #tpu.memory_space<vmem>>, vector<32x32xf32>,
      %cst_92 = arith.constant 0.000000e+00 : f32
      %94 = vector.broadcast %cst_92 : f32 to vector<32x1xf32>
      %c0_93 = arith.constant 0 : index
      %c0_94 = arith.constant 0 : index
      %95 = vector.load %arg32[%c0_93, %c0_94] : memref<32x1xf32, #tpu.memory_space<vmem>>, vector<32x1xf32>
      tpu.vector_store %arg32[%c0_93, %c0_94], %94 {strides = array<i32>} : memref<32x1xf32, #tpu.memory_space<vmem>>, vector<32x1xf32>,
      %cst_95 = arith.constant 0.000000e+00 : f32
      %96 = vector.broadcast %cst_95 : f32 to vector<8x32xf32>
      %c0_96 = arith.constant 0 : index
      %c0_97 = arith.constant 0 : index
      %97 = vector.load %arg33[%c0_96, %c0_97] : memref<8x32xf32, #tpu.memory_space<vmem>>, vector<8x32xf32>
      tpu.vector_store %arg33[%c0_96, %c0_97], %96 {strides = array<i32>} : memref<8x32xf32, #tpu.memory_space<vmem>>, vector<8x32xf32>,
      %cst_98 = arith.constant 0.000000e+00 : f32
      %98 = vector.broadcast %cst_98 : f32 to vector<32x8xf32>
      %c0_99 = arith.constant 0 : index
      %c0_100 = arith.constant 0 : index
      %99 = vector.load %arg34[%c0_99, %c0_100] : memref<32x8xf32, #tpu.memory_space<vmem>>, vector<32x8xf32>
      tpu.vector_store %arg34[%c0_99, %c0_100], %98 {strides = array<i32>} : memref<32x8xf32, #tpu.memory_space<vmem>>, vector<32x8xf32>,
      %cst_101 = arith.constant 0.000000e+00 : f32
      %100 = vector.broadcast %cst_101 : f32 to vector<8x1xf32>
      %c0_102 = arith.constant 0 : index
      %c0_103 = arith.constant 0 : index
      %101 = vector.load %arg35[%c0_102, %c0_103] : memref<8x1xf32, #tpu.memory_space<vmem>>, vector<8x1xf32>
      tpu.vector_store %arg35[%c0_102, %c0_103], %100 {strides = array<i32>} : memref<8x1xf32, #tpu.memory_space<vmem>>, vector<8x1xf32>,
    } else {
    }
    %c0 = arith.constant 0 : index
    %c0_4 = arith.constant 0 : index
    %8 = vector.load %arg2[%c0, %c0_4] : memref<8x128xf32, #tpu.memory_space<vmem>>, vector<8x128xf32>
    %c0_5 = arith.constant 0 : index
    %c0_6 = arith.constant 0 : index
    %9 = vector.load %arg3[%c0_5, %c0_6] : memref<8x128xf32, #tpu.memory_space<vmem>>, vector<8x128xf32>
    %c0_7 = arith.constant 0 : index
    %c0_8 = arith.constant 0 : index
    %10 = vector.load %arg4[%c0_7, %c0_8] : memref<1x128xf32, #tpu.memory_space<vmem>>, vector<1x128xf32>
    %c0_9 = arith.constant 0 : index
    %c0_10 = arith.constant 0 : index
    %11 = vector.load %arg20[%c0_9, %c0_10] : memref<32x8xf32, #tpu.memory_space<vmem>>, vector<32x8xf32>
    %c0_11 = arith.constant 0 : index
    %c0_12 = arith.constant 0 : index
    %12 = vector.load %arg21[%c0_11, %c0_12] : memref<32x1xf32, #tpu.memory_space<vmem>>, vector<32x1xf32>
    %c0_13 = arith.constant 0 : index
    %c0_14 = arith.constant 0 : index
    %13 = vector.load %arg22[%c0_13, %c0_14] : memref<32x32xf32, #tpu.memory_space<vmem>>, vector<32x32xf32>
    %c0_15 = arith.constant 0 : index
    %c0_16 = arith.constant 0 : index
    %14 = vector.load %arg23[%c0_15, %c0_16] : memref<32x32xf32, #tpu.memory_space<vmem>>, vector<32x32xf32>
    %c0_17 = arith.constant 0 : index
    %c0_18 = arith.constant 0 : index
    %15 = vector.load %arg24[%c0_17, %c0_18] : memref<32x1xf32, #tpu.memory_space<vmem>>, vector<32x1xf32>
    %c0_19 = arith.constant 0 : index
    %c0_20 = arith.constant 0 : index
    %16 = vector.load %arg25[%c0_19, %c0_20] : memref<8x32xf32, #tpu.memory_space<vmem>>, vector<8x32xf32>
    %c0_21 = arith.constant 0 : index
    %c0_22 = arith.constant 0 : index
    %17 = vector.load %arg26[%c0_21, %c0_22] : memref<32x8xf32, #tpu.memory_space<vmem>>, vector<32x8xf32>
    %c0_23 = arith.constant 0 : index
    %c0_24 = arith.constant 0 : index
    %18 = vector.load %arg27[%c0_23, %c0_24] : memref<8x1xf32, #tpu.memory_space<vmem>>, vector<8x1xf32>
    %cst = arith.constant dense<0.000000e+00> : vector<32x128xf32>
    %19 = tpu.matmul %11, %8, %cst {dimension_numbers = #tpu.dot_dimension_numbers<[1], [0], [0], [1], [0, 0, 1, 1], [], []>} : vector<32x8xf32>, vector<8x128xf32>, vector<32x128xf32> -> vector<32x128xf32>
    %20 = vector.broadcast %12 : vector<32x1xf32> to vector<32x128xf32>
    %21 = arith.addf %19, %20 : vector<32x128xf32>
    %cst_25 = arith.constant 0.000000e+00 : f32
    %22 = vector.broadcast %cst_25 : f32 to vector<32x128xf32>
    %23 = arith.maximumf %21, %22 : vector<32x128xf32>
    %cst_26 = arith.constant dense<0.000000e+00> : vector<32x128xf32>
    %24 = tpu.matmul %13, %23, %cst_26 {dimension_numbers = #tpu.dot_dimension_numbers<[1], [0], [0], [1], [0, 0, 1, 1], [], []>} : vector<32x32xf32>, vector<32x128xf32>, vector<32x128xf32> -> vector<32x128xf32>
    %25 = vector.broadcast %15 : vector<32x1xf32> to vector<32x128xf32>
    %26 = arith.addf %24, %25 : vector<32x128xf32>
    %cst_27 = arith.constant 0.000000e+00 : f32
    %27 = vector.broadcast %cst_27 : f32 to vector<32x128xf32>
    %28 = arith.maximumf %26, %27 : vector<32x128xf32>
    %cst_28 = arith.constant dense<0.000000e+00> : vector<8x128xf32>
    %29 = tpu.matmul %16, %28, %cst_28 {dimension_numbers = #tpu.dot_dimension_numbers<[1], [0], [0], [1], [0, 0, 1, 1], [], []>} : vector<8x32xf32>, vector<32x128xf32>, vector<8x128xf32> -> vector<8x128xf32>
    %30 = vector.broadcast %18 : vector<8x1xf32> to vector<8x128xf32>
    %31 = arith.addf %29, %30 : vector<8x128xf32>
    %c0_29 = arith.constant 0 : index
    %c0_30 = arith.constant 0 : index
    %c0_31 = arith.constant 0 : index
    %32 = vector.load %arg13[%c0_29, %c0_30, %c0_31] : memref<1x8x128xf32, #tpu.memory_space<vmem>>, vector<1x8x128xf32>
    %33 = vector.shape_cast %32 : vector<1x8x128xf32> to vector<8x128xf32>
    %34 = vector.shape_cast %31 : vector<8x128xf32> to vector<1x8x128xf32>
    tpu.vector_store %arg13[%c0_29, %c0_30, %c0_31], %34 {strides = array<i32>} : memref<1x8x128xf32, #tpu.memory_space<vmem>>, vector<1x8x128xf32>,
    %35 = arith.subf %31, %9 : vector<8x128xf32>
    %36 = vector.broadcast %10 : vector<1x128xf32> to vector<8x128xf32>
    %37 = arith.mulf %36, %35 : vector<8x128xf32>
    %c0_32 = arith.constant 0 : index
    %c0_33 = arith.constant 0 : index
    %38 = vector.load %arg33[%c0_32, %c0_33] : memref<8x32xf32, #tpu.memory_space<vmem>>, vector<8x32xf32>
    %cst_34 = arith.constant dense<0.000000e+00> : vector<8x32xf32>
    %39 = tpu.matmul %37, %28, %cst_34 {dimension_numbers = #tpu.dot_dimension_numbers<[1], [1], [0], [0], [0, 0, 1, 0], [], []>} : vector<8x128xf32>, vector<32x128xf32>, vector<8x32xf32> -> vector<8x32xf32>
    %40 = arith.addf %38, %39 : vector<8x32xf32>
    %c0_35 = arith.constant 0 : index
    %c0_36 = arith.constant 0 : index
    %41 = vector.load %arg33[%c0_35, %c0_36] : memref<8x32xf32, #tpu.memory_space<vmem>>, vector<8x32xf32>
    tpu.vector_store %arg33[%c0_35, %c0_36], %40 {strides = array<i32>} : memref<8x32xf32, #tpu.memory_space<vmem>>, vector<8x32xf32>,
    %c0_37 = arith.constant 0 : index
    %c0_38 = arith.constant 0 : index
    %42 = vector.load %arg34[%c0_37, %c0_38] : memref<32x8xf32, #tpu.memory_space<vmem>>, vector<32x8xf32>
    %cst_39 = arith.constant dense<0.000000e+00> : vector<32x8xf32>
    %43 = tpu.matmul %28, %37, %cst_39 {dimension_numbers = #tpu.dot_dimension_numbers<[1], [1], [0], [0], [0, 0, 1, 0], [], []>} : vector<32x128xf32>, vector<8x128xf32>, vector<32x8xf32> -> vector<32x8xf32>
    %44 = arith.addf %42, %43 : vector<32x8xf32>
    %c0_40 = arith.constant 0 : index
    %c0_41 = arith.constant 0 : index
    %45 = vector.load %arg34[%c0_40, %c0_41] : memref<32x8xf32, #tpu.memory_space<vmem>>, vector<32x8xf32>
    tpu.vector_store %arg34[%c0_40, %c0_41], %44 {strides = array<i32>} : memref<32x8xf32, #tpu.memory_space<vmem>>, vector<32x8xf32>,
    %c0_42 = arith.constant 0 : index
    %c0_43 = arith.constant 0 : index
    %46 = vector.load %arg35[%c0_42, %c0_43] : memref<8x1xf32, #tpu.memory_space<vmem>>, vector<8x1xf32>
    %cst_44 = arith.constant dense<0.000000e+00> : vector<8xf32>
    %47 = vector.multi_reduction <add>, %37, %cst_44 [1] : vector<8x128xf32> to vector<8xf32>
    %48 = vector.shape_cast %47 : vector<8xf32> to vector<8x1xf32>
    %49 = arith.addf %46, %48 : vector<8x1xf32>
    %c0_45 = arith.constant 0 : index
    %c0_46 = arith.constant 0 : index
    %50 = vector.load %arg35[%c0_45, %c0_46] : memref<8x1xf32, #tpu.memory_space<vmem>>, vector<8x1xf32>
    tpu.vector_store %arg35[%c0_45, %c0_46], %49 {strides = array<i32>} : memref<8x1xf32, #tpu.memory_space<vmem>>, vector<8x1xf32>,
    %cst_47 = arith.constant dense<0.000000e+00> : vector<32x128xf32>
    %51 = tpu.matmul %17, %37, %cst_47 {dimension_numbers = #tpu.dot_dimension_numbers<[1], [0], [0], [1], [0, 0, 1, 1], [], []>} : vector<32x8xf32>, vector<8x128xf32>, vector<32x128xf32> -> vector<32x128xf32>
    %cst_48 = arith.constant 0.000000e+00 : f32
    %52 = vector.broadcast %cst_48 : f32 to vector<32x128xf32>
    %53 = arith.cmpf ogt, %26, %52 : vector<32x128xf32>
    %cst_49 = arith.constant 0.000000e+00 : f32
    %54 = vector.broadcast %cst_49 : f32 to vector<32x128xf32>
    %55 = arith.select %53, %51, %54 : vector<32x128xi1>, vector<32x128xf32>
    %c0_50 = arith.constant 0 : index
    %c0_51 = arith.constant 0 : index
    %56 = vector.load %arg30[%c0_50, %c0_51] : memref<32x32xf32, #tpu.memory_space<vmem>>, vector<32x32xf32>
    %cst_52 = arith.constant dense<0.000000e+00> : vector<32x32xf32>
    %57 = tpu.matmul %55, %23, %cst_52 {dimension_numbers = #tpu.dot_dimension_numbers<[1], [1], [0], [0], [0, 0, 1, 0], [], []>} : vector<32x128xf32>, vector<32x128xf32>, vector<32x32xf32> -> vector<32x32xf32>
    %58 = arith.addf %56, %57 : vector<32x32xf32>
    %c0_53 = arith.constant 0 : index
    %c0_54 = arith.constant 0 : index
    %59 = vector.load %arg30[%c0_53, %c0_54] : memref<32x32xf32, #tpu.memory_space<vmem>>, vector<32x32xf32>
    tpu.vector_store %arg30[%c0_53, %c0_54], %58 {strides = array<i32>} : memref<32x32xf32, #tpu.memory_space<vmem>>, vector<32x32xf32>,
    %c0_55 = arith.constant 0 : index
    %c0_56 = arith.constant 0 : index
    %60 = vector.load %arg31[%c0_55, %c0_56] : memref<32x32xf32, #tpu.memory_space<vmem>>, vector<32x32xf32>
    %cst_57 = arith.constant dense<0.000000e+00> : vector<32x32xf32>
    %61 = tpu.matmul %23, %55, %cst_57 {dimension_numbers = #tpu.dot_dimension_numbers<[1], [1], [0], [0], [0, 0, 1, 0], [], []>} : vector<32x128xf32>, vector<32x128xf32>, vector<32x32xf32> -> vector<32x32xf32>
    %62 = arith.addf %60, %61 : vector<32x32xf32>
    %c0_58 = arith.constant 0 : index
    %c0_59 = arith.constant 0 : index
    %63 = vector.load %arg31[%c0_58, %c0_59] : memref<32x32xf32, #tpu.memory_space<vmem>>, vector<32x32xf32>
    tpu.vector_store %arg31[%c0_58, %c0_59], %62 {strides = array<i32>} : memref<32x32xf32, #tpu.memory_space<vmem>>, vector<32x32xf32>,
    %c0_60 = arith.constant 0 : index
    %c0_61 = arith.constant 0 : index
    %64 = vector.load %arg32[%c0_60, %c0_61] : memref<32x1xf32, #tpu.memory_space<vmem>>, vector<32x1xf32>
    %cst_62 = arith.constant dense<0.000000e+00> : vector<32xf32>
    %65 = vector.multi_reduction <add>, %55, %cst_62 [1] : vector<32x128xf32> to vector<32xf32>
    %66 = vector.shape_cast %65 : vector<32xf32> to vector<32x1xf32>
    %67 = arith.addf %64, %66 : vector<32x1xf32>
    %c0_63 = arith.constant 0 : index
    %c0_64 = arith.constant 0 : index
    %68 = vector.load %arg32[%c0_63, %c0_64] : memref<32x1xf32, #tpu.memory_space<vmem>>, vector<32x1xf32>
    tpu.vector_store %arg32[%c0_63, %c0_64], %67 {strides = array<i32>} : memref<32x1xf32, #tpu.memory_space<vmem>>, vector<32x1xf32>,
    %cst_65 = arith.constant dense<0.000000e+00> : vector<32x128xf32>
    %69 = tpu.matmul %14, %55, %cst_65 {dimension_numbers = #tpu.dot_dimension_numbers<[1], [0], [0], [1], [0, 0, 1, 1], [], []>} : vector<32x32xf32>, vector<32x128xf32>, vector<32x128xf32> -> vector<32x128xf32>
    %cst_66 = arith.constant 0.000000e+00 : f32
    %70 = vector.broadcast %cst_66 : f32 to vector<32x128xf32>
    %71 = arith.cmpf ogt, %21, %70 : vector<32x128xf32>
    %cst_67 = arith.constant 0.000000e+00 : f32
    %72 = vector.broadcast %cst_67 : f32 to vector<32x128xf32>
    %73 = arith.select %71, %69, %72 : vector<32x128xi1>, vector<32x128xf32>
    %c0_68 = arith.constant 0 : index
    %c0_69 = arith.constant 0 : index
    %74 = vector.load %arg28[%c0_68, %c0_69] : memref<32x8xf32, #tpu.memory_space<vmem>>, vector<32x8xf32>
    %cst_70 = arith.constant dense<0.000000e+00> : vector<32x8xf32>
    %75 = tpu.matmul %73, %8, %cst_70 {dimension_numbers = #tpu.dot_dimension_numbers<[1], [1], [0], [0], [0, 0, 1, 0], [], []>} : vector<32x128xf32>, vector<8x128xf32>, vector<32x8xf32> -> vector<32x8xf32>
    %76 = arith.addf %74, %75 : vector<32x8xf32>
    %c0_71 = arith.constant 0 : index
    %c0_72 = arith.constant 0 : index
    %77 = vector.load %arg28[%c0_71, %c0_72] : memref<32x8xf32, #tpu.memory_space<vmem>>, vector<32x8xf32>
    tpu.vector_store %arg28[%c0_71, %c0_72], %76 {strides = array<i32>} : memref<32x8xf32, #tpu.memory_space<vmem>>, vector<32x8xf32>,
    %c0_73 = arith.constant 0 : index
    %c0_74 = arith.constant 0 : index
    %78 = vector.load %arg29[%c0_73, %c0_74] : memref<32x1xf32, #tpu.memory_space<vmem>>, vector<32x1xf32>
    %cst_75 = arith.constant dense<0.000000e+00> : vector<32xf32>
    %79 = vector.multi_reduction <add>, %73, %cst_75 [1] : vector<32x128xf32> to vector<32xf32>
    %80 = vector.shape_cast %79 : vector<32xf32> to vector<32x1xf32>
    %81 = arith.addf %78, %80 : vector<32x1xf32>
    %c0_76 = arith.constant 0 : index
    %c0_77 = arith.constant 0 : index
    %82 = vector.load %arg29[%c0_76, %c0_77] : memref<32x1xf32, #tpu.memory_space<vmem>>, vector<32x1xf32>
    tpu.vector_store %arg29[%c0_76, %c0_77], %81 {strides = array<i32>} : memref<32x1xf32, #tpu.memory_space<vmem>>, vector<32x1xf32>,
    %c0_i32_78 = arith.constant 0 : i32
    %83 = arith.cmpi eq, %arg1, %c0_i32_78 : i32
    %84 = arith.extui %83 : i1 to i32
    %c0_i32_79 = arith.constant 0 : i32
    %85 = arith.cmpi ne, %84, %c0_i32_79 : i32
    scf.if %85 {
      %c0_80 = arith.constant 0 : index
      %c0_81 = arith.constant 0 : index
      %86 = vector.load %arg20[%c0_80, %c0_81] : memref<32x8xf32, #tpu.memory_space<vmem>>, vector<32x8xf32>
      %c0_82 = arith.constant 0 : index
      %c0_83 = arith.constant 0 : index
      %87 = vector.load %arg28[%c0_82, %c0_83] : memref<32x8xf32, #tpu.memory_space<vmem>>, vector<32x8xf32>
      %cst_84 = arith.constant 0.00999999977 : f32
      %88 = vector.broadcast %cst_84 : f32 to vector<32x8xf32>
      %89 = arith.mulf %88, %87 : vector<32x8xf32>
      %90 = arith.subf %86, %89 : vector<32x8xf32>
      %c0_85 = arith.constant 0 : index
      %c0_86 = arith.constant 0 : index
      %91 = vector.load %arg20[%c0_85, %c0_86] : memref<32x8xf32, #tpu.memory_space<vmem>>, vector<32x8xf32>
      tpu.vector_store %arg20[%c0_85, %c0_86], %90 {strides = array<i32>} : memref<32x8xf32, #tpu.memory_space<vmem>>, vector<32x8xf32>,
      %c0_87 = arith.constant 0 : index
      %c0_88 = arith.constant 0 : index
      %92 = vector.load %arg21[%c0_87, %c0_88] : memref<32x1xf32, #tpu.memory_space<vmem>>, vector<32x1xf32>
      %c0_89 = arith.constant 0 : index
      %c0_90 = arith.constant 0 : index
      %93 = vector.load %arg29[%c0_89, %c0_90] : memref<32x1xf32, #tpu.memory_space<vmem>>, vector<32x1xf32>
      %cst_91 = arith.constant 0.00999999977 : f32
      %94 = vector.broadcast %cst_91 : f32 to vector<32x1xf32>
      %95 = arith.mulf %94, %93 : vector<32x1xf32>
      %96 = arith.subf %92, %95 : vector<32x1xf32>
      %c0_92 = arith.constant 0 : index
      %c0_93 = arith.constant 0 : index
      %97 = vector.load %arg21[%c0_92, %c0_93] : memref<32x1xf32, #tpu.memory_space<vmem>>, vector<32x1xf32>
      tpu.vector_store %arg21[%c0_92, %c0_93], %96 {strides = array<i32>} : memref<32x1xf32, #tpu.memory_space<vmem>>, vector<32x1xf32>,
      %c0_94 = arith.constant 0 : index
      %c0_95 = arith.constant 0 : index
      %98 = vector.load %arg22[%c0_94, %c0_95] : memref<32x32xf32, #tpu.memory_space<vmem>>, vector<32x32xf32>
      %c0_96 = arith.constant 0 : index
      %c0_97 = arith.constant 0 : index
      %99 = vector.load %arg30[%c0_96, %c0_97] : memref<32x32xf32, #tpu.memory_space<vmem>>, vector<32x32xf32>
      %cst_98 = arith.constant 0.00999999977 : f32
      %100 = vector.broadcast %cst_98 : f32 to vector<32x32xf32>
      %101 = arith.mulf %100, %99 : vector<32x32xf32>
      %102 = arith.subf %98, %101 : vector<32x32xf32>
      %c0_99 = arith.constant 0 : index
      %c0_100 = arith.constant 0 : index
      %103 = vector.load %arg22[%c0_99, %c0_100] : memref<32x32xf32, #tpu.memory_space<vmem>>, vector<32x32xf32>
      tpu.vector_store %arg22[%c0_99, %c0_100], %102 {strides = array<i32>} : memref<32x32xf32, #tpu.memory_space<vmem>>, vector<32x32xf32>,
      %c0_101 = arith.constant 0 : index
      %c0_102 = arith.constant 0 : index
      %104 = vector.load %arg23[%c0_101, %c0_102] : memref<32x32xf32, #tpu.memory_space<vmem>>, vector<32x32xf32>
      %c0_103 = arith.constant 0 : index
      %c0_104 = arith.constant 0 : index
      %105 = vector.load %arg31[%c0_103, %c0_104] : memref<32x32xf32, #tpu.memory_space<vmem>>, vector<32x32xf32>
      %cst_105 = arith.constant 0.00999999977 : f32
      %106 = vector.broadcast %cst_105 : f32 to vector<32x32xf32>
      %107 = arith.mulf %106, %105 : vector<32x32xf32>
      %108 = arith.subf %104, %107 : vector<32x32xf32>
      %c0_106 = arith.constant 0 : index
      %c0_107 = arith.constant 0 : index
      %109 = vector.load %arg23[%c0_106, %c0_107] : memref<32x32xf32, #tpu.memory_space<vmem>>, vector<32x32xf32>
      tpu.vector_store %arg23[%c0_106, %c0_107], %108 {strides = array<i32>} : memref<32x32xf32, #tpu.memory_space<vmem>>, vector<32x32xf32>,
      %c0_108 = arith.constant 0 : index
      %c0_109 = arith.constant 0 : index
      %110 = vector.load %arg24[%c0_108, %c0_109] : memref<32x1xf32, #tpu.memory_space<vmem>>, vector<32x1xf32>
      %c0_110 = arith.constant 0 : index
      %c0_111 = arith.constant 0 : index
      %111 = vector.load %arg32[%c0_110, %c0_111] : memref<32x1xf32, #tpu.memory_space<vmem>>, vector<32x1xf32>
      %cst_112 = arith.constant 0.00999999977 : f32
      %112 = vector.broadcast %cst_112 : f32 to vector<32x1xf32>
      %113 = arith.mulf %112, %111 : vector<32x1xf32>
      %114 = arith.subf %110, %113 : vector<32x1xf32>
      %c0_113 = arith.constant 0 : index
      %c0_114 = arith.constant 0 : index
      %115 = vector.load %arg24[%c0_113, %c0_114] : memref<32x1xf32, #tpu.memory_space<vmem>>, vector<32x1xf32>
      tpu.vector_store %arg24[%c0_113, %c0_114], %114 {strides = array<i32>} : memref<32x1xf32, #tpu.memory_space<vmem>>, vector<32x1xf32>,
      %c0_115 = arith.constant 0 : index
      %c0_116 = arith.constant 0 : index
      %116 = vector.load %arg25[%c0_115, %c0_116] : memref<8x32xf32, #tpu.memory_space<vmem>>, vector<8x32xf32>
      %c0_117 = arith.constant 0 : index
      %c0_118 = arith.constant 0 : index
      %117 = vector.load %arg33[%c0_117, %c0_118] : memref<8x32xf32, #tpu.memory_space<vmem>>, vector<8x32xf32>
      %cst_119 = arith.constant 0.00999999977 : f32
      %118 = vector.broadcast %cst_119 : f32 to vector<8x32xf32>
      %119 = arith.mulf %118, %117 : vector<8x32xf32>
      %120 = arith.subf %116, %119 : vector<8x32xf32>
      %c0_120 = arith.constant 0 : index
      %c0_121 = arith.constant 0 : index
      %121 = vector.load %arg25[%c0_120, %c0_121] : memref<8x32xf32, #tpu.memory_space<vmem>>, vector<8x32xf32>
      tpu.vector_store %arg25[%c0_120, %c0_121], %120 {strides = array<i32>} : memref<8x32xf32, #tpu.memory_space<vmem>>, vector<8x32xf32>,
      %c0_122 = arith.constant 0 : index
      %c0_123 = arith.constant 0 : index
      %122 = vector.load %arg26[%c0_122, %c0_123] : memref<32x8xf32, #tpu.memory_space<vmem>>, vector<32x8xf32>
      %c0_124 = arith.constant 0 : index
      %c0_125 = arith.constant 0 : index
      %123 = vector.load %arg34[%c0_124, %c0_125] : memref<32x8xf32, #tpu.memory_space<vmem>>, vector<32x8xf32>
      %cst_126 = arith.constant 0.00999999977 : f32
      %124 = vector.broadcast %cst_126 : f32 to vector<32x8xf32>
      %125 = arith.mulf %124, %123 : vector<32x8xf32>
      %126 = arith.subf %122, %125 : vector<32x8xf32>
      %c0_127 = arith.constant 0 : index
      %c0_128 = arith.constant 0 : index
      %127 = vector.load %arg26[%c0_127, %c0_128] : memref<32x8xf32, #tpu.memory_space<vmem>>, vector<32x8xf32>
      tpu.vector_store %arg26[%c0_127, %c0_128], %126 {strides = array<i32>} : memref<32x8xf32, #tpu.memory_space<vmem>>, vector<32x8xf32>,
      %c0_129 = arith.constant 0 : index
      %c0_130 = arith.constant 0 : index
      %128 = vector.load %arg27[%c0_129, %c0_130] : memref<8x1xf32, #tpu.memory_space<vmem>>, vector<8x1xf32>
      %c0_131 = arith.constant 0 : index
      %c0_132 = arith.constant 0 : index
      %129 = vector.load %arg35[%c0_131, %c0_132] : memref<8x1xf32, #tpu.memory_space<vmem>>, vector<8x1xf32>
      %cst_133 = arith.constant 0.00999999977 : f32
      %130 = vector.broadcast %cst_133 : f32 to vector<8x1xf32>
      %131 = arith.mulf %130, %129 : vector<8x1xf32>
      %132 = arith.subf %128, %131 : vector<8x1xf32>
      %c0_134 = arith.constant 0 : index
      %c0_135 = arith.constant 0 : index
      %133 = vector.load %arg27[%c0_134, %c0_135] : memref<8x1xf32, #tpu.memory_space<vmem>>, vector<8x1xf32>
      tpu.vector_store %arg27[%c0_134, %c0_135], %132 {strides = array<i32>} : memref<8x1xf32, #tpu.memory_space<vmem>>, vector<8x1xf32>,
      %c0_136 = arith.constant 0 : index
      %c0_137 = arith.constant 0 : index
      %134 = vector.load %arg20[%c0_136, %c0_137] : memref<32x8xf32, #tpu.memory_space<vmem>>, vector<32x8xf32>
      %c0_138 = arith.constant 0 : index
      %c0_139 = arith.constant 0 : index
      %135 = vector.load %arg14[%c0_138, %c0_139] : memref<32x8xf32, #tpu.memory_space<vmem>>, vector<32x8xf32>
      tpu.vector_store %arg14[%c0_138, %c0_139], %134 {strides = array<i32>} : memref<32x8xf32, #tpu.memory_space<vmem>>, vector<32x8xf32>,
      %c0_140 = arith.constant 0 : index
      %c0_141 = arith.constant 0 : index
      %136 = vector.load %arg21[%c0_140, %c0_141] : memref<32x1xf32, #tpu.memory_space<vmem>>, vector<32x1xf32>
      %c0_142 = arith.constant 0 : index
      %c0_143 = arith.constant 0 : index
      %137 = vector.load %arg15[%c0_142, %c0_143] : memref<32x1xf32, #tpu.memory_space<vmem>>, vector<32x1xf32>
      tpu.vector_store %arg15[%c0_142, %c0_143], %136 {strides = array<i32>} : memref<32x1xf32, #tpu.memory_space<vmem>>, vector<32x1xf32>,
      %c0_144 = arith.constant 0 : index
      %c0_145 = arith.constant 0 : index
      %138 = vector.load %arg22[%c0_144, %c0_145] : memref<32x32xf32, #tpu.memory_space<vmem>>, vector<32x32xf32>
      %c0_146 = arith.constant 0 : index
      %c0_147 = arith.constant 0 : index
      %139 = vector.load %arg16[%c0_146, %c0_147] : memref<32x32xf32, #tpu.memory_space<vmem>>, vector<32x32xf32>
      tpu.vector_store %arg16[%c0_146, %c0_147], %138 {strides = array<i32>} : memref<32x32xf32, #tpu.memory_space<vmem>>, vector<32x32xf32>,
      %c0_148 = arith.constant 0 : index
      %c0_149 = arith.constant 0 : index
      %140 = vector.load %arg24[%c0_148, %c0_149] : memref<32x1xf32, #tpu.memory_space<vmem>>, vector<32x1xf32>
      %c0_150 = arith.constant 0 : index
      %c0_151 = arith.constant 0 : index
      %141 = vector.load %arg17[%c0_150, %c0_151] : memref<32x1xf32, #tpu.memory_space<vmem>>, vector<32x1xf32>
      tpu.vector_store %arg17[%c0_150, %c0_151], %140 {strides = array<i32>} : memref<32x1xf32, #tpu.memory_space<vmem>>, vector<32x1xf32>,
      %c0_152 = arith.constant 0 : index
      %c0_153 = arith.constant 0 : index
      %142 = vector.load %arg25[%c0_152, %c0_153] : memref<8x32xf32, #tpu.memory_space<vmem>>, vector<8x32xf32>
      %c0_154 = arith.constant 0 : index
      %c0_155 = arith.constant 0 : index
      %143 = vector.load %arg18[%c0_154, %c0_155] : memref<8x32xf32, #tpu.memory_space<vmem>>, vector<8x32xf32>
      tpu.vector_store %arg18[%c0_154, %c0_155], %142 {strides = array<i32>} : memref<8x32xf32, #tpu.memory_space<vmem>>, vector<8x32xf32>,
      %c0_156 = arith.constant 0 : index
      %c0_157 = arith.constant 0 : index
      %144 = vector.load %arg27[%c0_156, %c0_157] : memref<8x1xf32, #tpu.memory_space<vmem>>, vector<8x1xf32>
      %c0_158 = arith.constant 0 : index
      %c0_159 = arith.constant 0 : index
      %145 = vector.load %arg19[%c0_158, %c0_159] : memref<8x1xf32, #tpu.memory_space<vmem>>, vector<8x1xf32>
      tpu.vector_store %arg19[%c0_158, %c0_159], %144 {strides = array<i32>} : memref<8x1xf32, #tpu.memory_space<vmem>>, vector<8x1xf32>,
    } else {
    }
    return
  }
  func.func @transform_0(%arg0: i32, %arg1: i32) -> (i32, i32) {
    %c0_i32 = arith.constant 0 : i32
    %c0_i32_0 = arith.constant 0 : i32
    return %c0_i32, %arg1 : i32, i32
  }
  func.func @transform_1(%arg0: i32, %arg1: i32) -> (i32, i32) {
    %c0_i32 = arith.constant 0 : i32
    %c0_i32_0 = arith.constant 0 : i32
    return %c0_i32, %arg1 : i32, i32
  }
  func.func @transform_2(%arg0: i32, %arg1: i32) -> (i32, i32) {
    %c0_i32 = arith.constant 0 : i32
    %c0_i32_0 = arith.constant 0 : i32
    return %c0_i32, %arg1 : i32, i32
  }
  func.func @transform_3(%arg0: i32, %arg1: i32) -> (i32, i32) {
    %c0_i32 = arith.constant 0 : i32
    %c0_i32_0 = arith.constant 0 : i32
    %c0_i32_1 = arith.constant 0 : i32
    return %c0_i32, %c0_i32_0 : i32, i32
  }
  func.func @transform_4(%arg0: i32, %arg1: i32) -> (i32, i32) {
    %c0_i32 = arith.constant 0 : i32
    %c0_i32_0 = arith.constant 0 : i32
    %c0_i32_1 = arith.constant 0 : i32
    return %c0_i32, %c0_i32_0 : i32, i32
  }
  func.func @transform_5(%arg0: i32, %arg1: i32) -> (i32, i32) {
    %c0_i32 = arith.constant 0 : i32
    %c0_i32_0 = arith.constant 0 : i32
    %c0_i32_1 = arith.constant 0 : i32
    return %c0_i32, %c0_i32_0 : i32, i32
  }
  func.func @transform_6(%arg0: i32, %arg1: i32) -> (i32, i32) {
    %c0_i32 = arith.constant 0 : i32
    %c0_i32_0 = arith.constant 0 : i32
    %c0_i32_1 = arith.constant 0 : i32
    return %c0_i32, %c0_i32_0 : i32, i32
  }
  func.func @transform_7(%arg0: i32, %arg1: i32) -> (i32, i32) {
    %c0_i32 = arith.constant 0 : i32
    %c0_i32_0 = arith.constant 0 : i32
    %c0_i32_1 = arith.constant 0 : i32
    return %c0_i32, %c0_i32_0 : i32, i32
  }
  func.func @transform_8(%arg0: i32, %arg1: i32) -> (i32, i32) {
    %c0_i32 = arith.constant 0 : i32
    %c0_i32_0 = arith.constant 0 : i32
    %c0_i32_1 = arith.constant 0 : i32
    return %c0_i32, %c0_i32_0 : i32, i32
  }
  func.func @transform_9(%arg0: i32, %arg1: i32) -> (i32, i32) {
    %c0_i32 = arith.constant 0 : i32
    %c0_i32_0 = arith.constant 0 : i32
    %c0_i32_1 = arith.constant 0 : i32
    return %c0_i32, %c0_i32_0 : i32, i32
  }
  func.func @transform_10(%arg0: i32, %arg1: i32) -> (i32, i32) {
    %c0_i32 = arith.constant 0 : i32
    %c0_i32_0 = arith.constant 0 : i32
    %c0_i32_1 = arith.constant 0 : i32
    return %c0_i32, %c0_i32_0 : i32, i32
  }
  func.func @transform_11(%arg0: i32, %arg1: i32) -> (i32, i32, i32) {
    %c0_i32 = arith.constant 0 : i32
    %c0_i32_0 = arith.constant 0 : i32
    return %arg0, %c0_i32, %arg1 : i32, i32, i32
  }
  func.func @transform_12(%arg0: i32, %arg1: i32) -> (i32, i32) {
    %c0_i32 = arith.constant 0 : i32
    %c0_i32_0 = arith.constant 0 : i32
    %c0_i32_1 = arith.constant 0 : i32
    return %c0_i32, %c0_i32_0 : i32, i32
  }
  func.func @transform_13(%arg0: i32, %arg1: i32) -> (i32, i32) {
    %c0_i32 = arith.constant 0 : i32
    %c0_i32_0 = arith.constant 0 : i32
    %c0_i32_1 = arith.constant 0 : i32
    return %c0_i32, %c0_i32_0 : i32, i32
  }
  func.func @transform_14(%arg0: i32, %arg1: i32) -> (i32, i32) {
    %c0_i32 = arith.constant 0 : i32
    %c0_i32_0 = arith.constant 0 : i32
    %c0_i32_1 = arith.constant 0 : i32
    return %c0_i32, %c0_i32_0 : i32, i32
  }
  func.func @transform_15(%arg0: i32, %arg1: i32) -> (i32, i32) {
    %c0_i32 = arith.constant 0 : i32
    %c0_i32_0 = arith.constant 0 : i32
    %c0_i32_1 = arith.constant 0 : i32
    return %c0_i32, %c0_i32_0 : i32, i32
  }
  func.func @transform_16(%arg0: i32, %arg1: i32) -> (i32, i32) {
    %c0_i32 = arith.constant 0 : i32
    %c0_i32_0 = arith.constant 0 : i32
    %c0_i32_1 = arith.constant 0 : i32
    return %c0_i32, %c0_i32_0 : i32, i32
  }
  func.func @transform_17(%arg0: i32, %arg1: i32) -> (i32, i32) {
    %c0_i32 = arith.constant 0 : i32
    %c0_i32_0 = arith.constant 0 : i32
    %c0_i32_1 = arith.constant 0 : i32
    return %c0_i32, %c0_i32_0 : i32, i32
  }
}

</mosaic_0001>

<llo_original>
// kernel: tpu_custom_call.1
$region0: #{tpu_custom_call.1}
  #allocation0 [shape = 'u32[]', space=smem, size = 0x4, offset = 0x4, fixed_abs, tag = 'smem constant byte address 0x4 - core index']
  #allocation1 [shape = 'u32[144,128]{1,0:T(1,128)}', space=vmem, size = 0x12000, scoped, tag = 'internal scratch']
  #allocation2 [shape = 'f32[32,8]{1,0:T(8,128)}', space=vmem, size = 0x4000, scoped, tag = 'scratch operand']
  #allocation3 [shape = 'f32[32,1]{1,0:T(8,128)}', space=vmem, size = 0x4000, scoped, tag = 'scratch operand']
  #allocation4 [shape = 'f32[32,32]{1,0:T(8,128)}', space=vmem, size = 0x4000, scoped, tag = 'scratch operand']
  #allocation5 [shape = 'f32[32,32]{1,0:T(8,128)}', space=vmem, size = 0x4000, scoped, tag = 'scratch operand']
  #allocation6 [shape = 'f32[32,1]{1,0:T(8,128)}', space=vmem, size = 0x4000, scoped, tag = 'scratch operand']
  #allocation7 [shape = 'f32[8,32]{1,0:T(8,128)}', space=vmem, size = 0x1000, scoped, tag = 'scratch operand']
  #allocation8 [shape = 'f32[32,8]{1,0:T(8,128)}', space=vmem, size = 0x4000, scoped, tag = 'scratch operand']
  #allocation9 [shape = 'f32[8,1]{1,0:T(8,128)}', space=vmem, size = 0x1000, scoped, tag = 'scratch operand']
  #allocation10 [shape = 'f32[32,8]{1,0:T(8,128)}', space=vmem, size = 0x4000, scoped, tag = 'scratch operand']
  #allocation11 [shape = 'f32[32,1]{1,0:T(8,128)}', space=vmem, size = 0x4000, scoped, tag = 'scratch operand']
  #allocation12 [shape = 'f32[32,32]{1,0:T(8,128)}', space=vmem, size = 0x4000, scoped, tag = 'scratch operand']
  #allocation13 [shape = 'f32[32,32]{1,0:T(8,128)}', space=vmem, size = 0x4000, scoped, tag = 'scratch operand']
  #allocation14 [shape = 'f32[32,1]{1,0:T(8,128)}', space=vmem, size = 0x4000, scoped, tag = 'scratch operand']
  #allocation15 [shape = 'f32[8,32]{1,0:T(8,128)}', space=vmem, size = 0x1000, scoped, tag = 'scratch operand']
  #allocation16 [shape = 'f32[32,8]{1,0:T(8,128)}', space=vmem, size = 0x4000, scoped, tag = 'scratch operand']
  #allocation17 [shape = 'f32[8,1]{1,0:T(8,128)}', space=vmem, size = 0x1000, scoped, tag = 'scratch operand']
  %s0 = inlined_call_operand.vmem [shape: f32[8,128], index: 0, kind: input, shape index: {}]
  %s1 = inlined_call_operand.vmem [shape: f32[8,128], index: 1, kind: input, shape index: {}]
  %s2 = inlined_call_operand.vmem [shape: f32[1,128], index: 2, kind: input, shape index: {}]
  %s3 = inlined_call_operand.vmem [shape: f32[32,8], index: 3, kind: input, shape index: {}]
  %s4 = inlined_call_operand.vmem [shape: f32[32,1], index: 4, kind: input, shape index: {}]
  %s5 = inlined_call_operand.vmem [shape: f32[32,32], index: 5, kind: input, shape index: {}]
  %s6 = inlined_call_operand.vmem [shape: f32[32,32], index: 6, kind: input, shape index: {}]
  %s7 = inlined_call_operand.vmem [shape: f32[32,1], index: 7, kind: input, shape index: {}]
  %s8 = inlined_call_operand.vmem [shape: f32[8,32], index: 8, kind: input, shape index: {}]
  %s9 = inlined_call_operand.vmem [shape: f32[32,8], index: 9, kind: input, shape index: {}]
  %s10 = inlined_call_operand.vmem [shape: f32[8,1], index: 10, kind: input, shape index: {}]
  %s11 = inlined_call_operand.hbm [shape: f32[3,8,128], index: 11, kind: output, shape index: {0}]
  %s12 = inlined_call_operand.vmem [shape: f32[32,8], index: 12, kind: output, shape index: {1}]
  %s13 = inlined_call_operand.vmem [shape: f32[32,1], index: 13, kind: output, shape index: {2}]
  %s14 = inlined_call_operand.hbm [shape: f32[32,32], index: 14, kind: output, shape index: {3}]
  %s15 = inlined_call_operand.vmem [shape: f32[32,1], index: 15, kind: output, shape index: {4}]
  %s16 = inlined_call_operand.hbm [shape: f32[8,32], index: 16, kind: output, shape index: {5}]
  %s17 = inlined_call_operand.vmem [shape: f32[8,1], index: 17, kind: output, shape index: {6}]
  %18 = xla_tuple %s11, %s12, %s13, %s14, %s15, %s16, %s17
  %s19 = sld [smem:[#allocation0]]
  $region137: #{tpu_custom_call.1} parent=0
    _
  %s21 = ssub.s32 1, %s19
  %s22 = scalar_select 0, %s21, %s19
  $region1: #{tpu_custom_call.1} parent=0
    #allocation18 [shape = 'u8[8192]{0}', space=vmem, size = 0x2000, scoped, tag = 'output window, operand 0']
    #allocation19 [shape = 's32[2]{0}', space=sflag, size = 0x8, scoped, tag = 'scoped memory for tpu_custom_call.1']
    #allocation20 [shape = 'u8[16384]{0}', space=vmem, size = 0x4000, scoped, tag = 'output window, operand 3, single buffered']
    #allocation21 [shape = 's32[1]{0}', space=sflag, size = 0x4, scoped, tag = 'scoped memory for tpu_custom_call.1']
    #allocation22 [shape = 'u8[4096]{0}', space=vmem, size = 0x1000, scoped, tag = 'output window, operand 5, single buffered']
    %23 = vsyncpa [#allocation19], 0
    %s24 = scalar_lea.sflag [#allocation19], 1
    %25 = vsyncpa %s24, 0
    %26 = vsyncpa [#allocation21], 0
    loop: start=0, step=1, limit=5
    $region2: #{tpu_custom_call.1} parent=1 // loop_pre_header
      _
    $region3: #{tpu_custom_call.1} parent=1 // loop_header
      %s28 = sphi 0, %s32
      %p29 = scmp.ge.s32.totalorder %s28, 5
      %s35 = sphi 0, %s47
      %s36 = sphi 0, %s43
      %s37 = sphi 0, %s35
      %s38 = sphi 0, %s36
      %s39 = sphi 0, %s37
      %s40 = sphi 0, %s38
      %s50 = sphi 0, %s52
      %s53 = sphi 0, %s50
      %s54 = sphi 0, %s53
      %s70 = sphi 0, %s54
      %s76 = sphi 0, %s78
      %s79 = sphi 0, %s76
      %s80 = sphi 0, %s79
      %s96 = sphi 0, %s80
      %s102 = sphi 0, %s104
      %s105 = sphi 0, %s102
      %s106 = sphi 0, %s105
      %s122 = sphi 0, %s106
      %s126 = sphi 0, %s126
      %s128 = sphi 0, %s126
      %s129 = sphi 0, %s128
      %s143 = sphi 0, %s129
      %s147 = sphi 0, %s147
      %s149 = sphi 0, %s147
      %s150 = sphi 0, %s149
      %s164 = sphi 0, %s150
      %s168 = sphi 0, %s168
      %s170 = sphi 0, %s168
      %s171 = sphi 0, %s170
      %s185 = sphi 0, %s171
      %s189 = sphi 0, %s189
      %s191 = sphi 0, %s189
      %s192 = sphi 0, %s191
      %s206 = sphi 0, %s192
      %s210 = sphi 0, %s210
      %s212 = sphi 0, %s210
      %s213 = sphi 0, %s212
      %s227 = sphi 0, %s213
      %s231 = sphi 0, %s231
      %s233 = sphi 0, %s231
      %s234 = sphi 0, %s233
      %s248 = sphi 0, %s234
      %s252 = sphi 0, %s252
      %s254 = sphi 0, %s252
      %s255 = sphi 0, %s254
      %s269 = sphi 0, %s255
      %s273 = sphi 0, %s273
      %s275 = sphi 0, %s273
      %s276 = sphi 0, %s275
      %s290 = sphi 0, %s276
      %s298 = sphi 0, %s300
      %s301 = sphi 0, %s298
      %s302 = sphi 0, %s301
      %s318 = sphi 0, %s302
      %s322 = sphi 0, %s322
      %s324 = sphi 0, %s322
      %s325 = sphi 0, %s324
      %s339 = sphi 0, %s325
      %s343 = sphi 0, %s343
      %s345 = sphi 0, %s343
      %s346 = sphi 0, %s345
      %s360 = sphi 0, %s346
      %s364 = sphi 0, %s364
      %s366 = sphi 0, %s364
      %s367 = sphi 0, %s366
      %s381 = sphi 0, %s367
      %s385 = sphi 0, %s385
      %s387 = sphi 0, %s385
      %s388 = sphi 0, %s387
      %s402 = sphi 0, %s388
      %s406 = sphi 0, %s406
      %s408 = sphi 0, %s406
      %s409 = sphi 0, %s408
      %s423 = sphi 0, %s409
      %s427 = sphi 0, %s427
      %s429 = sphi 0, %s427
      %s430 = sphi 0, %s429
      %s444 = sphi 0, %s430
    $region4: #{tpu_custom_call.1} parent=1 // loop_header_branch
      %31 = sbr.rel (%p29) target = $region8
    $region5: #{tpu_custom_call.1} parent=1 // loop_body
      %s33 = ssub.s32 %s28, 1
      %s34 = ssub.s32 %s28, 2
      %s41 = sadd.s32 1, %s36
      %p42 = scmp.ge.s32.totalorder %s41, 1
      %s43 = scalar_select %p42, 0, %s41
      %s44 = sadd.s32 1, %s35
      %s45 = scalar_select %p42, %s44, %s35
      %p46 = scmp.ge.s32.totalorder %s45, 3
      %s47 = scalar_select %p46, 0, %s45
      %s48 = ssub.s32 %s36, %s43
      %p49 = scmp.eq.s32.totalorder %s48, 0
      %s51 = sadd.s32 %s50, 1
      %s52 = scalar_select %p49, %s50, %s51
      %p55 = pneg %p49
      %p56 = scmp.eq.s32.totalorder %s28, 2
      %p57 = por %p55, %p56
      %p58 = scmp.ne.s32.totalorder %s50, %s53
      %p59 = scmp.eq.s32.totalorder %s28, 0
      %p60 = por %p58, %p59
      %p61 = scmp.ne.s32.totalorder %s50, %s53
      %p62 = scmp.eq.s32.totalorder %s33, 2
      %p63 = por %p61, %p62
      %p64 = scmp.ne.s32.totalorder %s53, %s54
      %p65 = scmp.eq.s32.totalorder %s33, 0
      %p66 = por %p64, %p65
      %p67 = scmp.ne.s32.totalorder %s53, %s54
      %p68 = scmp.eq.s32.totalorder %s34, 2
      %p69 = por %p67, %p68
      %p71 = scmp.ne.s32.totalorder %s54, %s70
      %p72 = scmp.eq.s32.totalorder %s34, 0
      %p73 = por %p71, %p72
      %s74 = ssub.s32 %s36, %s43
      %p75 = scmp.eq.s32.totalorder %s74, 0
      %s77 = sadd.s32 %s76, 1
      %s78 = scalar_select %p75, %s76, %s77
      %p81 = pneg %p75
      %p82 = scmp.eq.s32.totalorder %s28, 2
      %p83 = por %p81, %p82
      %p84 = scmp.ne.s32.totalorder %s76, %s79
      %p85 = scmp.eq.s32.totalorder %s28, 0
      %p86 = por %p84, %p85
      %p87 = scmp.ne.s32.totalorder %s76, %s79
      %p88 = scmp.eq.s32.totalorder %s33, 2
      %p89 = por %p87, %p88
      %p90 = scmp.ne.s32.totalorder %s79, %s80
      %p91 = scmp.eq.s32.totalorder %s33, 0
      %p92 = por %p90, %p91
      %p93 = scmp.ne.s32.totalorder %s79, %s80
      %p94 = scmp.eq.s32.totalorder %s34, 2
      %p95 = por %p93, %p94
      %p97 = scmp.ne.s32.totalorder %s80, %s96
      %p98 = scmp.eq.s32.totalorder %s34, 0
      %p99 = por %p97, %p98
      %s100 = ssub.s32 %s36, %s43
      %p101 = scmp.eq.s32.totalorder %s100, 0
      %s103 = sadd.s32 %s102, 1
      %s104 = scalar_select %p101, %s102, %s103
      %p107 = pneg %p101
      %p108 = scmp.eq.s32.totalorder %s28, 2
      %p109 = por %p107, %p108
      %p110 = scmp.ne.s32.totalorder %s102, %s105
      %p111 = scmp.eq.s32.totalorder %s28, 0
      %p112 = por %p110, %p111
      %p113 = scmp.ne.s32.totalorder %s102, %s105
      %p114 = scmp.eq.s32.totalorder %s33, 2
      %p115 = por %p113, %p114
      %p116 = scmp.ne.s32.totalorder %s105, %s106
      %p117 = scmp.eq.s32.totalorder %s33, 0
      %p118 = por %p116, %p117
      %p119 = scmp.ne.s32.totalorder %s105, %s106
      %p120 = scmp.eq.s32.totalorder %s34, 2
      %p121 = por %p119, %p120
      %p123 = scmp.ne.s32.totalorder %s106, %s122
      %p124 = scmp.eq.s32.totalorder %s34, 0
      %p125 = por %p123, %p124
      %s127 = sadd.s32 %s126, 1
      %p130 = scmp.eq.s32.totalorder %s28, 2
      %p131 = scmp.ne.s32.totalorder %s126, %s128
      %p132 = scmp.eq.s32.totalorder %s28, 0
      %p133 = por %p131, %p132
      %p134 = scmp.ne.s32.totalorder %s126, %s128
      %p135 = scmp.eq.s32.totalorder %s33, 2
      %p136 = por %p134, %p135
      %p137 = scmp.ne.s32.totalorder %s128, %s129
      %p138 = scmp.eq.s32.totalorder %s33, 0
      %p139 = por %p137, %p138
      %p140 = scmp.ne.s32.totalorder %s128, %s129
      %p141 = scmp.eq.s32.totalorder %s34, 2
      %p142 = por %p140, %p141
      %p144 = scmp.ne.s32.totalorder %s129, %s143
      %p145 = scmp.eq.s32.totalorder %s34, 0
      %p146 = por %p144, %p145
      %s148 = sadd.s32 %s147, 1
      %p151 = scmp.eq.s32.totalorder %s28, 2
      %p152 = scmp.ne.s32.totalorder %s147, %s149
      %p153 = scmp.eq.s32.totalorder %s28, 0
      %p154 = por %p152, %p153
      %p155 = scmp.ne.s32.totalorder %s147, %s149
      %p156 = scmp.eq.s32.totalorder %s33, 2
      %p157 = por %p155, %p156
      %p158 = scmp.ne.s32.totalorder %s149, %s150
      %p159 = scmp.eq.s32.totalorder %s33, 0
      %p160 = por %p158, %p159
      %p161 = scmp.ne.s32.totalorder %s149, %s150
      %p162 = scmp.eq.s32.totalorder %s34, 2
      %p163 = por %p161, %p162
      %p165 = scmp.ne.s32.totalorder %s150, %s164
      %p166 = scmp.eq.s32.totalorder %s34, 0
      %p167 = por %p165, %p166
      %s169 = sadd.s32 %s168, 1
      %p172 = scmp.eq.s32.totalorder %s28, 2
      %p173 = scmp.ne.s32.totalorder %s168, %s170
      %p174 = scmp.eq.s32.totalorder %s28, 0
      %p175 = por %p173, %p174
      %p176 = scmp.ne.s32.totalorder %s168, %s170
      %p177 = scmp.eq.s32.totalorder %s33, 2
      %p178 = por %p176, %p177
      %p179 = scmp.ne.s32.totalorder %s170, %s171
      %p180 = scmp.eq.s32.totalorder %s33, 0
      %p181 = por %p179, %p180
      %p182 = scmp.ne.s32.totalorder %s170, %s171
      %p183 = scmp.eq.s32.totalorder %s34, 2
      %p184 = por %p182, %p183
      %p186 = scmp.ne.s32.totalorder %s171, %s185
      %p187 = scmp.eq.s32.totalorder %s34, 0
      %p188 = por %p186, %p187
      %s190 = sadd.s32 %s189, 1
      %p193 = scmp.eq.s32.totalorder %s28, 2
      %p194 = scmp.ne.s32.totalorder %s189, %s191
      %p195 = scmp.eq.s32.totalorder %s28, 0
      %p196 = por %p194, %p195
      %p197 = scmp.ne.s32.totalorder %s189, %s191
      %p198 = scmp.eq.s32.totalorder %s33, 2
      %p199 = por %p197, %p198
      %p200 = scmp.ne.s32.totalorder %s191, %s192
      %p201 = scmp.eq.s32.totalorder %s33, 0
      %p202 = por %p200, %p201
      %p203 = scmp.ne.s32.totalorder %s191, %s192
      %p204 = scmp.eq.s32.totalorder %s34, 2
      %p205 = por %p203, %p204
      %p207 = scmp.ne.s32.totalorder %s192, %s206
      %p208 = scmp.eq.s32.totalorder %s34, 0
      %p209 = por %p207, %p208
      %s211 = sadd.s32 %s210, 1
      %p214 = scmp.eq.s32.totalorder %s28, 2
      %p215 = scmp.ne.s32.totalorder %s210, %s212
      %p216 = scmp.eq.s32.totalorder %s28, 0
      %p217 = por %p215, %p216
      %p218 = scmp.ne.s32.totalorder %s210, %s212
      %p219 = scmp.eq.s32.totalorder %s33, 2
      %p220 = por %p218, %p219
      %p221 = scmp.ne.s32.totalorder %s212, %s213
      %p222 = scmp.eq.s32.totalorder %s33, 0
      %p223 = por %p221, %p222
      %p224 = scmp.ne.s32.totalorder %s212, %s213
      %p225 = scmp.eq.s32.totalorder %s34, 2
      %p226 = por %p224, %p225
      %p228 = scmp.ne.s32.totalorder %s213, %s227
      %p229 = scmp.eq.s32.totalorder %s34, 0
      %p230 = por %p228, %p229
      %s232 = sadd.s32 %s231, 1
      %p235 = scmp.eq.s32.totalorder %s28, 2
      %p236 = scmp.ne.s32.totalorder %s231, %s233
      %p237 = scmp.eq.s32.totalorder %s28, 0
      %p238 = por %p236, %p237
      %p239 = scmp.ne.s32.totalorder %s231, %s233
      %p240 = scmp.eq.s32.totalorder %s33, 2
      %p241 = por %p239, %p240
      %p242 = scmp.ne.s32.totalorder %s233, %s234
      %p243 = scmp.eq.s32.totalorder %s33, 0
      %p244 = por %p242, %p243
      %p245 = scmp.ne.s32.totalorder %s233, %s234
      %p246 = scmp.eq.s32.totalorder %s34, 2
      %p247 = por %p245, %p246
      %p249 = scmp.ne.s32.totalorder %s234, %s248
      %p250 = scmp.eq.s32.totalorder %s34, 0
      %p251 = por %p249, %p250
      %s253 = sadd.s32 %s252, 1
      %p256 = scmp.eq.s32.totalorder %s28, 2
      %p257 = scmp.ne.s32.totalorder %s252, %s254
      %p258 = scmp.eq.s32.totalorder %s28, 0
      %p259 = por %p257, %p258
      %p260 = scmp.ne.s32.totalorder %s252, %s254
      %p261 = scmp.eq.s32.totalorder %s33, 2
      %p262 = por %p260, %p261
      %p263 = scmp.ne.s32.totalorder %s254, %s255
      %p264 = scmp.eq.s32.totalorder %s33, 0
      %p265 = por %p263, %p264
      %p266 = scmp.ne.s32.totalorder %s254, %s255
      %p267 = scmp.eq.s32.totalorder %s34, 2
      %p268 = por %p266, %p267
      %p270 = scmp.ne.s32.totalorder %s255, %s269
      %p271 = scmp.eq.s32.totalorder %s34, 0
      %p272 = por %p270, %p271
      %s274 = sadd.s32 %s273, 1
      %p277 = scmp.eq.s32.totalorder %s28, 2
      %p278 = scmp.ne.s32.totalorder %s273, %s275
      %p279 = scmp.eq.s32.totalorder %s28, 0
      %p280 = por %p278, %p279
      %p281 = scmp.ne.s32.totalorder %s273, %s275
      %p282 = scmp.eq.s32.totalorder %s33, 2
      %p283 = por %p281, %p282
      %p284 = scmp.ne.s32.totalorder %s275, %s276
      %p285 = scmp.eq.s32.totalorder %s33, 0
      %p286 = por %p284, %p285
      %p287 = scmp.ne.s32.totalorder %s275, %s276
      %p288 = scmp.eq.s32.totalorder %s34, 2
      %p289 = por %p287, %p288
      %p291 = scmp.ne.s32.totalorder %s276, %s290
      %p292 = scmp.eq.s32.totalorder %s34, 0
      %p293 = por %p291, %p292
      %s294 = ssub.s32 %s35, %s47
      %s295 = ssub.s32 %s36, %s43
      %s296 = sor.u32 %s294, %s295
      %p297 = scmp.eq.s32.totalorder %s296, 0
      %s299 = sadd.s32 %s298, 1
      %s300 = scalar_select %p297, %s298, %s299
      %p303 = pneg %p297
      %p304 = scmp.eq.s32.totalorder %s28, 2
      %p305 = por %p303, %p304
      %p306 = scmp.ne.s32.totalorder %s298, %s301
      %p307 = scmp.eq.s32.totalorder %s28, 0
      %p308 = por %p306, %p307
      %p309 = scmp.ne.s32.totalorder %s298, %s301
      %p310 = scmp.eq.s32.totalorder %s33, 2
      %p311 = por %p309, %p310
      %p312 = scmp.ne.s32.totalorder %s301, %s302
      %p313 = scmp.eq.s32.totalorder %s33, 0
      %p314 = por %p312, %p313
      %p315 = scmp.ne.s32.totalorder %s301, %s302
      %p316 = scmp.eq.s32.totalorder %s34, 2
      %p317 = por %p315, %p316
      %p319 = scmp.ne.s32.totalorder %s302, %s318
      %p320 = scmp.eq.s32.totalorder %s34, 0
      %p321 = por %p319, %p320
      %s323 = sadd.s32 %s322, 1
      %p326 = scmp.eq.s32.totalorder %s28, 2
      %p327 = scmp.ne.s32.totalorder %s322, %s324
      %p328 = scmp.eq.s32.totalorder %s28, 0
      %p329 = por %p327, %p328
      %p330 = scmp.ne.s32.totalorder %s322, %s324
      %p331 = scmp.eq.s32.totalorder %s33, 2
      %p332 = por %p330, %p331
      %p333 = scmp.ne.s32.totalorder %s324, %s325
      %p334 = scmp.eq.s32.totalorder %s33, 0
      %p335 = por %p333, %p334
      %p336 = scmp.ne.s32.totalorder %s324, %s325
      %p337 = scmp.eq.s32.totalorder %s34, 2
      %p338 = por %p336, %p337
      %p340 = scmp.ne.s32.totalorder %s325, %s339
      %p341 = scmp.eq.s32.totalorder %s34, 0
      %p342 = por %p340, %p341
      %s344 = sadd.s32 %s343, 1
      %p347 = scmp.eq.s32.totalorder %s28, 2
      %p348 = scmp.ne.s32.totalorder %s343, %s345
      %p349 = scmp.eq.s32.totalorder %s28, 0
      %p350 = por %p348, %p349
      %p351 = scmp.ne.s32.totalorder %s343, %s345
      %p352 = scmp.eq.s32.totalorder %s33, 2
      %p353 = por %p351, %p352
      %p354 = scmp.ne.s32.totalorder %s345, %s346
      %p355 = scmp.eq.s32.totalorder %s33, 0
      %p356 = por %p354, %p355
      %p357 = scmp.ne.s32.totalorder %s345, %s346
      %p358 = scmp.eq.s32.totalorder %s34, 2
      %p359 = por %p357, %p358
      %p361 = scmp.ne.s32.totalorder %s346, %s360
      %p362 = scmp.eq.s32.totalorder %s34, 0
      %p363 = por %p361, %p362
      %s365 = sadd.s32 %s364, 1
      %p368 = scmp.eq.s32.totalorder %s28, 2
      %p369 = scmp.ne.s32.totalorder %s364, %s366
      %p370 = scmp.eq.s32.totalorder %s28, 0
      %p371 = por %p369, %p370
      %p372 = scmp.ne.s32.totalorder %s364, %s366
      %p373 = scmp.eq.s32.totalorder %s33, 2
      %p374 = por %p372, %p373
      %p375 = scmp.ne.s32.totalorder %s366, %s367
      %p376 = scmp.eq.s32.totalorder %s33, 0
      %p377 = por %p375, %p376
      %p378 = scmp.ne.s32.totalorder %s366, %s367
      %p379 = scmp.eq.s32.totalorder %s34, 2
      %p380 = por %p378, %p379
      %p382 = scmp.ne.s32.totalorder %s367, %s381
      %p383 = scmp.eq.s32.totalorder %s34, 0
      %p384 = por %p382, %p383
      %s386 = sadd.s32 %s385, 1
      %p389 = scmp.eq.s32.totalorder %s28, 2
      %p390 = scmp.ne.s32.totalorder %s385, %s387
      %p391 = scmp.eq.s32.totalorder %s28, 0
      %p392 = por %p390, %p391
      %p393 = scmp.ne.s32.totalorder %s385, %s387
      %p394 = scmp.eq.s32.totalorder %s33, 2
      %p395 = por %p393, %p394
      %p396 = scmp.ne.s32.totalorder %s387, %s388
      %p397 = scmp.eq.s32.totalorder %s33, 0
      %p398 = por %p396, %p397
      %p399 = scmp.ne.s32.totalorder %s387, %s388
      %p400 = scmp.eq.s32.totalorder %s34, 2
      %p401 = por %p399, %p400
      %p403 = scmp.ne.s32.totalorder %s388, %s402
      %p404 = scmp.eq.s32.totalorder %s34, 0
      %p405 = por %p403, %p404
      %s407 = sadd.s32 %s406, 1
      %p410 = scmp.eq.s32.totalorder %s28, 2
      %p411 = scmp.ne.s32.totalorder %s406, %s408
      %p412 = scmp.eq.s32.totalorder %s28, 0
      %p413 = por %p411, %p412
      %p414 = scmp.ne.s32.totalorder %s406, %s408
      %p415 = scmp.eq.s32.totalorder %s33, 2
      %p416 = por %p414, %p415
      %p417 = scmp.ne.s32.totalorder %s408, %s409
      %p418 = scmp.eq.s32.totalorder %s33, 0
      %p419 = por %p417, %p418
      %p420 = scmp.ne.s32.totalorder %s408, %s409
      %p421 = scmp.eq.s32.totalorder %s34, 2
      %p422 = por %p420, %p421
      %p424 = scmp.ne.s32.totalorder %s409, %s423
      %p425 = scmp.eq.s32.totalorder %s34, 0
      %p426 = por %p424, %p425
      %s428 = sadd.s32 %s427, 1
      %p431 = scmp.eq.s32.totalorder %s28, 2
      %p432 = scmp.ne.s32.totalorder %s427, %s429
      %p433 = scmp.eq.s32.totalorder %s28, 0
      %p434 = por %p432, %p433
      %p435 = scmp.ne.s32.totalorder %s427, %s429
      %p436 = scmp.eq.s32.totalorder %s33, 2
      %p437 = por %p435, %p436
      %p438 = scmp.ne.s32.totalorder %s429, %s430
      %p439 = scmp.eq.s32.totalorder %s33, 0
      %p440 = por %p438, %p439
      %p441 = scmp.ne.s32.totalorder %s429, %s430
      %p442 = scmp.eq.s32.totalorder %s34, 2
      %p443 = por %p441, %p442
      %p445 = scmp.ne.s32.totalorder %s430, %s444
      %p446 = scmp.eq.s32.totalorder %s34, 0
      %p447 = por %p445, %p446
      %p448 = scmp.le.s32.totalorder 1, %s28
      %p449 = scmp.lt.s32.totalorder %s28, 4
      %p450 = pnand %p448, %p449
      %p451 = pneg %p450
      // Predicated region
      $region9: #{tpu_custom_call.1} parent=5 // pred_check
        _
      $region10: #{tpu_custom_call.1} parent=5 // pred_check_branch
        %453 = sbr.rel (%p450) target = $region12
      $region11: #{tpu_custom_call.1} parent=5 // pred_region
        %s454 = ssub.s32 %s28, 1
        // Predicated region
        $region13: #{tpu_custom_call.1} parent=11 // pred_check
          %p455 = pneg %p66
        $region14: #{tpu_custom_call.1} parent=11 // pred_check_branch
          %457 = sbr.rel (%p455) target = $region16
        $region15: #{tpu_custom_call.1} parent=11 // pred_region
          %p458 = scmp.lt.s32.totalorder %s38, 0
          %s459 = scalar_select %p458, %s38, 0
          %s460 = smul.addr %s459, 8
          %s461 = scalar_lea.vmem %s0, %s460
        $region16: #{tpu_custom_call.1} parent=11 // pred_fallthru
          _
        // Predicated region
        $region17: #{tpu_custom_call.1} parent=11 // pred_check
          %p462 = pneg %p92
        $region18: #{tpu_custom_call.1} parent=11 // pred_check_branch
          %464 = sbr.rel (%p462) target = $region20
        $region19: #{tpu_custom_call.1} parent=11 // pred_region
          %p465 = scmp.lt.s32.totalorder %s38, 0
          %s466 = scalar_select %p465, %s38, 0
          %s467 = smul.addr %s466, 8
          %s468 = scalar_lea.vmem %s1, %s467
        $region20: #{tpu_custom_call.1} parent=11 // pred_fallthru
          _
        // Predicated region
        $region21: #{tpu_custom_call.1} parent=11 // pred_check
          %p469 = pneg %p118
        $region22: #{tpu_custom_call.1} parent=11 // pred_check_branch
          %471 = sbr.rel (%p469) target = $region24
        $region23: #{tpu_custom_call.1} parent=11 // pred_region
          %p472 = scmp.lt.s32.totalorder %s38, 0
          %s473 = scalar_select %p472, %s38, 0
          %s474 = scalar_lea.vmem %s2, %s473
        $region24: #{tpu_custom_call.1} parent=11 // pred_fallthru
          _
        // Predicated region
        $region25: #{tpu_custom_call.1} parent=11 // pred_check
          %p475 = pneg %p139
        $region26: #{tpu_custom_call.1} parent=11 // pred_check_branch
          %477 = sbr.rel (%p475) target = $region28
        $region27: #{tpu_custom_call.1} parent=11 // pred_region
          _
        $region28: #{tpu_custom_call.1} parent=11 // pred_fallthru
          _
        // Predicated region
        $region29: #{tpu_custom_call.1} parent=11 // pred_check
          %p478 = pneg %p160
        $region30: #{tpu_custom_call.1} parent=11 // pred_check_branch
          %480 = sbr.rel (%p478) target = $region32
        $region31: #{tpu_custom_call.1} parent=11 // pred_region
          _
        $region32: #{tpu_custom_call.1} parent=11 // pred_fallthru
          _
        // Predicated region
        $region33: #{tpu_custom_call.1} parent=11 // pred_check
          %p481 = pneg %p181
        $region34: #{tpu_custom_call.1} parent=11 // pred_check_branch
          %483 = sbr.rel (%p481) target = $region36
        $region35: #{tpu_custom_call.1} parent=11 // pred_region
          _
        $region36: #{tpu_custom_call.1} parent=11 // pred_fallthru
          _
        // Predicated region
        $region37: #{tpu_custom_call.1} parent=11 // pred_check
          %p484 = pneg %p202
        $region38: #{tpu_custom_call.1} parent=11 // pred_check_branch
          %486 = sbr.rel (%p484) target = $region40
        $region39: #{tpu_custom_call.1} parent=11 // pred_region
          _
        $region40: #{tpu_custom_call.1} parent=11 // pred_fallthru
          _
        // Predicated region
        $region41: #{tpu_custom_call.1} parent=11 // pred_check
          %p487 = pneg %p223
        $region42: #{tpu_custom_call.1} parent=11 // pred_check_branch
          %489 = sbr.rel (%p487) target = $region44
        $region43: #{tpu_custom_call.1} parent=11 // pred_region
          _
        $region44: #{tpu_custom_call.1} parent=11 // pred_fallthru
          _
        // Predicated region
        $region45: #{tpu_custom_call.1} parent=11 // pred_check
          %p490 = pneg %p244
        $region46: #{tpu_custom_call.1} parent=11 // pred_check_branch
          %492 = sbr.rel (%p490) target = $region48
        $region47: #{tpu_custom_call.1} parent=11 // pred_region
          _
        $region48: #{tpu_custom_call.1} parent=11 // pred_fallthru
          _
        // Predicated region
        $region49: #{tpu_custom_call.1} parent=11 // pred_check
          %p493 = pneg %p265
        $region50: #{tpu_custom_call.1} parent=11 // pred_check_branch
          %495 = sbr.rel (%p493) target = $region52
        $region51: #{tpu_custom_call.1} parent=11 // pred_region
          _
        $region52: #{tpu_custom_call.1} parent=11 // pred_fallthru
          _
        // Predicated region
        $region53: #{tpu_custom_call.1} parent=11 // pred_check
          %p496 = pneg %p286
        $region54: #{tpu_custom_call.1} parent=11 // pred_check_branch
          %498 = sbr.rel (%p496) target = $region56
        $region55: #{tpu_custom_call.1} parent=11 // pred_region
          _
        $region56: #{tpu_custom_call.1} parent=11 // pred_fallthru
          _
      $region12: #{tpu_custom_call.1} parent=5 // pred_fallthru
        _
      %p499 = scmp.lt.s32.totalorder %s28, 3
      // Predicated region
      $region57: #{tpu_custom_call.1} parent=5 // pred_check
        %p500 = pneg %p499
      $region58: #{tpu_custom_call.1} parent=5 // pred_check_branch
        %502 = sbr.rel (%p500) target = $region60
      $region59: #{tpu_custom_call.1} parent=5 // pred_region
        _
      $region60: #{tpu_custom_call.1} parent=5 // pred_fallthru
        _
      %p503 = scmp.le.s32.totalorder 1, %s28
      %p504 = scmp.lt.s32.totalorder %s28, 4
      %p505 = pnand %p503, %p504
      %p506 = pneg %p505
      // Predicated region
      $region61: #{tpu_custom_call.1} parent=5 // pred_check
        _
      $region62: #{tpu_custom_call.1} parent=5 // pred_check_branch
        %508 = sbr.rel (%p505) target = $region64
      $region63: #{tpu_custom_call.1} parent=5 // pred_region
        %s509 = ssub.s32 %s28, 1
        %p510 = scmp.lt.s32.totalorder %s38, 0
        %s511 = scalar_select %p510, %s38, 0
        %s512 = smul.addr %s511, 8
        %s513 = scalar_lea.vmem %s0, %s512
        %p514 = pneg %p66
        %p515 = pneg %p63
        %p516 = scmp.lt.s32.totalorder %s38, 0
        %s517 = scalar_select %p516, %s38, 0
        %s518 = smul.addr %s517, 8
        %s519 = scalar_lea.vmem %s1, %s518
        %p520 = pneg %p92
        %p521 = pneg %p89
        %p522 = scmp.lt.s32.totalorder %s38, 0
        %s523 = scalar_select %p522, %s38, 0
        %s524 = scalar_lea.vmem %s2, %s523
        %p525 = pneg %p118
        %p526 = pneg %p115
        %p527 = pneg %p139
        %p528 = pneg %p136
        %p529 = pneg %p160
        %p530 = pneg %p157
        %p531 = pneg %p181
        %p532 = pneg %p178
        %p533 = pneg %p202
        %p534 = pneg %p199
        %p535 = pneg %p223
        %p536 = pneg %p220
        %p537 = pneg %p244
        %p538 = pneg %p241
        %p539 = pneg %p265
        %p540 = pneg %p262
        %p541 = pneg %p286
        %p542 = pneg %p283
        %p543 = pneg %p314
        %p544 = pneg %p311
        %s545 = sand.u32 %s301, 1
        %s546 = scalar_lea.sflag [#allocation19], %s545
        %s547 = sand.u32 %s301, 1
        %s548 = smul.addr %s547, 8
        %s549 = scalar_lea.vmem [#allocation18], %s548
        %p550 = pneg %p335
        %p551 = pneg %p332
        %p552 = pneg %p356
        %p553 = pneg %p353
        %p554 = pneg %p377
        %p555 = pneg %p374
        %p556 = pneg %p398
        %p557 = pneg %p395
        %p558 = pneg %p419
        %p559 = pneg %p416
        %p560 = pneg %p440
        %p561 = pneg %p437
        %p562 = scmp.lt.s32.totalorder %s38, 0
        %s563 = scalar_select %p562, %s38, 0
        %s564 = smul.addr %s563, 8
        %s565 = scalar_lea.vmem %s0, %s564
        %p566 = scmp.lt.s32.totalorder %s38, 0
        %s567 = scalar_select %p566, %s38, 0
        %s568 = smul.addr %s567, 8
        %s569 = scalar_lea.vmem %s1, %s568
        %p570 = scmp.lt.s32.totalorder %s38, 0
        %s571 = scalar_select %p570, %s38, 0
        %s572 = scalar_lea.vmem %s2, %s571
        %p573 = scmp.eq.s32.totalorder %s37, 0
        %p574 = scmp.eq.s32.totalorder %s38, 0
        %p575 = pnand %p573, %p574
        %p576 = pneg %p575
        // Predicated region
        $region65: #{tpu_custom_call.1} parent=63 // pred_check
          _
        $region66: #{tpu_custom_call.1} parent=63 // pred_check_branch
          %578 = sbr.rel (%p575) target = $region68
        $region67: #{tpu_custom_call.1} parent=63 // pred_region
          %v579 = vld [vmem:[%s3] sm:$0xff]
          %v580 = vld [vmem:[%s3 + $0x8] sm:$0xff]
          %v581 = vld [vmem:[%s3 + $0x10] sm:$0xff]
          %v582 = vld [vmem:[%s3 + $0x18] sm:$0xff]
          %vm583 = vcmask 64512
          %584 = vst.msk [vmem:[#allocation2] sm:$0xff] %vm583, %v579
          %585 = vst.msk [vmem:[#allocation2 + $0x8] sm:$0xff] %vm583, %v580
          %586 = vst.msk [vmem:[#allocation2 + $0x10] sm:$0xff] %vm583, %v581
          %587 = vst.msk [vmem:[#allocation2 + $0x18] sm:$0xff] %vm583, %v582
          %v588 = vld [vmem:[%s4] sm:$0xff]
          %v589 = vld [vmem:[%s4 + $0x8] sm:$0xff]
          %v590 = vld [vmem:[%s4 + $0x10] sm:$0xff]
          %v591 = vld [vmem:[%s4 + $0x18] sm:$0xff]
          %vm592 = vcmask 7168
          %593 = vst.msk [vmem:[#allocation3] sm:$0xff] %vm592, %v588
          %594 = vst.msk [vmem:[#allocation3 + $0x8] sm:$0xff] %vm592, %v589
          %595 = vst.msk [vmem:[#allocation3 + $0x10] sm:$0xff] %vm592, %v590
          %596 = vst.msk [vmem:[#allocation3 + $0x18] sm:$0xff] %vm592, %v591
          %v597 = vld [vmem:[%s5] sm:$0xff]
          %v598 = vld [vmem:[%s5 + $0x8] sm:$0xff]
          %v599 = vld [vmem:[%s5 + $0x10] sm:$0xff]
          %v600 = vld [vmem:[%s5 + $0x18] sm:$0xff]
          %vm601 = vcmask 261120
          %602 = vst.msk [vmem:[#allocation4] sm:$0xff] %vm601, %v597
          %603 = vst.msk [vmem:[#allocation4 + $0x8] sm:$0xff] %vm601, %v598
          %604 = vst.msk [vmem:[#allocation4 + $0x10] sm:$0xff] %vm601, %v599
          %605 = vst.msk [vmem:[#allocation4 + $0x18] sm:$0xff] %vm601, %v600
          %v606 = vld [vmem:[%s6] sm:$0xff]
          %v607 = vld [vmem:[%s6 + $0x8] sm:$0xff]
          %v608 = vld [vmem:[%s6 + $0x10] sm:$0xff]
          %v609 = vld [vmem:[%s6 + $0x18] sm:$0xff]
          %610 = vst.msk [vmem:[#allocation5] sm:$0xff] %vm601, %v606
          %611 = vst.msk [vmem:[#allocation5 + $0x8] sm:$0xff] %vm601, %v607
          %612 = vst.msk [vmem:[#allocation5 + $0x10] sm:$0xff] %vm601, %v608
          %613 = vst.msk [vmem:[#allocation5 + $0x18] sm:$0xff] %vm601, %v609
          %v614 = vld [vmem:[%s7] sm:$0xff]
          %v615 = vld [vmem:[%s7 + $0x8] sm:$0xff]
          %v616 = vld [vmem:[%s7 + $0x10] sm:$0xff]
          %v617 = vld [vmem:[%s7 + $0x18] sm:$0xff]
          %618 = vst.msk [vmem:[#allocation6] sm:$0xff] %vm592, %v614
          %619 = vst.msk [vmem:[#allocation6 + $0x8] sm:$0xff] %vm592, %v615
          %620 = vst.msk [vmem:[#allocation6 + $0x10] sm:$0xff] %vm592, %v616
          %621 = vst.msk [vmem:[#allocation6 + $0x18] sm:$0xff] %vm592, %v617
          %v622 = vld [vmem:[%s8] sm:$0xff]
          %623 = vst.msk [vmem:[#allocation7] sm:$0xff] %vm601, %v622
          %v624 = vld [vmem:[%s9] sm:$0xff]
          %v625 = vld [vmem:[%s9 + $0x8] sm:$0xff]
          %v626 = vld [vmem:[%s9 + $0x10] sm:$0xff]
          %v627 = vld [vmem:[%s9 + $0x18] sm:$0xff]
          %628 = vst.msk [vmem:[#allocation8] sm:$0xff] %vm583, %v624
          %629 = vst.msk [vmem:[#allocation8 + $0x8] sm:$0xff] %vm583, %v625
          %630 = vst.msk [vmem:[#allocation8 + $0x10] sm:$0xff] %vm583, %v626
          %631 = vst.msk [vmem:[#allocation8 + $0x18] sm:$0xff] %vm583, %v627
          %v632 = vld [vmem:[%s10] sm:$0xff]
          %633 = vst.msk [vmem:[#allocation9] sm:$0xff] %vm592, %v632
        $region68: #{tpu_custom_call.1} parent=63 // pred_fallthru
          _
        // Predicated region
        $region69: #{tpu_custom_call.1} parent=63 // pred_check
          %p634 = pneg %p574
        $region70: #{tpu_custom_call.1} parent=63 // pred_check_branch
          %636 = sbr.rel (%p634) target = $region72
        $region71: #{tpu_custom_call.1} parent=63 // pred_region
          %vm637 = vcmask 64512
          %638 = vst.msk [vmem:[#allocation10] sm:$0xff] %vm637, 0.0
          %639 = vst.msk [vmem:[#allocation10 + $0x8] sm:$0xff] %vm637, 0.0
          %640 = vst.msk [vmem:[#allocation10 + $0x10] sm:$0xff] %vm637, 0.0
          %641 = vst.msk [vmem:[#allocation10 + $0x18] sm:$0xff] %vm637, 0.0
          %vm642 = vcmask 7168
          %643 = vst.msk [vmem:[#allocation11] sm:$0xff] %vm642, 0.0
          %644 = vst.msk [vmem:[#allocation11 + $0x8] sm:$0xff] %vm642, 0.0
          %645 = vst.msk [vmem:[#allocation11 + $0x10] sm:$0xff] %vm642, 0.0
          %646 = vst.msk [vmem:[#allocation11 + $0x18] sm:$0xff] %vm642, 0.0
          %vm647 = vcmask 261120
          %648 = vst.msk [vmem:[#allocation12] sm:$0xff] %vm647, 0.0
          %649 = vst.msk [vmem:[#allocation12 + $0x8] sm:$0xff] %vm647, 0.0
          %650 = vst.msk [vmem:[#allocation12 + $0x10] sm:$0xff] %vm647, 0.0
          %651 = vst.msk [vmem:[#allocation12 + $0x18] sm:$0xff] %vm647, 0.0
          %652 = vst.msk [vmem:[#allocation13] sm:$0xff] %vm647, 0.0
          %653 = vst.msk [vmem:[#allocation13 + $0x8] sm:$0xff] %vm647, 0.0
          %654 = vst.msk [vmem:[#allocation13 + $0x10] sm:$0xff] %vm647, 0.0
          %655 = vst.msk [vmem:[#allocation13 + $0x18] sm:$0xff] %vm647, 0.0
          %656 = vst.msk [vmem:[#allocation14] sm:$0xff] %vm642, 0.0
          %657 = vst.msk [vmem:[#allocation14 + $0x8] sm:$0xff] %vm642, 0.0
          %658 = vst.msk [vmem:[#allocation14 + $0x10] sm:$0xff] %vm642, 0.0
          %659 = vst.msk [vmem:[#allocation14 + $0x18] sm:$0xff] %vm642, 0.0
          %660 = vst.msk [vmem:[#allocation15] sm:$0xff] %vm647, 0.0
          %661 = vst.msk [vmem:[#allocation16] sm:$0xff] %vm637, 0.0
          %662 = vst.msk [vmem:[#allocation16 + $0x8] sm:$0xff] %vm637, 0.0
          %663 = vst.msk [vmem:[#allocation16 + $0x10] sm:$0xff] %vm637, 0.0
          %664 = vst.msk [vmem:[#allocation16 + $0x18] sm:$0xff] %vm637, 0.0
          %665 = vst.msk [vmem:[#allocation17] sm:$0xff] %vm642, 0.0
        $region72: #{tpu_custom_call.1} parent=63 // pred_fallthru
          _
        %v666 = vld [vmem:[%s565] sm:$0xff]
        %v667 = vld [vmem:[%s569] sm:$0xff]
        %v668 = vld [vmem:[%s572] sm:$0x1]
        %v669 = vld [vmem:[#allocation2] sm:$0xff]
        %v670 = vld [vmem:[#allocation2 + $0x8] sm:$0xff]
        %v671 = vld [vmem:[#allocation2 + $0x10] sm:$0xff]
        %v672 = vld [vmem:[#allocation2 + $0x18] sm:$0xff]
        %v673 = vld [vmem:[#allocation3] sm:$0xff]
        %v674 = vld [vmem:[#allocation3 + $0x8] sm:$0xff]
        %v675 = vld [vmem:[#allocation3 + $0x10] sm:$0xff]
        %v676 = vld [vmem:[#allocation3 + $0x18] sm:$0xff]
        %v677 = vld [vmem:[#allocation4] sm:$0xff]
        %v678 = vld [vmem:[#allocation4 + $0x8] sm:$0xff]
        %v679 = vld [vmem:[#allocation4 + $0x10] sm:$0xff]
        %v680 = vld [vmem:[#allocation4 + $0x18] sm:$0xff]
        %v681 = vld [vmem:[#allocation5] sm:$0xff]
        %v682 = vld [vmem:[#allocation5 + $0x8] sm:$0xff]
        %v683 = vld [vmem:[#allocation5 + $0x10] sm:$0xff]
        %v684 = vld [vmem:[#allocation5 + $0x18] sm:$0xff]
        %v685 = vld [vmem:[#allocation6] sm:$0xff]
        %v686 = vld [vmem:[#allocation6 + $0x8] sm:$0xff]
        %v687 = vld [vmem:[#allocation6 + $0x10] sm:$0xff]
        %v688 = vld [vmem:[#allocation6 + $0x18] sm:$0xff]
        %v689 = vld [vmem:[#allocation7] sm:$0xff]
        %v690 = vld [vmem:[#allocation8] sm:$0xff]
        %v691 = vld [vmem:[#allocation8 + $0x8] sm:$0xff]
        %v692 = vld [vmem:[#allocation8 + $0x10] sm:$0xff]
        %v693 = vld [vmem:[#allocation8 + $0x18] sm:$0xff]
        %v694 = vld [vmem:[#allocation9] sm:$0xff]
        %696 = vset.pattern.permute.xlu0 0
        %697 = vperm.xlu0 %696, %v673
        %v698 = vpop.permute.xlu0 %697
        %701 = vset.pattern.permute.xlu0 0
        %702 = vperm.xlu0 %701, %v674
        %v703 = vpop.permute.xlu0 %702
        %706 = vset.pattern.permute.xlu0 0
        %707 = vperm.xlu0 %706, %v675
        %v708 = vpop.permute.xlu0 %707
        %711 = vset.pattern.permute.xlu0 0
        %712 = vperm.xlu0 %711, %v676
        %v713 = vpop.permute.xlu0 %712
        %vm715 = vcmask 64512
        %v717 = vsel %vm715, %v669, 0
        %v720 = vsel %vm715, %v670, 0
        %v723 = vsel %vm715, %v671, 0
        %v726 = vsel %vm715, %v672, 0
        %728 = vmatprep.subr.mxu0 0.0
        %729 = vmatpush1.msra.mxu0 %v666
        %730 = vmatprep.subr.mxu0 0.0
        %731 = vmatpush1.msra.mxu0 0.0
        %732 = vmatprep.subr.mxu0 0.0
        %733 = vmatpush1.msra.mxu0 0.0
        %734 = vmatprep.subr.mxu0 0.0
        %735 = vmatpush1.msra.mxu0 0.0
        %736 = vmatprep.subr.mxu0 0.0
        %737 = vmatpush1.msra.mxu0 0.0
        %738 = vmatprep.subr.mxu0 0.0
        %739 = vmatpush1.msra.mxu0 0.0
        %740 = vmatprep.subr.mxu0 0.0
        %741 = vmatpush1.msra.mxu0 0.0
        %742 = vmatprep.subr.mxu0 0.0
        %743 = vmatpush1.msra.mxu0 0.0
        %744 = vmatprep.subr.mxu0 0.0
        %745 = vmatpush1.msra.mxu0 0.0
        %746 = vmatprep.subr.mxu0 0.0
        %747 = vmatpush1.msra.mxu0 0.0
        %748 = vmatprep.subr.mxu0 0.0
        %749 = vmatpush1.msra.mxu0 0.0
        %750 = vmatprep.subr.mxu0 0.0
        %751 = vmatpush1.msra.mxu0 0.0
        %752 = vmatprep.subr.mxu0 0.0
        %753 = vmatpush1.msra.mxu0 0.0
        %754 = vmatprep.subr.mxu0 0.0
        %755 = vmatpush1.msra.mxu0 0.0
        %756 = vmatprep.subr.mxu0 0.0
        %757 = vmatpush1.msra.mxu0 0.0
        %758 = vmatprep.subr.mxu0 0.0
        %759 = vmatpush1.msra.mxu0 0.0
        %760 = vmatprep.subr.mxu0 0.0
        %761 = vmatpush1.msra.mxu0 0.0
        %762 = vmatprep.subr.mxu0 0.0
        %763 = vmatpush1.msra.mxu0 0.0
        %764 = vmatprep.subr.mxu0 0.0
        %765 = vmatpush1.msra.mxu0 0.0
        %766 = vmatprep.subr.mxu0 0.0
        %767 = vmatpush1.msra.mxu0 0.0
        %768 = vmatprep.subr.mxu0 0.0
        %769 = vmatpush1.msra.mxu0 0.0
        %770 = vmatprep.subr.mxu0 0.0
        %771 = vmatpush1.msra.mxu0 0.0
        %772 = vmatprep.subr.mxu0 0.0
        %773 = vmatpush1.msra.mxu0 0.0
        %774 = vmatprep.subr.mxu0 0.0
        %775 = vmatpush1.msra.mxu0 0.0
        %776 = vmatprep.subr.mxu0 0.0
        %777 = vmatpush1.msra.mxu0 0.0
        %778 = vmatprep.subr.mxu0 0.0
        %779 = vmatpush1.msra.mxu0 0.0
        %780 = vmatprep.subr.mxu0 0.0
        %781 = vmatpush1.msra.mxu0 0.0
        %782 = vmatprep.subr.mxu0 0.0
        %783 = vmatpush1.msra.mxu0 0.0
        %784 = vmatprep.subr.mxu0 0.0
        %785 = vmatpush1.msra.mxu0 0.0
        %786 = vmatprep.subr.mxu0 0.0
        %787 = vmatpush1.msra.mxu0 0.0
        %788 = vmatprep.subr.mxu0 0.0
        %789 = vmatpush1.msra.mxu0 0.0
        %790 = vmatprep.subr.mxu0 0.0
        %791 = vmatpush1.msra.mxu0 0.0
        %792 = vmatprep.mubr.f32.mxu0 0.0
        %793 = vmatmul.mubr.f32.gmra.mrb[0].mxu0 %v717
        %v794 = vpop.f32.mrb[0].mxu0
        %v795 = vadd.f32 %v698, %v794
        %v796 = vpop.f32.mrb[0].mxu0
        %797 = vmatprep.mubr.f32.mxu0 0.0
        %798 = vmatmul.mubr.f32.gmra.mrb[0].mxu0 %v720
        %v799 = vpop.f32.mrb[0].mxu0
        %v800 = vadd.f32 %v703, %v799
        %v801 = vpop.f32.mrb[0].mxu0
        %802 = vmatprep.mubr.f32.mxu0 0.0
        %803 = vmatmul.mubr.f32.gmra.mrb[0].mxu0 %v723
        %v804 = vpop.f32.mrb[0].mxu0
        %v805 = vadd.f32 %v708, %v804
        %v806 = vpop.f32.mrb[0].mxu0
        %807 = vmatprep.mubr.f32.mxu0 0.0
        %808 = vmatmul.mubr.f32.gmra.mrb[0].mxu0 %v726
        %v809 = vpop.f32.mrb[0].mxu0
        %v810 = vadd.f32 %v713, %v809
        %v811 = vpop.f32.mrb[0].mxu0
        %812 = vdwg.mxu0
        %v813 = vmax.f32 %v795, 0.0
        %v814 = vmax.f32 %v800, 0.0
        %v815 = vmax.f32 %v805, 0.0
        %v816 = vmax.f32 %v810, 0.0
        %818 = vset.pattern.permute.xlu0 0
        %819 = vperm.xlu0 %818, %v685
        %v820 = vpop.permute.xlu0 %819
        %823 = vset.pattern.permute.xlu0 0
        %824 = vperm.xlu0 %823, %v686
        %v825 = vpop.permute.xlu0 %824
        %828 = vset.pattern.permute.xlu0 0
        %829 = vperm.xlu0 %828, %v687
        %v830 = vpop.permute.xlu0 %829
        %833 = vset.pattern.permute.xlu0 0
        %834 = vperm.xlu0 %833, %v688
        %v835 = vpop.permute.xlu0 %834
        %vm837 = vcmask 261120
        %v839 = vsel %vm837, %v677, 0
        %v842 = vsel %vm837, %v678, 0
        %v845 = vsel %vm837, %v679, 0
        %v848 = vsel %vm837, %v680, 0
        %850 = vmatprep.subr.mxu0 0.0
        %851 = vmatpush1.msra.mxu0 %v813
        %852 = vmatprep.subr.mxu0 0.0
        %853 = vmatpush1.msra.mxu0 %v814
        %854 = vmatprep.subr.mxu0 0.0
        %855 = vmatpush1.msra.mxu0 %v815
        %856 = vmatprep.subr.mxu0 0.0
        %857 = vmatpush1.msra.mxu0 %v816
        %858 = vmatprep.subr.mxu0 0.0
        %859 = vmatpush1.msra.mxu0 0.0
        %860 = vmatprep.subr.mxu0 0.0
        %861 = vmatpush1.msra.mxu0 0.0
        %862 = vmatprep.subr.mxu0 0.0
        %863 = vmatpush1.msra.mxu0 0.0
        %864 = vmatprep.subr.mxu0 0.0
        %865 = vmatpush1.msra.mxu0 0.0
        %866 = vmatprep.subr.mxu0 0.0
        %867 = vmatpush1.msra.mxu0 0.0
        %868 = vmatprep.subr.mxu0 0.0
        %869 = vmatpush1.msra.mxu0 0.0
        %870 = vmatprep.subr.mxu0 0.0
        %871 = vmatpush1.msra.mxu0 0.0
        %872 = vmatprep.subr.mxu0 0.0
        %873 = vmatpush1.msra.mxu0 0.0
        %874 = vmatprep.subr.mxu0 0.0
        %875 = vmatpush1.msra.mxu0 0.0
        %876 = vmatprep.subr.mxu0 0.0
        %877 = vmatpush1.msra.mxu0 0.0
        %878 = vmatprep.subr.mxu0 0.0
        %879 = vmatpush1.msra.mxu0 0.0
        %880 = vmatprep.subr.mxu0 0.0
        %881 = vmatpush1.msra.mxu0 0.0
        %882 = vmatprep.subr.mxu0 0.0
        %883 = vmatpush1.msra.mxu0 0.0
        %884 = vmatprep.subr.mxu0 0.0
        %885 = vmatpush1.msra.mxu0 0.0
        %886 = vmatprep.subr.mxu0 0.0
        %887 = vmatpush1.msra.mxu0 0.0
        %888 = vmatprep.subr.mxu0 0.0
        %889 = vmatpush1.msra.mxu0 0.0
        %890 = vmatprep.subr.mxu0 0.0
        %891 = vmatpush1.msra.mxu0 0.0
        %892 = vmatprep.subr.mxu0 0.0
        %893 = vmatpush1.msra.mxu0 0.0
        %894 = vmatprep.subr.mxu0 0.0
        %895 = vmatpush1.msra.mxu0 0.0
        %896 = vmatprep.subr.mxu0 0.0
        %897 = vmatpush1.msra.mxu0 0.0
        %898 = vmatprep.subr.mxu0 0.0
        %899 = vmatpush1.msra.mxu0 0.0
        %900 = vmatprep.subr.mxu0 0.0
        %901 = vmatpush1.msra.mxu0 0.0
        %902 = vmatprep.subr.mxu0 0.0
        %903 = vmatpush1.msra.mxu0 0.0
        %904 = vmatprep.subr.mxu0 0.0
        %905 = vmatpush1.msra.mxu0 0.0
        %906 = vmatprep.subr.mxu0 0.0
        %907 = vmatpush1.msra.mxu0 0.0
        %908 = vmatprep.subr.mxu0 0.0
        %909 = vmatpush1.msra.mxu0 0.0
        %910 = vmatprep.subr.mxu0 0.0
        %911 = vmatpush1.msra.mxu0 0.0
        %912 = vmatprep.subr.mxu0 0.0
        %913 = vmatpush1.msra.mxu0 0.0
        %914 = vmatprep.mubr.f32.mxu0 0.0
        %915 = vmatmul.mubr.f32.gmra.mrb[0].mxu0 %v839
        %v916 = vpop.f32.mrb[0].mxu0
        %v917 = vadd.f32 %v820, %v916
        %v918 = vpop.f32.mrb[0].mxu0
        %919 = vmatprep.mubr.f32.mxu0 0.0
        %920 = vmatmul.mubr.f32.gmra.mrb[0].mxu0 %v842
        %v921 = vpop.f32.mrb[0].mxu0
        %v922 = vadd.f32 %v825, %v921
        %v923 = vpop.f32.mrb[0].mxu0
        %924 = vmatprep.mubr.f32.mxu0 0.0
        %925 = vmatmul.mubr.f32.gmra.mrb[0].mxu0 %v845
        %v926 = vpop.f32.mrb[0].mxu0
        %v927 = vadd.f32 %v830, %v926
        %v928 = vpop.f32.mrb[0].mxu0
        %929 = vmatprep.mubr.f32.mxu0 0.0
        %930 = vmatmul.mubr.f32.gmra.mrb[0].mxu0 %v848
        %v931 = vpop.f32.mrb[0].mxu0
        %v932 = vadd.f32 %v835, %v931
        %v933 = vpop.f32.mrb[0].mxu0
        %934 = vdwg.mxu0
        %v935 = vmax.f32 %v917, 0.0
        %v936 = vmax.f32 %v922, 0.0
        %v937 = vmax.f32 %v927, 0.0
        %v938 = vmax.f32 %v932, 0.0
        %940 = vset.pattern.permute.xlu0 0
        %941 = vperm.xlu0 %940, %v694
        %v942 = vpop.permute.xlu0 %941
        %v945 = vsel %vm837, %v689, 0
        %947 = vmatprep.subr.mxu0 0.0
        %948 = vmatpush1.msra.mxu0 %v935
        %949 = vmatprep.subr.mxu0 0.0
        %950 = vmatpush1.msra.mxu0 %v936
        %951 = vmatprep.subr.mxu0 0.0
        %952 = vmatpush1.msra.mxu0 %v937
        %953 = vmatprep.subr.mxu0 0.0
        %954 = vmatpush1.msra.mxu0 %v938
        %955 = vmatprep.subr.mxu0 0.0
        %956 = vmatpush1.msra.mxu0 0.0
        %957 = vmatprep.subr.mxu0 0.0
        %958 = vmatpush1.msra.mxu0 0.0
        %959 = vmatprep.subr.mxu0 0.0
        %960 = vmatpush1.msra.mxu0 0.0
        %961 = vmatprep.subr.mxu0 0.0
        %962 = vmatpush1.msra.mxu0 0.0
        %963 = vmatprep.subr.mxu0 0.0
        %964 = vmatpush1.msra.mxu0 0.0
        %965 = vmatprep.subr.mxu0 0.0
        %966 = vmatpush1.msra.mxu0 0.0
        %967 = vmatprep.subr.mxu0 0.0
        %968 = vmatpush1.msra.mxu0 0.0
        %969 = vmatprep.subr.mxu0 0.0
        %970 = vmatpush1.msra.mxu0 0.0
        %971 = vmatprep.subr.mxu0 0.0
        %972 = vmatpush1.msra.mxu0 0.0
        %973 = vmatprep.subr.mxu0 0.0
        %974 = vmatpush1.msra.mxu0 0.0
        %975 = vmatprep.subr.mxu0 0.0
        %976 = vmatpush1.msra.mxu0 0.0
        %977 = vmatprep.subr.mxu0 0.0
        %978 = vmatpush1.msra.mxu0 0.0
        %979 = vmatprep.subr.mxu0 0.0
        %980 = vmatpush1.msra.mxu0 0.0
        %981 = vmatprep.subr.mxu0 0.0
        %982 = vmatpush1.msra.mxu0 0.0
        %983 = vmatprep.subr.mxu0 0.0
        %984 = vmatpush1.msra.mxu0 0.0
        %985 = vmatprep.subr.mxu0 0.0
        %986 = vmatpush1.msra.mxu0 0.0
        %987 = vmatprep.subr.mxu0 0.0
        %988 = vmatpush1.msra.mxu0 0.0
        %989 = vmatprep.subr.mxu0 0.0
        %990 = vmatpush1.msra.mxu0 0.0
        %991 = vmatprep.subr.mxu0 0.0
        %992 = vmatpush1.msra.mxu0 0.0
        %993 = vmatprep.subr.mxu0 0.0
        %994 = vmatpush1.msra.mxu0 0.0
        %995 = vmatprep.subr.mxu0 0.0
        %996 = vmatpush1.msra.mxu0 0.0
        %997 = vmatprep.subr.mxu0 0.0
        %998 = vmatpush1.msra.mxu0 0.0
        %999 = vmatprep.subr.mxu0 0.0
        %1000 = vmatpush1.msra.mxu0 0.0
        %1001 = vmatprep.subr.mxu0 0.0
        %1002 = vmatpush1.msra.mxu0 0.0
        %1003 = vmatprep.subr.mxu0 0.0
        %1004 = vmatpush1.msra.mxu0 0.0
        %1005 = vmatprep.subr.mxu0 0.0
        %1006 = vmatpush1.msra.mxu0 0.0
        %1007 = vmatprep.subr.mxu0 0.0
        %1008 = vmatpush1.msra.mxu0 0.0
        %1009 = vmatprep.subr.mxu0 0.0
        %1010 = vmatpush1.msra.mxu0 0.0
        %1011 = vmatprep.mubr.f32.mxu0 0.0
        %1012 = vmatmul.mubr.f32.gmra.mrb[0].mxu0 %v945
        %v1013 = vpop.f32.mrb[0].mxu0
        %v1014 = vadd.f32 %v942, %v1013
        %v1015 = vpop.f32.mrb[0].mxu0
        %1016 = vdwg.mxu0
        %1017 = vst [vmem:[%s549] sm:$0xff] %v1014
        %v1018 = vsub.f32 %v1014, %v667
        %v1020 = vlaneseq
        %v1021 = vshrl.u32 %v1020, 7
        %v1022 = vsub.s32 0, %v1021
        %v1023 = vrot.slane %v668, %v1022
        %v1025 = vmul.f32 %v1023, %v1018
        %v1026 = vld [vmem:[#allocation15] sm:$0xff]
        %1027 = vmatprep.subr.mxu0 0.0
        %1028 = vmatpush1.xpose.msra.mxu0 %v935
        %1029 = vmatprep.subr.mxu0 0.0
        %1030 = vmatpush1.xpose.msra.mxu0 %v936
        %1031 = vmatprep.subr.mxu0 0.0
        %1032 = vmatpush1.xpose.msra.mxu0 %v937
        %1033 = vmatprep.subr.mxu0 0.0
        %1034 = vmatpush1.xpose.msra.mxu0 %v938
        %1035 = vmatprep.subr.mxu0 0.0
        %1036 = vmatpush1.xpose.msra.mxu0 0.0
        %1037 = vmatprep.subr.mxu0 0.0
        %1038 = vmatpush1.xpose.msra.mxu0 0.0
        %1039 = vmatprep.subr.mxu0 0.0
        %1040 = vmatpush1.xpose.msra.mxu0 0.0
        %1041 = vmatprep.subr.mxu0 0.0
        %1042 = vmatpush1.xpose.msra.mxu0 0.0
        %1043 = vmatprep.subr.mxu0 0.0
        %1044 = vmatpush1.xpose.msra.mxu0 0.0
        %1045 = vmatprep.subr.mxu0 0.0
        %1046 = vmatpush1.xpose.msra.mxu0 0.0
        %1047 = vmatprep.subr.mxu0 0.0
        %1048 = vmatpush1.xpose.msra.mxu0 0.0
        %1049 = vmatprep.subr.mxu0 0.0
        %1050 = vmatpush1.xpose.msra.mxu0 0.0
        %1051 = vmatprep.subr.mxu0 0.0
        %1052 = vmatpush1.xpose.msra.mxu0 0.0
        %1053 = vmatprep.subr.mxu0 0.0
        %1054 = vmatpush1.xpose.msra.mxu0 0.0
        %1055 = vmatprep.subr.mxu0 0.0
        %1056 = vmatpush1.xpose.msra.mxu0 0.0
        %1057 = vmatprep.subr.mxu0 0.0
        %1058 = vmatpush1.xpose.msra.mxu0 0.0
        %1059 = vmatprep.subr.mxu0 0.0
        %1060 = vmatpush1.xpose.msra.mxu0 0.0
        %1061 = vmatprep.subr.mxu0 0.0
        %1062 = vmatpush1.xpose.msra.mxu0 0.0
        %1063 = vmatprep.subr.mxu0 0.0
        %1064 = vmatpush1.xpose.msra.mxu0 0.0
        %1065 = vmatprep.subr.mxu0 0.0
        %1066 = vmatpush1.xpose.msra.mxu0 0.0
        %1067 = vmatprep.subr.mxu0 0.0
        %1068 = vmatpush1.xpose.msra.mxu0 0.0
        %1069 = vmatprep.subr.mxu0 0.0
        %1070 = vmatpush1.xpose.msra.mxu0 0.0
        %1071 = vmatprep.subr.mxu0 0.0
        %1072 = vmatpush1.xpose.msra.mxu0 0.0
        %1073 = vmatprep.subr.mxu0 0.0
        %1074 = vmatpush1.xpose.msra.mxu0 0.0
        %1075 = vmatprep.subr.mxu0 0.0
        %1076 = vmatpush1.xpose.msra.mxu0 0.0
        %1077 = vmatprep.subr.mxu0 0.0
        %1078 = vmatpush1.xpose.msra.mxu0 0.0
        %1079 = vmatprep.subr.mxu0 0.0
        %1080 = vmatpush1.xpose.msra.mxu0 0.0
        %1081 = vmatprep.subr.mxu0 0.0
        %1082 = vmatpush1.xpose.msra.mxu0 0.0
        %1083 = vmatprep.subr.mxu0 0.0
        %1084 = vmatpush1.xpose.msra.mxu0 0.0
        %1085 = vmatprep.subr.mxu0 0.0
        %1086 = vmatpush1.xpose.msra.mxu0 0.0
        %1087 = vmatprep.subr.mxu0 0.0
        %1088 = vmatpush1.xpose.msra.mxu0 0.0
        %1089 = vmatprep.subr.mxu0 0.0
        %1090 = vmatpush1.xpose.msra.mxu0 0.0
        %1091 = vmatprep.mubr.f32.mxu0 0.0
        %1092 = vmatmul.mubr.f32.gmra.mrb[0].mxu0 %v1025
        %v1093 = vpop.f32.mrb[0].mxu0
        %v1094 = vadd.f32 0.0, %v1093
        %v1095 = vpop.f32.mrb[0].mxu0
        %1096 = vdwg.mxu0
        %v1097 = vadd.f32 %v1026, %v1094
        %1098 = vst.msk [vmem:[#allocation15] sm:$0xff] %vm837, %v1097
        %v1099 = vld [vmem:[#allocation16] sm:$0xff]
        %v1100 = vld [vmem:[#allocation16 + $0x8] sm:$0xff]
        %v1101 = vld [vmem:[#allocation16 + $0x10] sm:$0xff]
        %v1102 = vld [vmem:[#allocation16 + $0x18] sm:$0xff]
        %1103 = vmatprep.subr.mxu0 0.0
        %1104 = vmatpush1.xpose.msra.mxu0 %v1025
        %1105 = vmatprep.subr.mxu0 0.0
        %1106 = vmatpush1.xpose.msra.mxu0 0.0
        %1107 = vmatprep.subr.mxu0 0.0
        %1108 = vmatpush1.xpose.msra.mxu0 0.0
        %1109 = vmatprep.subr.mxu0 0.0
        %1110 = vmatpush1.xpose.msra.mxu0 0.0
        %1111 = vmatprep.subr.mxu0 0.0
        %1112 = vmatpush1.xpose.msra.mxu0 0.0
        %1113 = vmatprep.subr.mxu0 0.0
        %1114 = vmatpush1.xpose.msra.mxu0 0.0
        %1115 = vmatprep.subr.mxu0 0.0
        %1116 = vmatpush1.xpose.msra.mxu0 0.0
        %1117 = vmatprep.subr.mxu0 0.0
        %1118 = vmatpush1.xpose.msra.mxu0 0.0
        %1119 = vmatprep.subr.mxu0 0.0
        %1120 = vmatpush1.xpose.msra.mxu0 0.0
        %1121 = vmatprep.subr.mxu0 0.0
        %1122 = vmatpush1.xpose.msra.mxu0 0.0
        %1123 = vmatprep.subr.mxu0 0.0
        %1124 = vmatpush1.xpose.msra.mxu0 0.0
        %1125 = vmatprep.subr.mxu0 0.0
        %1126 = vmatpush1.xpose.msra.mxu0 0.0
        %1127 = vmatprep.subr.mxu0 0.0
        %1128 = vmatpush1.xpose.msra.mxu0 0.0
        %1129 = vmatprep.subr.mxu0 0.0
        %1130 = vmatpush1.xpose.msra.mxu0 0.0
        %1131 = vmatprep.subr.mxu0 0.0
        %1132 = vmatpush1.xpose.msra.mxu0 0.0
        %1133 = vmatprep.subr.mxu0 0.0
        %1134 = vmatpush1.xpose.msra.mxu0 0.0
        %1135 = vmatprep.subr.mxu0 0.0
        %1136 = vmatpush1.xpose.msra.mxu0 0.0
        %1137 = vmatprep.subr.mxu0 0.0
        %1138 = vmatpush1.xpose.msra.mxu0 0.0
        %1139 = vmatprep.subr.mxu0 0.0
        %1140 = vmatpush1.xpose.msra.mxu0 0.0
        %1141 = vmatprep.subr.mxu0 0.0
        %1142 = vmatpush1.xpose.msra.mxu0 0.0
        %1143 = vmatprep.subr.mxu0 0.0
        %1144 = vmatpush1.xpose.msra.mxu0 0.0
        %1145 = vmatprep.subr.mxu0 0.0
        %1146 = vmatpush1.xpose.msra.mxu0 0.0
        %1147 = vmatprep.subr.mxu0 0.0
        %1148 = vmatpush1.xpose.msra.mxu0 0.0
        %1149 = vmatprep.subr.mxu0 0.0
        %1150 = vmatpush1.xpose.msra.mxu0 0.0
        %1151 = vmatprep.subr.mxu0 0.0
        %1152 = vmatpush1.xpose.msra.mxu0 0.0
        %1153 = vmatprep.subr.mxu0 0.0
        %1154 = vmatpush1.xpose.msra.mxu0 0.0
        %1155 = vmatprep.subr.mxu0 0.0
        %1156 = vmatpush1.xpose.msra.mxu0 0.0
        %1157 = vmatprep.subr.mxu0 0.0
        %1158 = vmatpush1.xpose.msra.mxu0 0.0
        %1159 = vmatprep.subr.mxu0 0.0
        %1160 = vmatpush1.xpose.msra.mxu0 0.0
        %1161 = vmatprep.subr.mxu0 0.0
        %1162 = vmatpush1.xpose.msra.mxu0 0.0
        %1163 = vmatprep.subr.mxu0 0.0
        %1164 = vmatpush1.xpose.msra.mxu0 0.0
        %1165 = vmatprep.subr.mxu0 0.0
        %1166 = vmatpush1.xpose.msra.mxu0 0.0
        %1167 = vmatprep.mubr.f32.mxu0 0.0
        %1168 = vmatmul.mubr.f32.gmra.mrb[0].mxu0 %v935
        %v1169 = vpop.f32.mrb[0].mxu0
        %v1170 = vadd.f32 0.0, %v1169
        %v1171 = vpop.f32.mrb[0].mxu0
        %1172 = vmatprep.mubr.f32.mxu0 0.0
        %1173 = vmatmul.mubr.f32.gmra.mrb[0].mxu0 %v936
        %v1174 = vpop.f32.mrb[0].mxu0
        %v1175 = vadd.f32 0.0, %v1174
        %v1176 = vpop.f32.mrb[0].mxu0
        %1177 = vmatprep.mubr.f32.mxu0 0.0
        %1178 = vmatmul.mubr.f32.gmra.mrb[0].mxu0 %v937
        %v1179 = vpop.f32.mrb[0].mxu0
        %v1180 = vadd.f32 0.0, %v1179
        %v1181 = vpop.f32.mrb[0].mxu0
        %1182 = vmatprep.mubr.f32.mxu0 0.0
        %1183 = vmatmul.mubr.f32.gmra.mrb[0].mxu0 %v938
        %v1184 = vpop.f32.mrb[0].mxu0
        %v1185 = vadd.f32 0.0, %v1184
        %v1186 = vpop.f32.mrb[0].mxu0
        %1187 = vdwg.mxu0
        %v1188 = vadd.f32 %v1099, %v1170
        %v1189 = vadd.f32 %v1100, %v1175
        %v1190 = vadd.f32 %v1101, %v1180
        %v1191 = vadd.f32 %v1102, %v1185
        %1192 = vst.msk [vmem:[#allocation16] sm:$0xff] %vm715, %v1188
        %1193 = vst.msk [vmem:[#allocation16 + $0x8] sm:$0xff] %vm715, %v1189
        %1194 = vst.msk [vmem:[#allocation16 + $0x10] sm:$0xff] %vm715, %v1190
        %1195 = vst.msk [vmem:[#allocation16 + $0x18] sm:$0xff] %vm715, %v1191
        %v1196 = vld [vmem:[#allocation17] sm:$0xff]
        %1197 = vadd.xlane.f32.xlu0 %v1025
        %v1198 = vpop.xlane.xlu0 %1197
        %v1199 = vadd.f32 %v1196, %v1198
        %vm1200 = vcmask 7168
        %1201 = vst.msk [vmem:[#allocation17] sm:$0xff] %vm1200, %v1199
        %v1203 = vsel %vm715, %v690, 0
        %v1206 = vsel %vm715, %v691, 0
        %v1209 = vsel %vm715, %v692, 0
        %v1212 = vsel %vm715, %v693, 0
        %1214 = vmatprep.subr.mxu0 0.0
        %1215 = vmatpush1.msra.mxu0 %v1025
        %1216 = vmatprep.subr.mxu0 0.0
        %1217 = vmatpush1.msra.mxu0 0.0
        %1218 = vmatprep.subr.mxu0 0.0
        %1219 = vmatpush1.msra.mxu0 0.0
        %1220 = vmatprep.subr.mxu0 0.0
        %1221 = vmatpush1.msra.mxu0 0.0
        %1222 = vmatprep.subr.mxu0 0.0
        %1223 = vmatpush1.msra.mxu0 0.0
        %1224 = vmatprep.subr.mxu0 0.0
        %1225 = vmatpush1.msra.mxu0 0.0
        %1226 = vmatprep.subr.mxu0 0.0
        %1227 = vmatpush1.msra.mxu0 0.0
        %1228 = vmatprep.subr.mxu0 0.0
        %1229 = vmatpush1.msra.mxu0 0.0
        %1230 = vmatprep.subr.mxu0 0.0
        %1231 = vmatpush1.msra.mxu0 0.0
        %1232 = vmatprep.subr.mxu0 0.0
        %1233 = vmatpush1.msra.mxu0 0.0
        %1234 = vmatprep.subr.mxu0 0.0
        %1235 = vmatpush1.msra.mxu0 0.0
        %1236 = vmatprep.subr.mxu0 0.0
        %1237 = vmatpush1.msra.mxu0 0.0
        %1238 = vmatprep.subr.mxu0 0.0
        %1239 = vmatpush1.msra.mxu0 0.0
        %1240 = vmatprep.subr.mxu0 0.0
        %1241 = vmatpush1.msra.mxu0 0.0
        %1242 = vmatprep.subr.mxu0 0.0
        %1243 = vmatpush1.msra.mxu0 0.0
        %1244 = vmatprep.subr.mxu0 0.0
        %1245 = vmatpush1.msra.mxu0 0.0
        %1246 = vmatprep.subr.mxu0 0.0
        %1247 = vmatpush1.msra.mxu0 0.0
        %1248 = vmatprep.subr.mxu0 0.0
        %1249 = vmatpush1.msra.mxu0 0.0
        %1250 = vmatprep.subr.mxu0 0.0
        %1251 = vmatpush1.msra.mxu0 0.0
        %1252 = vmatprep.subr.mxu0 0.0
        %1253 = vmatpush1.msra.mxu0 0.0
        %1254 = vmatprep.subr.mxu0 0.0
        %1255 = vmatpush1.msra.mxu0 0.0
        %1256 = vmatprep.subr.mxu0 0.0
        %1257 = vmatpush1.msra.mxu0 0.0
        %1258 = vmatprep.subr.mxu0 0.0
        %1259 = vmatpush1.msra.mxu0 0.0
        %1260 = vmatprep.subr.mxu0 0.0
        %1261 = vmatpush1.msra.mxu0 0.0
        %1262 = vmatprep.subr.mxu0 0.0
        %1263 = vmatpush1.msra.mxu0 0.0
        %1264 = vmatprep.subr.mxu0 0.0
        %1265 = vmatpush1.msra.mxu0 0.0
        %1266 = vmatprep.subr.mxu0 0.0
        %1267 = vmatpush1.msra.mxu0 0.0
        %1268 = vmatprep.subr.mxu0 0.0
        %1269 = vmatpush1.msra.mxu0 0.0
        %1270 = vmatprep.subr.mxu0 0.0
        %1271 = vmatpush1.msra.mxu0 0.0
        %1272 = vmatprep.subr.mxu0 0.0
        %1273 = vmatpush1.msra.mxu0 0.0
        %1274 = vmatprep.subr.mxu0 0.0
        %1275 = vmatpush1.msra.mxu0 0.0
        %1276 = vmatprep.subr.mxu0 0.0
        %1277 = vmatpush1.msra.mxu0 0.0
        %1278 = vmatprep.mubr.f32.mxu0 0.0
        %1279 = vmatmul.mubr.f32.gmra.mrb[0].mxu0 %v1203
        %v1280 = vpop.f32.mrb[0].mxu0
        %v1281 = vadd.f32 0.0, %v1280
        %v1282 = vpop.f32.mrb[0].mxu0
        %1283 = vmatprep.mubr.f32.mxu0 0.0
        %1284 = vmatmul.mubr.f32.gmra.mrb[0].mxu0 %v1206
        %v1285 = vpop.f32.mrb[0].mxu0
        %v1286 = vadd.f32 0.0, %v1285
        %v1287 = vpop.f32.mrb[0].mxu0
        %1288 = vmatprep.mubr.f32.mxu0 0.0
        %1289 = vmatmul.mubr.f32.gmra.mrb[0].mxu0 %v1209
        %v1290 = vpop.f32.mrb[0].mxu0
        %v1291 = vadd.f32 0.0, %v1290
        %v1292 = vpop.f32.mrb[0].mxu0
        %1293 = vmatprep.mubr.f32.mxu0 0.0
        %1294 = vmatmul.mubr.f32.gmra.mrb[0].mxu0 %v1212
        %v1295 = vpop.f32.mrb[0].mxu0
        %v1296 = vadd.f32 0.0, %v1295
        %v1297 = vpop.f32.mrb[0].mxu0
        %1298 = vdwg.mxu0
        %vm1299 = vcmp.gt.f32.partialorder %v917, 0.0
        %vm1300 = vcmp.gt.f32.partialorder %v922, 0.0
        %vm1301 = vcmp.gt.f32.partialorder %v927, 0.0
        %vm1302 = vcmp.gt.f32.partialorder %v932, 0.0
        %v1303 = vsel %vm1299, %v1281, 0.0
        %v1304 = vsel %vm1300, %v1286, 0.0
        %v1305 = vsel %vm1301, %v1291, 0.0
        %v1306 = vsel %vm1302, %v1296, 0.0
        %v1307 = vld [vmem:[#allocation12] sm:$0xff]
        %v1308 = vld [vmem:[#allocation12 + $0x8] sm:$0xff]
        %v1309 = vld [vmem:[#allocation12 + $0x10] sm:$0xff]
        %v1310 = vld [vmem:[#allocation12 + $0x18] sm:$0xff]
        %1311 = vmatprep.subr.mxu0 0.0
        %1312 = vmatpush1.xpose.msra.mxu0 %v813
        %1313 = vmatprep.subr.mxu0 0.0
        %1314 = vmatpush1.xpose.msra.mxu0 %v814
        %1315 = vmatprep.subr.mxu0 0.0
        %1316 = vmatpush1.xpose.msra.mxu0 %v815
        %1317 = vmatprep.subr.mxu0 0.0
        %1318 = vmatpush1.xpose.msra.mxu0 %v816
        %1319 = vmatprep.subr.mxu0 0.0
        %1320 = vmatpush1.xpose.msra.mxu0 0.0
        %1321 = vmatprep.subr.mxu0 0.0
        %1322 = vmatpush1.xpose.msra.mxu0 0.0
        %1323 = vmatprep.subr.mxu0 0.0
        %1324 = vmatpush1.xpose.msra.mxu0 0.0
        %1325 = vmatprep.subr.mxu0 0.0
        %1326 = vmatpush1.xpose.msra.mxu0 0.0
        %1327 = vmatprep.subr.mxu0 0.0
        %1328 = vmatpush1.xpose.msra.mxu0 0.0
        %1329 = vmatprep.subr.mxu0 0.0
        %1330 = vmatpush1.xpose.msra.mxu0 0.0
        %1331 = vmatprep.subr.mxu0 0.0
        %1332 = vmatpush1.xpose.msra.mxu0 0.0
        %1333 = vmatprep.subr.mxu0 0.0
        %1334 = vmatpush1.xpose.msra.mxu0 0.0
        %1335 = vmatprep.subr.mxu0 0.0
        %1336 = vmatpush1.xpose.msra.mxu0 0.0
        %1337 = vmatprep.subr.mxu0 0.0
        %1338 = vmatpush1.xpose.msra.mxu0 0.0
        %1339 = vmatprep.subr.mxu0 0.0
        %1340 = vmatpush1.xpose.msra.mxu0 0.0
        %1341 = vmatprep.subr.mxu0 0.0
        %1342 = vmatpush1.xpose.msra.mxu0 0.0
        %1343 = vmatprep.subr.mxu0 0.0
        %1344 = vmatpush1.xpose.msra.mxu0 0.0
        %1345 = vmatprep.subr.mxu0 0.0
        %1346 = vmatpush1.xpose.msra.mxu0 0.0
        %1347 = vmatprep.subr.mxu0 0.0
        %1348 = vmatpush1.xpose.msra.mxu0 0.0
        %1349 = vmatprep.subr.mxu0 0.0
        %1350 = vmatpush1.xpose.msra.mxu0 0.0
        %1351 = vmatprep.subr.mxu0 0.0
        %1352 = vmatpush1.xpose.msra.mxu0 0.0
        %1353 = vmatprep.subr.mxu0 0.0
        %1354 = vmatpush1.xpose.msra.mxu0 0.0
        %1355 = vmatprep.subr.mxu0 0.0
        %1356 = vmatpush1.xpose.msra.mxu0 0.0
        %1357 = vmatprep.subr.mxu0 0.0
        %1358 = vmatpush1.xpose.msra.mxu0 0.0
        %1359 = vmatprep.subr.mxu0 0.0
        %1360 = vmatpush1.xpose.msra.mxu0 0.0
        %1361 = vmatprep.subr.mxu0 0.0
        %1362 = vmatpush1.xpose.msra.mxu0 0.0
        %1363 = vmatprep.subr.mxu0 0.0
        %1364 = vmatpush1.xpose.msra.mxu0 0.0
        %1365 = vmatprep.subr.mxu0 0.0
        %1366 = vmatpush1.xpose.msra.mxu0 0.0
        %1367 = vmatprep.subr.mxu0 0.0
        %1368 = vmatpush1.xpose.msra.mxu0 0.0
        %1369 = vmatprep.subr.mxu0 0.0
        %1370 = vmatpush1.xpose.msra.mxu0 0.0
        %1371 = vmatprep.subr.mxu0 0.0
        %1372 = vmatpush1.xpose.msra.mxu0 0.0
        %1373 = vmatprep.subr.mxu0 0.0
        %1374 = vmatpush1.xpose.msra.mxu0 0.0
        %1375 = vmatprep.mubr.f32.mxu0 0.0
        %1376 = vmatmul.mubr.f32.gmra.mrb[0].mxu0 %v1303
        %v1377 = vpop.f32.mrb[0].mxu0
        %v1378 = vadd.f32 0.0, %v1377
        %v1379 = vpop.f32.mrb[0].mxu0
        %1380 = vmatprep.mubr.f32.mxu0 0.0
        %1381 = vmatmul.mubr.f32.gmra.mrb[0].mxu0 %v1304
        %v1382 = vpop.f32.mrb[0].mxu0
        %v1383 = vadd.f32 0.0, %v1382
        %v1384 = vpop.f32.mrb[0].mxu0
        %1385 = vmatprep.mubr.f32.mxu0 0.0
        %1386 = vmatmul.mubr.f32.gmra.mrb[0].mxu0 %v1305
        %v1387 = vpop.f32.mrb[0].mxu0
        %v1388 = vadd.f32 0.0, %v1387
        %v1389 = vpop.f32.mrb[0].mxu0
        %1390 = vmatprep.mubr.f32.mxu0 0.0
        %1391 = vmatmul.mubr.f32.gmra.mrb[0].mxu0 %v1306
        %v1392 = vpop.f32.mrb[0].mxu0
        %v1393 = vadd.f32 0.0, %v1392
        %v1394 = vpop.f32.mrb[0].mxu0
        %1395 = vdwg.mxu0
        %v1396 = vadd.f32 %v1307, %v1378
        %v1397 = vadd.f32 %v1308, %v1383
        %v1398 = vadd.f32 %v1309, %v1388
        %v1399 = vadd.f32 %v1310, %v1393
        %1400 = vst.msk [vmem:[#allocation12] sm:$0xff] %vm837, %v1396
        %1401 = vst.msk [vmem:[#allocation12 + $0x8] sm:$0xff] %vm837, %v1397
        %1402 = vst.msk [vmem:[#allocation12 + $0x10] sm:$0xff] %vm837, %v1398
        %1403 = vst.msk [vmem:[#allocation12 + $0x18] sm:$0xff] %vm837, %v1399
        %v1404 = vld [vmem:[#allocation13] sm:$0xff]
        %v1405 = vld [vmem:[#allocation13 + $0x8] sm:$0xff]
        %v1406 = vld [vmem:[#allocation13 + $0x10] sm:$0xff]
        %v1407 = vld [vmem:[#allocation13 + $0x18] sm:$0xff]
        %1408 = vmatprep.subr.mxu0 0.0
        %1409 = vmatpush1.xpose.msra.mxu0 %v1303
        %1410 = vmatprep.subr.mxu0 0.0
        %1411 = vmatpush1.xpose.msra.mxu0 %v1304
        %1412 = vmatprep.subr.mxu0 0.0
        %1413 = vmatpush1.xpose.msra.mxu0 %v1305
        %1414 = vmatprep.subr.mxu0 0.0
        %1415 = vmatpush1.xpose.msra.mxu0 %v1306
        %1416 = vmatprep.subr.mxu0 0.0
        %1417 = vmatpush1.xpose.msra.mxu0 0.0
        %1418 = vmatprep.subr.mxu0 0.0
        %1419 = vmatpush1.xpose.msra.mxu0 0.0
        %1420 = vmatprep.subr.mxu0 0.0
        %1421 = vmatpush1.xpose.msra.mxu0 0.0
        %1422 = vmatprep.subr.mxu0 0.0
        %1423 = vmatpush1.xpose.msra.mxu0 0.0
        %1424 = vmatprep.subr.mxu0 0.0
        %1425 = vmatpush1.xpose.msra.mxu0 0.0
        %1426 = vmatprep.subr.mxu0 0.0
        %1427 = vmatpush1.xpose.msra.mxu0 0.0
        %1428 = vmatprep.subr.mxu0 0.0
        %1429 = vmatpush1.xpose.msra.mxu0 0.0
        %1430 = vmatprep.subr.mxu0 0.0
        %1431 = vmatpush1.xpose.msra.mxu0 0.0
        %1432 = vmatprep.subr.mxu0 0.0
        %1433 = vmatpush1.xpose.msra.mxu0 0.0
        %1434 = vmatprep.subr.mxu0 0.0
        %1435 = vmatpush1.xpose.msra.mxu0 0.0
        %1436 = vmatprep.subr.mxu0 0.0
        %1437 = vmatpush1.xpose.msra.mxu0 0.0
        %1438 = vmatprep.subr.mxu0 0.0
        %1439 = vmatpush1.xpose.msra.mxu0 0.0
        %1440 = vmatprep.subr.mxu0 0.0
        %1441 = vmatpush1.xpose.msra.mxu0 0.0
        %1442 = vmatprep.subr.mxu0 0.0
        %1443 = vmatpush1.xpose.msra.mxu0 0.0
        %1444 = vmatprep.subr.mxu0 0.0
        %1445 = vmatpush1.xpose.msra.mxu0 0.0
        %1446 = vmatprep.subr.mxu0 0.0
        %1447 = vmatpush1.xpose.msra.mxu0 0.0
        %1448 = vmatprep.subr.mxu0 0.0
        %1449 = vmatpush1.xpose.msra.mxu0 0.0
        %1450 = vmatprep.subr.mxu0 0.0
        %1451 = vmatpush1.xpose.msra.mxu0 0.0
        %1452 = vmatprep.subr.mxu0 0.0
        %1453 = vmatpush1.xpose.msra.mxu0 0.0
        %1454 = vmatprep.subr.mxu0 0.0
        %1455 = vmatpush1.xpose.msra.mxu0 0.0
        %1456 = vmatprep.subr.mxu0 0.0
        %1457 = vmatpush1.xpose.msra.mxu0 0.0
        %1458 = vmatprep.subr.mxu0 0.0
        %1459 = vmatpush1.xpose.msra.mxu0 0.0
        %1460 = vmatprep.subr.mxu0 0.0
        %1461 = vmatpush1.xpose.msra.mxu0 0.0
        %1462 = vmatprep.subr.mxu0 0.0
        %1463 = vmatpush1.xpose.msra.mxu0 0.0
        %1464 = vmatprep.subr.mxu0 0.0
        %1465 = vmatpush1.xpose.msra.mxu0 0.0
        %1466 = vmatprep.subr.mxu0 0.0
        %1467 = vmatpush1.xpose.msra.mxu0 0.0
        %1468 = vmatprep.subr.mxu0 0.0
        %1469 = vmatpush1.xpose.msra.mxu0 0.0
        %1470 = vmatprep.subr.mxu0 0.0
        %1471 = vmatpush1.xpose.msra.mxu0 0.0
        %1472 = vmatprep.mubr.f32.mxu0 0.0
        %1473 = vmatmul.mubr.f32.gmra.mrb[0].mxu0 %v813
        %v1474 = vpop.f32.mrb[0].mxu0
        %v1475 = vadd.f32 0.0, %v1474
        %v1476 = vpop.f32.mrb[0].mxu0
        %1477 = vmatprep.mubr.f32.mxu0 0.0
        %1478 = vmatmul.mubr.f32.gmra.mrb[0].mxu0 %v814
        %v1479 = vpop.f32.mrb[0].mxu0
        %v1480 = vadd.f32 0.0, %v1479
        %v1481 = vpop.f32.mrb[0].mxu0
        %1482 = vmatprep.mubr.f32.mxu0 0.0
        %1483 = vmatmul.mubr.f32.gmra.mrb[0].mxu0 %v815
        %v1484 = vpop.f32.mrb[0].mxu0
        %v1485 = vadd.f32 0.0, %v1484
        %v1486 = vpop.f32.mrb[0].mxu0
        %1487 = vmatprep.mubr.f32.mxu0 0.0
        %1488 = vmatmul.mubr.f32.gmra.mrb[0].mxu0 %v816
        %v1489 = vpop.f32.mrb[0].mxu0
        %v1490 = vadd.f32 0.0, %v1489
        %v1491 = vpop.f32.mrb[0].mxu0
        %1492 = vdwg.mxu0
        %v1493 = vadd.f32 %v1404, %v1475
        %v1494 = vadd.f32 %v1405, %v1480
        %v1495 = vadd.f32 %v1406, %v1485
        %v1496 = vadd.f32 %v1407, %v1490
        %1497 = vst.msk [vmem:[#allocation13] sm:$0xff] %vm837, %v1493
        %1498 = vst.msk [vmem:[#allocation13 + $0x8] sm:$0xff] %vm837, %v1494
        %1499 = vst.msk [vmem:[#allocation13 + $0x10] sm:$0xff] %vm837, %v1495
        %1500 = vst.msk [vmem:[#allocation13 + $0x18] sm:$0xff] %vm837, %v1496
        %v1501 = vld [vmem:[#allocation14] sm:$0xff]
        %v1502 = vld [vmem:[#allocation14 + $0x8] sm:$0xff]
        %v1503 = vld [vmem:[#allocation14 + $0x10] sm:$0xff]
        %v1504 = vld [vmem:[#allocation14 + $0x18] sm:$0xff]
        %1505 = vadd.xlane.f32.xlu0 %v1303
        %v1506 = vpop.xlane.xlu0 %1505
        %1507 = vadd.xlane.f32.xlu0 %v1304
        %v1508 = vpop.xlane.xlu0 %1507
        %1509 = vadd.xlane.f32.xlu0 %v1305
        %v1510 = vpop.xlane.xlu0 %1509
        %1511 = vadd.xlane.f32.xlu0 %v1306
        %v1512 = vpop.xlane.xlu0 %1511
        %v1513 = vadd.f32 %v1501, %v1506
        %v1514 = vadd.f32 %v1502, %v1508
        %v1515 = vadd.f32 %v1503, %v1510
        %v1516 = vadd.f32 %v1504, %v1512
        %1517 = vst.msk [vmem:[#allocation14] sm:$0xff] %vm1200, %v1513
        %1518 = vst.msk [vmem:[#allocation14 + $0x8] sm:$0xff] %vm1200, %v1514
        %1519 = vst.msk [vmem:[#allocation14 + $0x10] sm:$0xff] %vm1200, %v1515
        %1520 = vst.msk [vmem:[#allocation14 + $0x18] sm:$0xff] %vm1200, %v1516
        %v1522 = vsel %vm837, %v681, 0
        %v1525 = vsel %vm837, %v682, 0
        %v1528 = vsel %vm837, %v683, 0
        %v1531 = vsel %vm837, %v684, 0
        %1533 = vmatprep.subr.mxu0 0.0
        %1534 = vmatpush1.msra.mxu0 %v1303
        %1535 = vmatprep.subr.mxu0 0.0
        %1536 = vmatpush1.msra.mxu0 %v1304
        %1537 = vmatprep.subr.mxu0 0.0
        %1538 = vmatpush1.msra.mxu0 %v1305
        %1539 = vmatprep.subr.mxu0 0.0
        %1540 = vmatpush1.msra.mxu0 %v1306
        %1541 = vmatprep.subr.mxu0 0.0
        %1542 = vmatpush1.msra.mxu0 0.0
        %1543 = vmatprep.subr.mxu0 0.0
        %1544 = vmatpush1.msra.mxu0 0.0
        %1545 = vmatprep.subr.mxu0 0.0
        %1546 = vmatpush1.msra.mxu0 0.0
        %1547 = vmatprep.subr.mxu0 0.0
        %1548 = vmatpush1.msra.mxu0 0.0
        %1549 = vmatprep.subr.mxu0 0.0
        %1550 = vmatpush1.msra.mxu0 0.0
        %1551 = vmatprep.subr.mxu0 0.0
        %1552 = vmatpush1.msra.mxu0 0.0
        %1553 = vmatprep.subr.mxu0 0.0
        %1554 = vmatpush1.msra.mxu0 0.0
        %1555 = vmatprep.subr.mxu0 0.0
        %1556 = vmatpush1.msra.mxu0 0.0
        %1557 = vmatprep.subr.mxu0 0.0
        %1558 = vmatpush1.msra.mxu0 0.0
        %1559 = vmatprep.subr.mxu0 0.0
        %1560 = vmatpush1.msra.mxu0 0.0
        %1561 = vmatprep.subr.mxu0 0.0
        %1562 = vmatpush1.msra.mxu0 0.0
        %1563 = vmatprep.subr.mxu0 0.0
        %1564 = vmatpush1.msra.mxu0 0.0
        %1565 = vmatprep.subr.mxu0 0.0
        %1566 = vmatpush1.msra.mxu0 0.0
        %1567 = vmatprep.subr.mxu0 0.0
        %1568 = vmatpush1.msra.mxu0 0.0
        %1569 = vmatprep.subr.mxu0 0.0
        %1570 = vmatpush1.msra.mxu0 0.0
        %1571 = vmatprep.subr.mxu0 0.0
        %1572 = vmatpush1.msra.mxu0 0.0
        %1573 = vmatprep.subr.mxu0 0.0
        %1574 = vmatpush1.msra.mxu0 0.0
        %1575 = vmatprep.subr.mxu0 0.0
        %1576 = vmatpush1.msra.mxu0 0.0
        %1577 = vmatprep.subr.mxu0 0.0
        %1578 = vmatpush1.msra.mxu0 0.0
        %1579 = vmatprep.subr.mxu0 0.0
        %1580 = vmatpush1.msra.mxu0 0.0
        %1581 = vmatprep.subr.mxu0 0.0
        %1582 = vmatpush1.msra.mxu0 0.0
        %1583 = vmatprep.subr.mxu0 0.0
        %1584 = vmatpush1.msra.mxu0 0.0
        %1585 = vmatprep.subr.mxu0 0.0
        %1586 = vmatpush1.msra.mxu0 0.0
        %1587 = vmatprep.subr.mxu0 0.0
        %1588 = vmatpush1.msra.mxu0 0.0
        %1589 = vmatprep.subr.mxu0 0.0
        %1590 = vmatpush1.msra.mxu0 0.0
        %1591 = vmatprep.subr.mxu0 0.0
        %1592 = vmatpush1.msra.mxu0 0.0
        %1593 = vmatprep.subr.mxu0 0.0
        %1594 = vmatpush1.msra.mxu0 0.0
        %1595 = vmatprep.subr.mxu0 0.0
        %1596 = vmatpush1.msra.mxu0 0.0
        %1597 = vmatprep.mubr.f32.mxu0 0.0
        %1598 = vmatmul.mubr.f32.gmra.mrb[0].mxu0 %v1522
        %v1599 = vpop.f32.mrb[0].mxu0
        %v1600 = vadd.f32 0.0, %v1599
        %v1601 = vpop.f32.mrb[0].mxu0
        %1602 = vmatprep.mubr.f32.mxu0 0.0
        %1603 = vmatmul.mubr.f32.gmra.mrb[0].mxu0 %v1525
        %v1604 = vpop.f32.mrb[0].mxu0
        %v1605 = vadd.f32 0.0, %v1604
        %v1606 = vpop.f32.mrb[0].mxu0
        %1607 = vmatprep.mubr.f32.mxu0 0.0
        %1608 = vmatmul.mubr.f32.gmra.mrb[0].mxu0 %v1528
        %v1609 = vpop.f32.mrb[0].mxu0
        %v1610 = vadd.f32 0.0, %v1609
        %v1611 = vpop.f32.mrb[0].mxu0
        %1612 = vmatprep.mubr.f32.mxu0 0.0
        %1613 = vmatmul.mubr.f32.gmra.mrb[0].mxu0 %v1531
        %v1614 = vpop.f32.mrb[0].mxu0
        %v1615 = vadd.f32 0.0, %v1614
        %v1616 = vpop.f32.mrb[0].mxu0
        %1617 = vdwg.mxu0
        %vm1618 = vcmp.gt.f32.partialorder %v795, 0.0
        %vm1619 = vcmp.gt.f32.partialorder %v800, 0.0
        %vm1620 = vcmp.gt.f32.partialorder %v805, 0.0
        %vm1621 = vcmp.gt.f32.partialorder %v810, 0.0
        %v1622 = vsel %vm1618, %v1600, 0.0
        %v1623 = vsel %vm1619, %v1605, 0.0
        %v1624 = vsel %vm1620, %v1610, 0.0
        %v1625 = vsel %vm1621, %v1615, 0.0
        %v1626 = vld [vmem:[#allocation10] sm:$0xff]
        %v1627 = vld [vmem:[#allocation10 + $0x8] sm:$0xff]
        %v1628 = vld [vmem:[#allocation10 + $0x10] sm:$0xff]
        %v1629 = vld [vmem:[#allocation10 + $0x18] sm:$0xff]
        %1630 = vmatprep.subr.mxu0 0.0
        %1631 = vmatpush1.xpose.msra.mxu0 %v666
        %1632 = vmatprep.subr.mxu0 0.0
        %1633 = vmatpush1.xpose.msra.mxu0 0.0
        %1634 = vmatprep.subr.mxu0 0.0
        %1635 = vmatpush1.xpose.msra.mxu0 0.0
        %1636 = vmatprep.subr.mxu0 0.0
        %1637 = vmatpush1.xpose.msra.mxu0 0.0
        %1638 = vmatprep.subr.mxu0 0.0
        %1639 = vmatpush1.xpose.msra.mxu0 0.0
        %1640 = vmatprep.subr.mxu0 0.0
        %1641 = vmatpush1.xpose.msra.mxu0 0.0
        %1642 = vmatprep.subr.mxu0 0.0
        %1643 = vmatpush1.xpose.msra.mxu0 0.0
        %1644 = vmatprep.subr.mxu0 0.0
        %1645 = vmatpush1.xpose.msra.mxu0 0.0
        %1646 = vmatprep.subr.mxu0 0.0
        %1647 = vmatpush1.xpose.msra.mxu0 0.0
        %1648 = vmatprep.subr.mxu0 0.0
        %1649 = vmatpush1.xpose.msra.mxu0 0.0
        %1650 = vmatprep.subr.mxu0 0.0
        %1651 = vmatpush1.xpose.msra.mxu0 0.0
        %1652 = vmatprep.subr.mxu0 0.0
        %1653 = vmatpush1.xpose.msra.mxu0 0.0
        %1654 = vmatprep.subr.mxu0 0.0
        %1655 = vmatpush1.xpose.msra.mxu0 0.0
        %1656 = vmatprep.subr.mxu0 0.0
        %1657 = vmatpush1.xpose.msra.mxu0 0.0
        %1658 = vmatprep.subr.mxu0 0.0
        %1659 = vmatpush1.xpose.msra.mxu0 0.0
        %1660 = vmatprep.subr.mxu0 0.0
        %1661 = vmatpush1.xpose.msra.mxu0 0.0
        %1662 = vmatprep.subr.mxu0 0.0
        %1663 = vmatpush1.xpose.msra.mxu0 0.0
        %1664 = vmatprep.subr.mxu0 0.0
        %1665 = vmatpush1.xpose.msra.mxu0 0.0
        %1666 = vmatprep.subr.mxu0 0.0
        %1667 = vmatpush1.xpose.msra.mxu0 0.0
        %1668 = vmatprep.subr.mxu0 0.0
        %1669 = vmatpush1.xpose.msra.mxu0 0.0
        %1670 = vmatprep.subr.mxu0 0.0
        %1671 = vmatpush1.xpose.msra.mxu0 0.0
        %1672 = vmatprep.subr.mxu0 0.0
        %1673 = vmatpush1.xpose.msra.mxu0 0.0
        %1674 = vmatprep.subr.mxu0 0.0
        %1675 = vmatpush1.xpose.msra.mxu0 0.0
        %1676 = vmatprep.subr.mxu0 0.0
        %1677 = vmatpush1.xpose.msra.mxu0 0.0
        %1678 = vmatprep.subr.mxu0 0.0
        %1679 = vmatpush1.xpose.msra.mxu0 0.0
        %1680 = vmatprep.subr.mxu0 0.0
        %1681 = vmatpush1.xpose.msra.mxu0 0.0
        %1682 = vmatprep.subr.mxu0 0.0
        %1683 = vmatpush1.xpose.msra.mxu0 0.0
        %1684 = vmatprep.subr.mxu0 0.0
        %1685 = vmatpush1.xpose.msra.mxu0 0.0
        %1686 = vmatprep.subr.mxu0 0.0
        %1687 = vmatpush1.xpose.msra.mxu0 0.0
        %1688 = vmatprep.subr.mxu0 0.0
        %1689 = vmatpush1.xpose.msra.mxu0 0.0
        %1690 = vmatprep.subr.mxu0 0.0
        %1691 = vmatpush1.xpose.msra.mxu0 0.0
        %1692 = vmatprep.subr.mxu0 0.0
        %1693 = vmatpush1.xpose.msra.mxu0 0.0
        %1694 = vmatprep.mubr.f32.mxu0 0.0
        %1695 = vmatmul.mubr.f32.gmra.mrb[0].mxu0 %v1622
        %v1696 = vpop.f32.mrb[0].mxu0
        %v1697 = vadd.f32 0.0, %v1696
        %v1698 = vpop.f32.mrb[0].mxu0
        %1699 = vmatprep.mubr.f32.mxu0 0.0
        %1700 = vmatmul.mubr.f32.gmra.mrb[0].mxu0 %v1623
        %v1701 = vpop.f32.mrb[0].mxu0
        %v1702 = vadd.f32 0.0, %v1701
        %v1703 = vpop.f32.mrb[0].mxu0
        %1704 = vmatprep.mubr.f32.mxu0 0.0
        %1705 = vmatmul.mubr.f32.gmra.mrb[0].mxu0 %v1624
        %v1706 = vpop.f32.mrb[0].mxu0
        %v1707 = vadd.f32 0.0, %v1706
        %v1708 = vpop.f32.mrb[0].mxu0
        %1709 = vmatprep.mubr.f32.mxu0 0.0
        %1710 = vmatmul.mubr.f32.gmra.mrb[0].mxu0 %v1625
        %v1711 = vpop.f32.mrb[0].mxu0
        %v1712 = vadd.f32 0.0, %v1711
        %v1713 = vpop.f32.mrb[0].mxu0
        %1714 = vdwg.mxu0
        %v1715 = vadd.f32 %v1626, %v1697
        %v1716 = vadd.f32 %v1627, %v1702
        %v1717 = vadd.f32 %v1628, %v1707
        %v1718 = vadd.f32 %v1629, %v1712
        %1719 = vst.msk [vmem:[#allocation10] sm:$0xff] %vm715, %v1715
        %1720 = vst.msk [vmem:[#allocation10 + $0x8] sm:$0xff] %vm715, %v1716
        %1721 = vst.msk [vmem:[#allocation10 + $0x10] sm:$0xff] %vm715, %v1717
        %1722 = vst.msk [vmem:[#allocation10 + $0x18] sm:$0xff] %vm715, %v1718
        %v1723 = vld [vmem:[#allocation11] sm:$0xff]
        %v1724 = vld [vmem:[#allocation11 + $0x8] sm:$0xff]
        %v1725 = vld [vmem:[#allocation11 + $0x10] sm:$0xff]
        %v1726 = vld [vmem:[#allocation11 + $0x18] sm:$0xff]
        %1727 = vadd.xlane.f32.xlu0 %v1622
        %v1728 = vpop.xlane.xlu0 %1727
        %1729 = vadd.xlane.f32.xlu0 %v1623
        %v1730 = vpop.xlane.xlu0 %1729
        %1731 = vadd.xlane.f32.xlu0 %v1624
        %v1732 = vpop.xlane.xlu0 %1731
        %1733 = vadd.xlane.f32.xlu0 %v1625
        %v1734 = vpop.xlane.xlu0 %1733
        %v1735 = vadd.f32 %v1723, %v1728
        %v1736 = vadd.f32 %v1724, %v1730
        %v1737 = vadd.f32 %v1725, %v1732
        %v1738 = vadd.f32 %v1726, %v1734
        %1739 = vst.msk [vmem:[#allocation11] sm:$0xff] %vm1200, %v1735
        %1740 = vst.msk [vmem:[#allocation11 + $0x8] sm:$0xff] %vm1200, %v1736
        %1741 = vst.msk [vmem:[#allocation11 + $0x10] sm:$0xff] %vm1200, %v1737
        %1742 = vst.msk [vmem:[#allocation11 + $0x18] sm:$0xff] %vm1200, %v1738
        // Predicated region
        $region73: #{tpu_custom_call.1} parent=63 // pred_check
          %p1743 = pneg %p574
        $region74: #{tpu_custom_call.1} parent=63 // pred_check_branch
          %1745 = sbr.rel (%p1743) target = $region76
        $region75: #{tpu_custom_call.1} parent=63 // pred_region
          %v1746 = vld [vmem:[#allocation2] sm:$0xff]
          %v1747 = vld [vmem:[#allocation2 + $0x8] sm:$0xff]
          %v1748 = vld [vmem:[#allocation2 + $0x10] sm:$0xff]
          %v1749 = vld [vmem:[#allocation2 + $0x18] sm:$0xff]
          %v1750 = vld [vmem:[#allocation10] sm:$0xff]
          %v1751 = vld [vmem:[#allocation10 + $0x8] sm:$0xff]
          %v1752 = vld [vmem:[#allocation10 + $0x10] sm:$0xff]
          %v1753 = vld [vmem:[#allocation10 + $0x18] sm:$0xff]
          %v1754 = vmul.f32 %v1750, 0.01
          %v1755 = vmul.f32 %v1751, 0.01
          %v1756 = vmul.f32 %v1752, 0.01
          %v1757 = vmul.f32 %v1753, 0.01
          %v1758 = vsub.f32 %v1746, %v1754
          %v1759 = vsub.f32 %v1747, %v1755
          %v1760 = vsub.f32 %v1748, %v1756
          %v1761 = vsub.f32 %v1749, %v1757
          %1762 = vst.msk [vmem:[#allocation2] sm:$0xff] %vm715, %v1758
          %1763 = vst.msk [vmem:[#allocation2 + $0x8] sm:$0xff] %vm715, %v1759
          %1764 = vst.msk [vmem:[#allocation2 + $0x10] sm:$0xff] %vm715, %v1760
          %1765 = vst.msk [vmem:[#allocation2 + $0x18] sm:$0xff] %vm715, %v1761
          %v1766 = vld [vmem:[#allocation3] sm:$0xff]
          %v1767 = vld [vmem:[#allocation3 + $0x8] sm:$0xff]
          %v1768 = vld [vmem:[#allocation3 + $0x10] sm:$0xff]
          %v1769 = vld [vmem:[#allocation3 + $0x18] sm:$0xff]
          %v1770 = vld [vmem:[#allocation11] sm:$0xff]
          %v1771 = vld [vmem:[#allocation11 + $0x8] sm:$0xff]
          %v1772 = vld [vmem:[#allocation11 + $0x10] sm:$0xff]
          %v1773 = vld [vmem:[#allocation11 + $0x18] sm:$0xff]
          %v1774 = vmul.f32 %v1770, 0.01
          %v1775 = vmul.f32 %v1771, 0.01
          %v1776 = vmul.f32 %v1772, 0.01
          %v1777 = vmul.f32 %v1773, 0.01
          %v1778 = vsub.f32 %v1766, %v1774
          %v1779 = vsub.f32 %v1767, %v1775
          %v1780 = vsub.f32 %v1768, %v1776
          %v1781 = vsub.f32 %v1769, %v1777
          %1782 = vst.msk [vmem:[#allocation3] sm:$0xff] %vm1200, %v1778
          %1783 = vst.msk [vmem:[#allocation3 + $0x8] sm:$0xff] %vm1200, %v1779
          %1784 = vst.msk [vmem:[#allocation3 + $0x10] sm:$0xff] %vm1200, %v1780
          %1785 = vst.msk [vmem:[#allocation3 + $0x18] sm:$0xff] %vm1200, %v1781
          %v1786 = vld [vmem:[#allocation4] sm:$0xff]
          %v1787 = vld [vmem:[#allocation4 + $0x8] sm:$0xff]
          %v1788 = vld [vmem:[#allocation4 + $0x10] sm:$0xff]
          %v1789 = vld [vmem:[#allocation4 + $0x18] sm:$0xff]
          %v1790 = vld [vmem:[#allocation12] sm:$0xff]
          %v1791 = vld [vmem:[#allocation12 + $0x8] sm:$0xff]
          %v1792 = vld [vmem:[#allocation12 + $0x10] sm:$0xff]
          %v1793 = vld [vmem:[#allocation12 + $0x18] sm:$0xff]
          %v1794 = vmul.f32 %v1790, 0.01
          %v1795 = vmul.f32 %v1791, 0.01
          %v1796 = vmul.f32 %v1792, 0.01
          %v1797 = vmul.f32 %v1793, 0.01
          %v1798 = vsub.f32 %v1786, %v1794
          %v1799 = vsub.f32 %v1787, %v1795
          %v1800 = vsub.f32 %v1788, %v1796
          %v1801 = vsub.f32 %v1789, %v1797
          %1802 = vst.msk [vmem:[#allocation4] sm:$0xff] %vm837, %v1798
          %1803 = vst.msk [vmem:[#allocation4 + $0x8] sm:$0xff] %vm837, %v1799
          %1804 = vst.msk [vmem:[#allocation4 + $0x10] sm:$0xff] %vm837, %v1800
          %1805 = vst.msk [vmem:[#allocation4 + $0x18] sm:$0xff] %vm837, %v1801
          %v1806 = vld [vmem:[#allocation5] sm:$0xff]
          %v1807 = vld [vmem:[#allocation5 + $0x8] sm:$0xff]
          %v1808 = vld [vmem:[#allocation5 + $0x10] sm:$0xff]
          %v1809 = vld [vmem:[#allocation5 + $0x18] sm:$0xff]
          %v1810 = vld [vmem:[#allocation13] sm:$0xff]
          %v1811 = vld [vmem:[#allocation13 + $0x8] sm:$0xff]
          %v1812 = vld [vmem:[#allocation13 + $0x10] sm:$0xff]
          %v1813 = vld [vmem:[#allocation13 + $0x18] sm:$0xff]
          %v1814 = vmul.f32 %v1810, 0.01
          %v1815 = vmul.f32 %v1811, 0.01
          %v1816 = vmul.f32 %v1812, 0.01
          %v1817 = vmul.f32 %v1813, 0.01
          %v1818 = vsub.f32 %v1806, %v1814
          %v1819 = vsub.f32 %v1807, %v1815
          %v1820 = vsub.f32 %v1808, %v1816
          %v1821 = vsub.f32 %v1809, %v1817
          %1822 = vst.msk [vmem:[#allocation5] sm:$0xff] %vm837, %v1818
          %1823 = vst.msk [vmem:[#allocation5 + $0x8] sm:$0xff] %vm837, %v1819
          %1824 = vst.msk [vmem:[#allocation5 + $0x10] sm:$0xff] %vm837, %v1820
          %1825 = vst.msk [vmem:[#allocation5 + $0x18] sm:$0xff] %vm837, %v1821
          %v1826 = vld [vmem:[#allocation6] sm:$0xff]
          %v1827 = vld [vmem:[#allocation6 + $0x8] sm:$0xff]
          %v1828 = vld [vmem:[#allocation6 + $0x10] sm:$0xff]
          %v1829 = vld [vmem:[#allocation6 + $0x18] sm:$0xff]
          %v1830 = vld [vmem:[#allocation14] sm:$0xff]
          %v1831 = vld [vmem:[#allocation14 + $0x8] sm:$0xff]
          %v1832 = vld [vmem:[#allocation14 + $0x10] sm:$0xff]
          %v1833 = vld [vmem:[#allocation14 + $0x18] sm:$0xff]
          %v1834 = vmul.f32 %v1830, 0.01
          %v1835 = vmul.f32 %v1831, 0.01
          %v1836 = vmul.f32 %v1832, 0.01
          %v1837 = vmul.f32 %v1833, 0.01
          %v1838 = vsub.f32 %v1826, %v1834
          %v1839 = vsub.f32 %v1827, %v1835
          %v1840 = vsub.f32 %v1828, %v1836
          %v1841 = vsub.f32 %v1829, %v1837
          %1842 = vst.msk [vmem:[#allocation6] sm:$0xff] %vm1200, %v1838
          %1843 = vst.msk [vmem:[#allocation6 + $0x8] sm:$0xff] %vm1200, %v1839
          %1844 = vst.msk [vmem:[#allocation6 + $0x10] sm:$0xff] %vm1200, %v1840
          %1845 = vst.msk [vmem:[#allocation6 + $0x18] sm:$0xff] %vm1200, %v1841
          %v1846 = vld [vmem:[#allocation7] sm:$0xff]
          %v1847 = vld [vmem:[#allocation15] sm:$0xff]
          %v1848 = vmul.f32 %v1847, 0.01
          %v1849 = vsub.f32 %v1846, %v1848
          %1850 = vst.msk [vmem:[#allocation7] sm:$0xff] %vm837, %v1849
          %v1851 = vld [vmem:[#allocation8] sm:$0xff]
          %v1852 = vld [vmem:[#allocation8 + $0x8] sm:$0xff]
          %v1853 = vld [vmem:[#allocation8 + $0x10] sm:$0xff]
          %v1854 = vld [vmem:[#allocation8 + $0x18] sm:$0xff]
          %v1855 = vld [vmem:[#allocation16] sm:$0xff]
          %v1856 = vld [vmem:[#allocation16 + $0x8] sm:$0xff]
          %v1857 = vld [vmem:[#allocation16 + $0x10] sm:$0xff]
          %v1858 = vld [vmem:[#allocation16 + $0x18] sm:$0xff]
          %v1859 = vmul.f32 %v1855, 0.01
          %v1860 = vmul.f32 %v1856, 0.01
          %v1861 = vmul.f32 %v1857, 0.01
          %v1862 = vmul.f32 %v1858, 0.01
          %v1863 = vsub.f32 %v1851, %v1859
          %v1864 = vsub.f32 %v1852, %v1860
          %v1865 = vsub.f32 %v1853, %v1861
          %v1866 = vsub.f32 %v1854, %v1862
          %1867 = vst.msk [vmem:[#allocation8] sm:$0xff] %vm715, %v1863
          %1868 = vst.msk [vmem:[#allocation8 + $0x8] sm:$0xff] %vm715, %v1864
          %1869 = vst.msk [vmem:[#allocation8 + $0x10] sm:$0xff] %vm715, %v1865
          %1870 = vst.msk [vmem:[#allocation8 + $0x18] sm:$0xff] %vm715, %v1866
          %v1871 = vld [vmem:[#allocation9] sm:$0xff]
          %v1872 = vld [vmem:[#allocation17] sm:$0xff]
          %v1873 = vmul.f32 %v1872, 0.01
          %v1874 = vsub.f32 %v1871, %v1873
          %1875 = vst.msk [vmem:[#allocation9] sm:$0xff] %vm1200, %v1874
          %v1876 = vld [vmem:[#allocation2] sm:$0xff]
          %v1877 = vld [vmem:[#allocation2 + $0x8] sm:$0xff]
          %v1878 = vld [vmem:[#allocation2 + $0x10] sm:$0xff]
          %v1879 = vld [vmem:[#allocation2 + $0x18] sm:$0xff]
          %1880 = vst.msk [vmem:[%s12] sm:$0xff] %vm715, %v1876
          %1881 = vst.msk [vmem:[%s12 + $0x8] sm:$0xff] %vm715, %v1877
          %1882 = vst.msk [vmem:[%s12 + $0x10] sm:$0xff] %vm715, %v1878
          %1883 = vst.msk [vmem:[%s12 + $0x18] sm:$0xff] %vm715, %v1879
          %v1884 = vld [vmem:[#allocation3] sm:$0xff]
          %v1885 = vld [vmem:[#allocation3 + $0x8] sm:$0xff]
          %v1886 = vld [vmem:[#allocation3 + $0x10] sm:$0xff]
          %v1887 = vld [vmem:[#allocation3 + $0x18] sm:$0xff]
          %1888 = vst.msk [vmem:[%s13] sm:$0xff] %vm1200, %v1884
          %1889 = vst.msk [vmem:[%s13 + $0x8] sm:$0xff] %vm1200, %v1885
          %1890 = vst.msk [vmem:[%s13 + $0x10] sm:$0xff] %vm1200, %v1886
          %1891 = vst.msk [vmem:[%s13 + $0x18] sm:$0xff] %vm1200, %v1887
          %v1892 = vld [vmem:[#allocation4] sm:$0xff]
          %v1893 = vld [vmem:[#allocation4 + $0x8] sm:$0xff]
          %v1894 = vld [vmem:[#allocation4 + $0x10] sm:$0xff]
          %v1895 = vld [vmem:[#allocation4 + $0x18] sm:$0xff]
          %1896 = vst.msk [vmem:[#allocation20] sm:$0xff] %vm837, %v1892
          %1897 = vst.msk [vmem:[#allocation20 + $0x8] sm:$0xff] %vm837, %v1893
          %1898 = vst.msk [vmem:[#allocation20 + $0x10] sm:$0xff] %vm837, %v1894
          %1899 = vst.msk [vmem:[#allocation20 + $0x18] sm:$0xff] %vm837, %v1895
          %v1900 = vld [vmem:[#allocation6] sm:$0xff]
          %v1901 = vld [vmem:[#allocation6 + $0x8] sm:$0xff]
          %v1902 = vld [vmem:[#allocation6 + $0x10] sm:$0xff]
          %v1903 = vld [vmem:[#allocation6 + $0x18] sm:$0xff]
          %1904 = vst.msk [vmem:[%s15] sm:$0xff] %vm1200, %v1900
          %1905 = vst.msk [vmem:[%s15 + $0x8] sm:$0xff] %vm1200, %v1901
          %1906 = vst.msk [vmem:[%s15 + $0x10] sm:$0xff] %vm1200, %v1902
          %1907 = vst.msk [vmem:[%s15 + $0x18] sm:$0xff] %vm1200, %v1903
          %v1908 = vld [vmem:[#allocation7] sm:$0xff]
          %1909 = vst.msk [vmem:[#allocation22] sm:$0xff] %vm837, %v1908
          %v1910 = vld [vmem:[#allocation9] sm:$0xff]
          %1911 = vst.msk [vmem:[%s17] sm:$0xff] %vm1200, %v1910
        $region76: #{tpu_custom_call.1} parent=63 // pred_fallthru
          _
        %s1912 = sand.u32 %s301, 1
        %s1913 = scalar_lea.sflag [#allocation19], %s1912
        %s1914 = sand.u32 %s301, 1
        %s1915 = smul.addr %s1914, 8
        %s1916 = scalar_lea.vmem [#allocation18], %s1915
        // Predicated region
        $region77: #{tpu_custom_call.1} parent=63 // pred_check
          %p1917 = pneg %p311
        $region78: #{tpu_custom_call.1} parent=63 // pred_check_branch
          %1919 = sbr.rel (%p1917) target = $region80
        $region79: #{tpu_custom_call.1} parent=63 // pred_region
          %s1921 = ssub.s32 128, 128
          %1922 = vsyncadd %s1913, %s1921
          %s1923 = sadd.s32 %s38, %s37
          %s1924 = smul.addr %s1923, 128
          %s1925 = scalar_lea.hbm %s11, %s1924
          %s1927 = sshll.u32 %s1916, 4
          %s1928 = int_to_ptr.vmem [resolvable:$true] %s1927
          %1930 = dma.vmem_to_hbm [thread:$0]  %s1928, 128, %s1925, %s1913
        $region80: #{tpu_custom_call.1} parent=63 // pred_fallthru
          _
        // Predicated region
        $region81: #{tpu_custom_call.1} parent=63 // pred_check
          %p1931 = pneg %p332
        $region82: #{tpu_custom_call.1} parent=63 // pred_check_branch
          %1933 = sbr.rel (%p1931) target = $region84
        $region83: #{tpu_custom_call.1} parent=63 // pred_region
          _
        $region84: #{tpu_custom_call.1} parent=63 // pred_fallthru
          _
        // Predicated region
        $region85: #{tpu_custom_call.1} parent=63 // pred_check
          %p1934 = pneg %p353
        $region86: #{tpu_custom_call.1} parent=63 // pred_check_branch
          %1936 = sbr.rel (%p1934) target = $region88
        $region87: #{tpu_custom_call.1} parent=63 // pred_region
          _
        $region88: #{tpu_custom_call.1} parent=63 // pred_fallthru
          _
        // Predicated region
        $region89: #{tpu_custom_call.1} parent=63 // pred_check
          %p1937 = pneg %p374
        $region90: #{tpu_custom_call.1} parent=63 // pred_check_branch
          %1939 = sbr.rel (%p1937) target = $region92
        $region91: #{tpu_custom_call.1} parent=63 // pred_region
          %s1941 = ssub.s32 512, 512
          %1942 = vsyncadd [#allocation21], %s1941
          %s1943 = sshll.u32 [#allocation20], 4
          %s1944 = int_to_ptr.vmem [resolvable:$true] %s1943
          %1949 = dma.vmem_to_hbm [thread:$0]  %s1944, 512, %s14, [#allocation21], 128, 128, 8
        $region92: #{tpu_custom_call.1} parent=63 // pred_fallthru
          _
        // Predicated region
        $region93: #{tpu_custom_call.1} parent=63 // pred_check
          %p1950 = pneg %p395
        $region94: #{tpu_custom_call.1} parent=63 // pred_check_branch
          %1952 = sbr.rel (%p1950) target = $region96
        $region95: #{tpu_custom_call.1} parent=63 // pred_region
          _
        $region96: #{tpu_custom_call.1} parent=63 // pred_fallthru
          _
        // Predicated region
        $region97: #{tpu_custom_call.1} parent=63 // pred_check
          %p1953 = pneg %p416
        $region98: #{tpu_custom_call.1} parent=63 // pred_check_branch
          %1955 = sbr.rel (%p1953) target = $region100
        $region99: #{tpu_custom_call.1} parent=63 // pred_region
          %s1957 = ssub.s32 128, 128
          %1958 = vsyncadd [#allocation21], %s1957
          %s1960 = sshll.u32 [#allocation22], 4
          %s1961 = int_to_ptr.vmem [resolvable:$true] %s1960
          %1963 = dma.vmem_to_hbm [thread:$0]  %s1961, 128, %s16, [#allocation21]
        $region100: #{tpu_custom_call.1} parent=63 // pred_fallthru
          _
        // Predicated region
        $region101: #{tpu_custom_call.1} parent=63 // pred_check
          %p1964 = pneg %p437
        $region102: #{tpu_custom_call.1} parent=63 // pred_check_branch
          %1966 = sbr.rel (%p1964) target = $region104
        $region103: #{tpu_custom_call.1} parent=63 // pred_region
          _
        $region104: #{tpu_custom_call.1} parent=63 // pred_fallthru
          _
        // Predicated region
        $region105: #{tpu_custom_call.1} parent=63 // pred_check
          %p1967 = pneg %p332
        $region106: #{tpu_custom_call.1} parent=63 // pred_check_branch
          %1969 = sbr.rel (%p1967) target = $region108
        $region107: #{tpu_custom_call.1} parent=63 // pred_region
          _
        $region108: #{tpu_custom_call.1} parent=63 // pred_fallthru
          _
        // Predicated region
        $region109: #{tpu_custom_call.1} parent=63 // pred_check
          %p1970 = pneg %p353
        $region110: #{tpu_custom_call.1} parent=63 // pred_check_branch
          %1972 = sbr.rel (%p1970) target = $region112
        $region111: #{tpu_custom_call.1} parent=63 // pred_region
          _
        $region112: #{tpu_custom_call.1} parent=63 // pred_fallthru
          _
        // Predicated region
        $region113: #{tpu_custom_call.1} parent=63 // pred_check
          %p1973 = pneg %p374
        $region114: #{tpu_custom_call.1} parent=63 // pred_check_branch
          %1975 = sbr.rel (%p1973) target = $region116
        $region115: #{tpu_custom_call.1} parent=63 // pred_region
          %1976 = dma.done [#allocation21], 512
        $region116: #{tpu_custom_call.1} parent=63 // pred_fallthru
          _
        // Predicated region
        $region117: #{tpu_custom_call.1} parent=63 // pred_check
          %p1977 = pneg %p395
        $region118: #{tpu_custom_call.1} parent=63 // pred_check_branch
          %1979 = sbr.rel (%p1977) target = $region120
        $region119: #{tpu_custom_call.1} parent=63 // pred_region
          _
        $region120: #{tpu_custom_call.1} parent=63 // pred_fallthru
          _
        // Predicated region
        $region121: #{tpu_custom_call.1} parent=63 // pred_check
          %p1980 = pneg %p416
        $region122: #{tpu_custom_call.1} parent=63 // pred_check_branch
          %1982 = sbr.rel (%p1980) target = $region124
        $region123: #{tpu_custom_call.1} parent=63 // pred_region
          %1983 = dma.done [#allocation21], 128
        $region124: #{tpu_custom_call.1} parent=63 // pred_fallthru
          _
        // Predicated region
        $region125: #{tpu_custom_call.1} parent=63 // pred_check
          %p1984 = pneg %p437
        $region126: #{tpu_custom_call.1} parent=63 // pred_check_branch
          %1986 = sbr.rel (%p1984) target = $region128
        $region127: #{tpu_custom_call.1} parent=63 // pred_region
          _
        $region128: #{tpu_custom_call.1} parent=63 // pred_fallthru
          _
      $region64: #{tpu_custom_call.1} parent=5 // pred_fallthru
        _
      %p1987 = scmp.le.s32.totalorder 2, %s28
      // Predicated region
      $region129: #{tpu_custom_call.1} parent=5 // pred_check
        %p1988 = pneg %p1987
      $region130: #{tpu_custom_call.1} parent=5 // pred_check_branch
        %1990 = sbr.rel (%p1988) target = $region132
      $region131: #{tpu_custom_call.1} parent=5 // pred_region
        %s1991 = ssub.s32 %s28, 2
        // Predicated region
        $region133: #{tpu_custom_call.1} parent=131 // pred_check
          %p1992 = pneg %p317
        $region134: #{tpu_custom_call.1} parent=131 // pred_check_branch
          %1994 = sbr.rel (%p1992) target = $region136
        $region135: #{tpu_custom_call.1} parent=131 // pred_region
          %s1995 = sand.u32 %s302, 1
          %s1996 = scalar_lea.sflag [#allocation19], %s1995
          %s1997 = sand.u32 %s302, 1
          %s1998 = smul.addr %s1997, 8
          %s1999 = scalar_lea.vmem [#allocation18], %s1998
          %2000 = dma.done %s1996, 128
        $region136: #{tpu_custom_call.1} parent=131 // pred_fallthru
          _
      $region132: #{tpu_custom_call.1} parent=5 // pred_fallthru
        _
    $region6: #{tpu_custom_call.1} parent=1 // loop_footer
      %s32 = sadd.s32 1, %s28
    $region7: #{tpu_custom_call.1} parent=1 // loop_footer_branch
      %27 = sbr.rel target = $region3
    $region8: #{tpu_custom_call.1} parent=1 // loop_exit
      _
    %2001 = vsyncpa [#allocation19], 1
    %s2002 = scalar_lea.sflag [#allocation19], 1
    %2003 = vsyncpa %s2002, 1
    %2004 = vsyncpa [#allocation21], 1

</llo_original>
